<compile_context>
chip_gen: v6e
topology: v6e:2x2x1
jax: 0.10.0
libtpu: 0.0.40
codegen_flags: <defaults>
</compile_context>

<pallas_src>
import numpy as np
import jax
import jax.numpy as jnp
from jax.experimental import pallas as pl
from jax.experimental.pallas import tpu as pltpu

# ----------------------------- configuration (small demo sizes) -----------------------
LAYERS     = 8
W_HIDDEN   = 64            # module default W=256; shrunk for the small demo
N_XYZ_FREQ = 10
N_DIR_FREQ = 4
A_DIM      = 48
T_DIM      = 16
LIGHT_DIM  = 7
RES_LAYER  = (4,)
IN_XYZ     = 3 * (2 * N_XYZ_FREQ + 1)   # 63
IN_DIR     = 3 * (2 * N_DIR_FREQ + 1)   # 27
BETA_MIN   = 0.03
PERTURB    = 1.0
N_VIEWS    = 32
N_C        = 32            # coarse samples (module default 64)
N_F        = 32            # fine samples   (module default 128)

TILE_M     = 2048          # max row tile for the MLP kernel (v6e: 2048-4096, v5e: 1024)
TILE_R     = 512           # max ray tile for the render kernels
MXU_DTYPE  = jnp.bfloat16  # MXU operand dtype (weights + features); accumulation f32
VMEM_LIMIT = 48 * 1024 * 1024   # > v5e/v6e scoped defaults, < v7x 64 MiB physical


def _round_up(x, m):
    return ((x + m - 1) // m) * m


def _cdiv(a, b):
    return -(-a // b)


def _pick_mlp_tiles(m_rows, tile_max=TILE_M):
    """Row tile that divides m_rows with minimal padding; >=2 even grid steps when
    possible so the 'parallel' axis can shard across two TensorCores (v7x)."""
    n_tiles = _cdiv(m_rows, tile_max)
    if n_tiles == 1 and m_rows >= 256:
        n_tiles = 2
    if n_tiles > 1 and n_tiles % 2 == 1:
        n_tiles += 1
    if n_tiles == 1:
        tile = _round_up(m_rows, 16)          # bf16 sublane pack
    else:
        tile = _round_up(_cdiv(m_rows, n_tiles), 128)   # lane-dense output blocks
    return tile, tile * n_tiles


def _pick_render_tiles(n_rows, tile_max=TILE_R):
    n_tiles = _cdiv(n_rows, tile_max)
    if n_tiles == 1:
        tile = _round_up(n_rows, 8)
    else:
        tile = _round_up(_cdiv(n_rows, n_tiles), 128)
    return tile, tile * n_tiles


# ----------------------------- in-kernel helpers --------------------------------------
def _relu(x):
    return jnp.maximum(x, 0.0)


def _softplus(x):
    return jnp.maximum(x, 0.0) + jnp.log(1.0 + jnp.exp(-jnp.abs(x)))


def _sigmoid(x):
    return 0.5 * (jnp.tanh(0.5 * x) + 1.0)


# ----------------------------- NeRF-W parameter init ----------------------------------
def init_nerfw_params(key, encode_a, encode_t):
    """PyTorch-Linear-style uniform(-1/sqrt(fan_in), 1/sqrt(fan_in)) init.

    Weights are stored the way the kernel consumes them:
      * skip layer:      separate (W, W) and (IN_XYZ, W) matrices (fan_in = W+IN_XYZ)
      * heads:           aligned (W, W) feat head + separate (W, 1) sigma head
      * color branch:    feat part (W, W/2) + fused [dir (+a) + light] part
      * transient heads: fused [sigma | rgb | beta] -> (W/2, 5)
    Biases stay f32; weight matrices are cast to MXU_DTYPE in the wrapper.
    """
    params = []
    keys = iter(jax.random.split(key, 64))

    def unif(shape, fan_in):
        bound = 1.0 / np.sqrt(fan_in)
        return jax.random.uniform(next(keys), shape, jnp.float32, -bound, bound)

    W = W_HIDDEN
    # xyz trunk
    params += [unif((IN_XYZ, W), IN_XYZ), unif((1, W), IN_XYZ)]
    for l in range(1, LAYERS):
        if l in RES_LAYER:
            fan = W + IN_XYZ
            params += [unif((W, W), fan), unif((IN_XYZ, W), fan), unif((1, W), fan)]
        else:
            params += [unif((W, W), W), unif((1, W), W)]
    # xyz_encoding_final (feat) head + separate static-sigma head (lane aligned)
    params += [unif((W, W), W), unif((1, W), W)]
    params += [unif((W, 1), W), unif((1, 1), W)]
    # color branch: input = feat(W) ++ [dir (+a) + light]
    extra_dim = IN_DIR + (A_DIM if encode_a else 0) + LIGHT_DIM
    fan = W + extra_dim
    params += [unif((W, W // 2), fan), unif((extra_dim, W // 2), fan),
               unif((1, W // 2), fan)]
    # static rgb head
    params += [unif((W // 2, 3), W // 2), unif((1, 3), W // 2)]
    if encode_t:
        fan = W + T_DIM
        params += [unif((W, W // 2), fan), unif((T_DIM, W // 2), fan),
                   unif((1, W // 2), fan)]
        for _ in range(3):
            params += [unif((W // 2, W // 2), W // 2), unif((1, W // 2), W // 2)]
        # fused transient heads [sigma(1) | rgb(3) | beta(1)]
        params += [unif((W // 2, 5), W // 2), unif((1, 5), W // 2)]
    return params


# ----------------------------- fused NeRF-W MLP kernel ---------------------------------
def make_nerfw_kernel(flag, n_feats, n_params, out_rows):
    def kernel(*refs):
        feats  = refs[:n_feats]
        params = refs[n_feats:n_feats + n_params]
        out_ref = refs[n_feats + n_params]
        it = iter(params)
        nx = lambda: next(it)[...]

        def dmm(a, w):
            # bf16 (or f32) MXU operands, f32 accumulation
            return jnp.dot(a.astype(w.dtype), w, preferred_element_type=jnp.float32)

        xyz   = feats[0][...]                  # (tm, 63)  MXU dtype
        extra = feats[1][...]                  # (tm, 34/82) fused dir(+a)+light
        t_emb = feats[2][...] if flag == 2 else None

        # xyz trunk; skip layer is un-fused (no ragged concat)
        h = _relu(dmm(xyz, nx()) + nx())
        for l in range(1, LAYERS):
            if l in RES_LAYER:
                w_h, w_x, b = nx(), nx(), nx()
                h = _relu(dmm(h, w_h) + dmm(xyz, w_x) + b)
            else:
                w, b = nx(), nx()
                h = _relu(dmm(h, w) + b)

        # aligned heads: xyz_encoding_final + separate 1-column static sigma
        w_feat, b_feat = nx(), nx()
        w_sig, b_sig = nx(), nx()
        feat = dmm(h, w_feat) + b_feat                       # (tm, W)
        static_sigma = _softplus(dmm(h, w_sig) + b_sig)      # (tm, 1)

        # color branch: one fused extra matmul + feat matmul
        w_cf, w_ce, b_c = nx(), nx(), nx()
        rgb_h = _relu(dmm(feat, w_cf) + dmm(extra, w_ce) + b_c)
        w_ro, b_ro = nx(), nx()
        static_rgb = _sigmoid(dmm(rgb_h, w_ro) + b_ro)       # (tm, 3)

        if flag == 1:
            slab = jnp.concatenate([static_sigma, static_rgb], axis=1)   # (tm, 4)
        else:
            # transient branch
            w_tf, w_tt, b_t = nx(), nx(), nx()
            tr = _relu(dmm(feat, w_tf) + dmm(t_emb, w_tt) + b_t)
            for _ in range(3):
                w, b = nx(), nx()
                tr = _relu(dmm(tr, w) + b)
            # fused transient heads [sigma | rgb(3) | beta]
            w_th, b_th = nx(), nx()
            th = dmm(tr, w_th) + b_th                        # (tm, 5)
            col = jax.lax.broadcasted_iota(jnp.int32, th.shape, 1)
            use_softplus = (col == 0) | (col == 4)
            th_act = jnp.where(use_softplus, _softplus(th), _sigmoid(th))
            # channels: [sigma, rgb(3), t_sigma, t_rgb(3), t_beta] = 9
            slab = jnp.concatenate([static_sigma, static_rgb, th_act], axis=1)

        pad_cols = out_rows - slab.shape[1]
        if pad_cols:
            slab = jnp.concatenate(
                [slab, jnp.zeros((slab.shape[0], pad_cols), slab.dtype)], axis=1)
        # channel-major, lane-dense store: (out_rows, tile_m)
        out_ref[...] = slab.T
    return kernel


def run_nerfw_pallas(params, feats, flag):
    m_rows = feats[0].shape[0]
    tile_m, m_pad = _pick_mlp_tiles(m_rows)

    feats_p = [jnp.pad(f.astype(MXU_DTYPE), ((0, m_pad - m_rows), (0, 0)))
               for f in feats]
    # weight matrices in MXU dtype, biases (row-count 1) stay f32
    params_c = [p if p.shape[0] == 1 else p.astype(MXU_DTYPE) for p in params]

    n_feats, n_params = len(feats_p), len(params_c)
    out_rows = 8 if flag == 1 else 16          # 4 / 9 real channels, zero-padded
    kernel = make_nerfw_kernel(flag, n_feats, n_params, out_rows)

    in_specs = ([pl.BlockSpec((tile_m, f.shape[1]), lambda i: (i, 0)) for f in feats_p]
                + [pl.BlockSpec(p.shape, lambda i: (0, 0)) for p in params_c])

    out = pl.pallas_call(
        kernel,
        out_shape=jax.ShapeDtypeStruct((out_rows, m_pad), jnp.float32),
        grid=(m_pad // tile_m,),
        in_specs=in_specs,
        out_specs=pl.BlockSpec((out_rows, tile_m), lambda i: (0, i)),
        compiler_params=pltpu.CompilerParams(
            dimension_semantics=("parallel",),
            vmem_limit_bytes=VMEM_LIMIT),
    )(*feats_p, *params_c)
    return out[:, :m_rows]                     # channel-major (out_rows, M)


# ----------------------------- volume-render kernels -----------------------------------
def _strict_upper(S):
    # T_j = exp(-sum_{k<j} sigma_k*delta_k)  -> exclusive cumsum as one MXU matmul.
    return jnp.asarray(np.triu(np.ones((S, S), np.float32), k=1))


def coarse_render_kernel(tri_ref, delta_ref, sigma_ref, rgb_ref, w_ref, slab_ref):
    delta = delta_ref[...]
    sigma = sigma_ref[...]
    sd = sigma * delta
    alpha = 1.0 - jnp.exp(-sd)
    T = jnp.exp(-jnp.dot(sd, tri_ref[...], preferred_element_type=jnp.float32))
    w = T * alpha                                              # (tr, S_pad)
    w_ref[...] = w
    # rgb is channel-major (3, tr, S_pad): lane-axis reduction
    ray_rgb = jnp.sum(w[None, :, :] * rgb_ref[...], axis=-1)   # (3, tr)
    slab_ref[...] = jnp.concatenate(
        [ray_rgb, jnp.zeros((5, ray_rgb.shape[1]), jnp.float32)], axis=0)  # (8, tr)


def render_coarse_pallas(z, sigma, rgb_cm):
    """Coarse pass.  rgb_cm is channel-major (3, n, S).
    Returns (weights (n,S), ray_rgb (n,3))."""
    n, S = z.shape
    delta = jnp.concatenate(
        [z[:, 1:] - z[:, :-1], 233.0 * jnp.ones((n, 1), z.dtype)], axis=1)

    S_pad = _round_up(S, 128)
    tile_r, n_pad = _pick_render_tiles(n)
    dp = jnp.pad(delta, ((0, n_pad - n), (0, S_pad - S)))
    sp = jnp.pad(sigma, ((0, n_pad - n), (0, S_pad - S)))
    cp = jnp.pad(rgb_cm, ((0, 0), (0, n_pad - n), (0, S_pad - S)))
    tri = _strict_upper(S_pad)

    w, slab = pl.pallas_call(
        coarse_render_kernel,
        out_shape=(jax.ShapeDtypeStruct((n_pad, S_pad), jnp.float32),
                   jax.ShapeDtypeStruct((8, n_pad), jnp.float32)),
        grid=(n_pad // tile_r,),
        in_specs=[pl.BlockSpec((S_pad, S_pad), lambda i: (0, 0)),
                  pl.BlockSpec((tile_r, S_pad), lambda i: (i, 0)),
                  pl.BlockSpec((tile_r, S_pad), lambda i: (i, 0)),
                  pl.BlockSpec((3, tile_r, S_pad), lambda i: (0, i, 0))],
        out_specs=(pl.BlockSpec((tile_r, S_pad), lambda i: (i, 0)),
                   pl.BlockSpec((8, tile_r), lambda i: (0, i))),
        compiler_params=pltpu.CompilerParams(
            dimension_semantics=("parallel",),
            vmem_limit_bytes=VMEM_LIMIT),
    )(tri, dp, sp, cp)
    return w[:n, :S], slab[0:3, :n].T


def fine_render_kernel(tri_ref, delta_ref, ssig_ref, tsig_ref, c8_ref, slab_ref):
    delta = delta_ref[...]
    ssig = ssig_ref[...]
    tsig = tsig_ref[...]
    alpha_s = 1.0 - jnp.exp(-ssig * delta)
    alpha_t = 1.0 - jnp.exp(-tsig * delta)
    sd_all = (ssig + tsig) * delta
    T = jnp.exp(-jnp.dot(sd_all, tri_ref[...], preferred_element_type=jnp.float32))
    w_s = T * alpha_s                                          # static weights
    w_t = T * alpha_t                                          # transient weights
    c8 = c8_ref[...]                                           # (8, tr, S_pad)
    # channels 0-3 weighted by w_s ([rgb(3), z]), channels 4-7 by w_t ([rgb(3), beta])
    static_part = jnp.sum(w_s[None, :, :] * c8[0:4], axis=-1)  # (4, tr)
    trans_part  = jnp.sum(w_t[None, :, :] * c8[4:8], axis=-1)  # (4, tr)
    slab_ref[...] = jnp.concatenate([static_part, trans_part], axis=0)   # (8, tr)


def render_fine_pallas(z, static_sigma, transient_sigma, c8):
    """Fused fine pass.  c8 is channel-major (8, n, S):
    [static_rgb(3), z(1), transient_rgb(3), beta(1)].
    Returns slab (8, n): [static_rgb(3), depth(1), transient_rgb(3), beta(1)]."""
    n, S = z.shape
    delta = jnp.concatenate(
        [z[:, 1:] - z[:, :-1], 233.0 * jnp.ones((n, 1), z.dtype)], axis=1)

    S_pad = _round_up(S, 128)
    tile_r, n_pad = _pick_render_tiles(n)
    dp = jnp.pad(delta, ((0, n_pad - n), (0, S_pad - S)))
    ssp = jnp.pad(static_sigma, ((0, n_pad - n), (0, S_pad - S)))
    tsp = jnp.pad(transient_sigma, ((0, n_pad - n), (0, S_pad - S)))
    cp = jnp.pad(c8, ((0, 0), (0, n_pad - n), (0, S_pad - S)))
    tri = _strict_upper(S_pad)

    slab = pl.pallas_call(
        fine_render_kernel,
        out_shape=jax.ShapeDtypeStruct((8, n_pad), jnp.float32),
        grid=(n_pad // tile_r,),
        in_specs=[pl.BlockSpec((S_pad, S_pad), lambda i: (0, 0)),
                  pl.BlockSpec((tile_r, S_pad), lambda i: (i, 0)),
                  pl.BlockSpec((tile_r, S_pad), lambda i: (i, 0)),
                  pl.BlockSpec((tile_r, S_pad), lambda i: (i, 0)),
                  pl.BlockSpec((8, tile_r, S_pad), lambda i: (0, i, 0))],
        out_specs=pl.BlockSpec((8, tile_r), lambda i: (0, i)),
        compiler_params=pltpu.CompilerParams(
            dimension_semantics=("parallel",),
            vmem_limit_bytes=VMEM_LIMIT),
    )(tri, dp, ssp, tsp, cp)
    return slab[:, :n]


# ----------------------------- plain-JAX glue -------------------------------------------
def position_embed(x, n_freqs):
    # x: (M, 3) -> (M, 3*(2*n_freqs+1)); ordering [x, sin(2^k x), cos(2^k x)]_k
    outs = [x]
    for k in range(n_freqs):
        f = float(2 ** k)
        outs.append(jnp.sin(f * x))
        outs.append(jnp.cos(f * x))
    return jnp.concatenate(outs, axis=1)


class NeRFWSystemPallas:
    def __init__(self, key):
        kc, kf, ka, kt = jax.random.split(key, 4)
        self.coarse_params = init_nerfw_params(kc, encode_a=False, encode_t=False)
        self.fine_params   = init_nerfw_params(kf, encode_a=True,  encode_t=True)
        self.appearance_table = jax.random.normal(ka, (N_VIEWS, A_DIM), jnp.float32)
        self.transient_table  = jax.random.normal(kt, (N_VIEWS, T_DIM), jnp.float32)

    def sample_uniform(self, key, near, far, n_samples):
        n = near.shape[0]
        u = jnp.tile(jnp.linspace(0.0, 1.0, n_samples, dtype=jnp.float32)[None, :], (n, 1))
        z = near * (1.0 - u) + far * u                      # use_disp=False
        z_mid = (z[:, :-1] + z[:, 1:]) / 2.0
        z_upper = jnp.concatenate([z_mid, z[:, -1:]], axis=1)
        z_lower = jnp.concatenate([z[:, :1], z_mid], axis=1)
        r = jax.random.uniform(key, z.shape, jnp.float32)
        return PERTURB * r * (z_upper - z_lower) + z_lower

    def sample_pdf(self, key, weights, z, n_samples, eps=1e-5):
        n, m = weights.shape
        mid_w = (weights[:, :-1] + weights[:, 1:]) / 2.0 + eps
        u = jax.random.uniform(key, (n, n_samples), jnp.float32)
        pdf = mid_w / jnp.sum(mid_w, axis=1, keepdims=True)
        cdf = jnp.cumsum(pdf, axis=1)
        cdf = jnp.concatenate([jnp.zeros((n, 1), jnp.float32), cdf], axis=1)  # (n, m)
        # torch.searchsorted(..., right=True) == count of cdf entries <= u
        idx = jnp.sum((cdf[:, None, :] <= u[:, :, None]).astype(jnp.int32), axis=-1)
        idx_lower = jnp.maximum(idx - 1, 0)
        idx_upper = jnp.minimum(idx, m - 1)
        cdf_lower = jnp.take_along_axis(cdf, idx_lower, axis=1)
        cdf_upper = jnp.take_along_axis(cdf, idx_upper, axis=1)
        z_lower = jnp.take_along_axis(z, idx_lower, axis=1)
        z_upper = jnp.take_along_axis(z, idx_upper, axis=1)
        delta_cdf = cdf_upper - cdf_lower
        delta_cdf = jnp.where(delta_cdf < eps, 1.0, delta_cdf)
        alpha = (u - cdf_lower) / delta_cdf
        return z_lower + (z_upper - z_lower) * alpha

    def forward(self, rays, key, test_time=False):
        n = rays.shape[0]
        if rays.shape[1] != 16:
            raise ValueError(f"Expected rays (batch,16), got {rays.shape}")
        rays_o   = rays[:, 0:3]
        rays_d   = rays[:, 3:6]
        near     = rays[:, 6:7]
        far      = rays[:, 7:8]
        ids      = rays[:, 8].astype(jnp.int32)
        lighting = rays[:, 9:16]

        k_uni, k_pdf = jax.random.split(key)

        # -------- coarse pass --------
        z = self.sample_uniform(k_uni, near, far, N_C)                          # (n, N_C)
        xyz = rays_o[:, None, :] + rays_d[:, None, :] * z[:, :, None]           # (n, N_C, 3)
        xyz_emb = position_embed(xyz.reshape(-1, 3), N_XYZ_FREQ)
        dir_emb = position_embed(
            jnp.broadcast_to(rays_d[:, None, :], (n, N_C, 3)).reshape(-1, 3), N_DIR_FREQ)
        light_rep = jnp.broadcast_to(
            lighting[:, None, :], (n, N_C, LIGHT_DIM)).reshape(-1, LIGHT_DIM)
        extra = jnp.concatenate([dir_emb, light_rep], axis=1)                   # (M, 34)

        c_out = run_nerfw_pallas(self.coarse_params, [xyz_emb, extra], flag=1)  # (8, M)
        static_sigma  = c_out[0].reshape(n, N_C)
        static_rgb_cm = c_out[1:4].reshape(3, n, N_C)

        weights, coarse_ray_rgb = render_coarse_pallas(z, static_sigma, static_rgb_cm)

        # -------- fine pass --------
        n_all = N_C + N_F
        fine_z = self.sample_pdf(k_pdf, jax.lax.stop_gradient(weights), z, N_F)
        all_z = jnp.sort(jnp.concatenate([z, fine_z], axis=1), axis=1)

        xyz = rays_o[:, None, :] + rays_d[:, None, :] * all_z[:, :, None]
        xyz_emb = position_embed(xyz.reshape(-1, 3), N_XYZ_FREQ)
        dir_emb = position_embed(
            jnp.broadcast_to(rays_d[:, None, :], (n, n_all, 3)).reshape(-1, 3), N_DIR_FREQ)
        light_rep = jnp.broadcast_to(
            lighting[:, None, :], (n, n_all, LIGHT_DIM)).reshape(-1, LIGHT_DIM)
        a_emb = jnp.broadcast_to(
            self.appearance_table[ids][:, None, :], (n, n_all, A_DIM)).reshape(-1, A_DIM)
        t_emb = jnp.broadcast_to(
            self.transient_table[ids][:, None, :], (n, n_all, T_DIM)).reshape(-1, T_DIM)
        extra = jnp.concatenate([dir_emb, a_emb, light_rep], axis=1)            # (M, 82)

        f_out = run_nerfw_pallas(self.fine_params, [xyz_emb, extra, t_emb], flag=2)  # (16, M)
        fs_sigma = f_out[0].reshape(n, n_all)
        ft_sigma = f_out[4].reshape(n, n_all)
        # channel-major per-sample slab for the fused render:
        # [static_rgb(3), z(1), transient_rgb(3), beta(1)]
        c8 = jnp.concatenate([f_out[1:4].reshape(3, n, n_all),
                              all_z[None, :, :],
                              f_out[5:8].reshape(3, n, n_all),
                              f_out[8:9].reshape(1, n, n_all)], axis=0)         # (8, n, n_all)

        slab = render_fine_pallas(all_z, fs_sigma, ft_sigma, c8)                # (8, n)
        fine_static_ray_rgb    = slab[0:3].T
        depth                  = slab[3:4].T
        fine_transient_ray_rgb = slab[4:7].T
        transient_ray_beta     = slab[7:8].T + BETA_MIN
        fine_ray_rgb = fine_static_ray_rgb + fine_transient_ray_rgb   # white_back=False

        res_c = {'ray_rgb': coarse_ray_rgb}
        res_f = {
            'static_ray_rgb': fine_static_ray_rgb,
            'transient_ray_rgb': fine_transient_ray_rgb,
            'beta': transient_ray_beta,
            'ray_rgb': fine_ray_rgb,
            'z': depth,
        }
        return res_c, res_f, None   # cal_loss=False path


# ----------------------------- demo ------------------------------------------------------
if __name__ == "__main__":
    key = jax.random.PRNGKey(0)
    k_sys, k_rays, k_fwd = jax.random.split(key, 3)

    system = NeRFWSystemPallas(k_sys)

    n_rays = 16
    ko, kd, ki, kl = jax.random.split(k_rays, 4)
    rays_o = jax.random.normal(ko, (n_rays, 3), jnp.float32)
    rays_d = jax.random.normal(kd, (n_rays, 3), jnp.float32)
    rays_d = rays_d / jnp.linalg.norm(rays_d, axis=1, keepdims=True)
    near = jnp.full((n_rays, 1), 2.0, jnp.float32)
    far  = jnp.full((n_rays, 1), 6.0, jnp.float32)
    ids  = jax.random.randint(ki, (n_rays, 1), 0, N_VIEWS).astype(jnp.float32)
    lighting = jax.random.normal(kl, (n_rays, LIGHT_DIM), jnp.float32)
    rays = jnp.concatenate([rays_o, rays_d, near, far, ids, lighting], axis=1)
    assert rays.shape == (n_rays, 16)

    res_c, res_f, _ = system.forward(rays, k_fwd)
    jax.block_until_ready(res_f['ray_rgb'])

    assert res_c['ray_rgb'].shape == (n_rays, 3)
    assert res_f['static_ray_rgb'].shape == (n_rays, 3)
    assert res_f['transient_ray_rgb'].shape == (n_rays, 3)
    assert res_f['ray_rgb'].shape == (n_rays, 3)
    assert res_f['beta'].shape == (n_rays, 1)
    assert res_f['z'].shape == (n_rays, 1)
    assert bool(jnp.all(jnp.isfinite(res_c['ray_rgb'])))
    assert bool(jnp.all(jnp.isfinite(res_f['ray_rgb'])))
    assert bool(jnp.all(jnp.isfinite(res_f['beta'])))
    assert bool(jnp.all(jnp.isfinite(res_f['z'])))
    print("KERNEL_OK")
</pallas_src>

<mosaic_0001>
module attributes {stable_mosaic.version = 11 : i64} {
  func.func @kernel(%arg0: i32, %arg1: memref<256x63xbf16, #tpu.memory_space<vmem>>, %arg2: memref<256x34xbf16, #tpu.memory_space<vmem>>, %arg3: memref<63x64xbf16, #tpu.memory_space<vmem>>, %arg4: memref<1x64xf32, #tpu.memory_space<vmem>>, %arg5: memref<64x64xbf16, #tpu.memory_space<vmem>>, %arg6: memref<1x64xf32, #tpu.memory_space<vmem>>, %arg7: memref<64x64xbf16, #tpu.memory_space<vmem>>, %arg8: memref<1x64xf32, #tpu.memory_space<vmem>>, %arg9: memref<64x64xbf16, #tpu.memory_space<vmem>>, %arg10: memref<1x64xf32, #tpu.memory_space<vmem>>, %arg11: memref<64x64xbf16, #tpu.memory_space<vmem>>, %arg12: memref<63x64xbf16, #tpu.memory_space<vmem>>, %arg13: memref<1x64xf32, #tpu.memory_space<vmem>>, %arg14: memref<64x64xbf16, #tpu.memory_space<vmem>>, %arg15: memref<1x64xf32, #tpu.memory_space<vmem>>, %arg16: memref<64x64xbf16, #tpu.memory_space<vmem>>, %arg17: memref<1x64xf32, #tpu.memory_space<vmem>>, %arg18: memref<64x64xbf16, #tpu.memory_space<vmem>>, %arg19: memref<1x64xf32, #tpu.memory_space<vmem>>, %arg20: memref<64x64xbf16, #tpu.memory_space<vmem>>, %arg21: memref<1x64xf32, #tpu.memory_space<vmem>>, %arg22: memref<64x1xbf16, #tpu.memory_space<vmem>>, %arg23: memref<1x1xf32, #tpu.memory_space<vmem>>, %arg24: memref<64x32xbf16, #tpu.memory_space<vmem>>, %arg25: memref<34x32xbf16, #tpu.memory_space<vmem>>, %arg26: memref<1x32xf32, #tpu.memory_space<vmem>>, %arg27: memref<32x3xbf16, #tpu.memory_space<vmem>>, %arg28: memref<1x3xf32, #tpu.memory_space<vmem>>, %arg29: memref<8x256xf32, #tpu.memory_space<vmem>>) attributes {dimension_semantics = [#tpu.dimension_semantics<parallel>], iteration_bounds = array<i64: 2>, scalar_prefetch = 0 : i64, scratch_operands = 0 : i64, tpu.core_type = #tpu.core_type<tc>, window_params = [{transform_indices = @transform_0, window_bounds = array<i64: 256, 63>}, {transform_indices = @transform_1, window_bounds = array<i64: 256, 34>}, {pipeline_mode = #tpu.pipeline_mode<synchronous>, transform_indices = @transform_2, window_bounds = array<i64: 63, 64>}, {pipeline_mode = #tpu.pipeline_mode<synchronous>, transform_indices = @transform_3, window_bounds = array<i64: 1, 64>}, {pipeline_mode = #tpu.pipeline_mode<synchronous>, transform_indices = @transform_4, window_bounds = array<i64: 64, 64>}, {pipeline_mode = #tpu.pipeline_mode<synchronous>, transform_indices = @transform_5, window_bounds = array<i64: 1, 64>}, {pipeline_mode = #tpu.pipeline_mode<synchronous>, transform_indices = @transform_6, window_bounds = array<i64: 64, 64>}, {pipeline_mode = #tpu.pipeline_mode<synchronous>, transform_indices = @transform_7, window_bounds = array<i64: 1, 64>}, {pipeline_mode = #tpu.pipeline_mode<synchronous>, transform_indices = @transform_8, window_bounds = array<i64: 64, 64>}, {pipeline_mode = #tpu.pipeline_mode<synchronous>, transform_indices = @transform_9, window_bounds = array<i64: 1, 64>}, {pipeline_mode = #tpu.pipeline_mode<synchronous>, transform_indices = @transform_10, window_bounds = array<i64: 64, 64>}, {pipeline_mode = #tpu.pipeline_mode<synchronous>, transform_indices = @transform_11, window_bounds = array<i64: 63, 64>}, {pipeline_mode = #tpu.pipeline_mode<synchronous>, transform_indices = @transform_12, window_bounds = array<i64: 1, 64>}, {pipeline_mode = #tpu.pipeline_mode<synchronous>, transform_indices = @transform_13, window_bounds = array<i64: 64, 64>}, {pipeline_mode = #tpu.pipeline_mode<synchronous>, transform_indices = @transform_14, window_bounds = array<i64: 1, 64>}, {pipeline_mode = #tpu.pipeline_mode<synchronous>, transform_indices = @transform_15, window_bounds = array<i64: 64, 64>}, {pipeline_mode = #tpu.pipeline_mode<synchronous>, transform_indices = @transform_16, window_bounds = array<i64: 1, 64>}, {pipeline_mode = #tpu.pipeline_mode<synchronous>, transform_indices = @transform_17, window_bounds = array<i64: 64, 64>}, {pipeline_mode = #tpu.pipeline_mode<synchronous>, transform_indices = @transform_18, window_bounds = array<i64: 1, 64>}, {pipeline_mode = #tpu.pipeline_mode<synchronous>, transform_indices = @transform_19, window_bounds = array<i64: 64, 64>}, {pipeline_mode = #tpu.pipeline_mode<synchronous>, transform_indices = @transform_20, window_bounds = array<i64: 1, 64>}, {pipeline_mode = #tpu.pipeline_mode<synchronous>, transform_indices = @transform_21, window_bounds = array<i64: 64, 1>}, {pipeline_mode = #tpu.pipeline_mode<synchronous>, transform_indices = @transform_22, window_bounds = array<i64: 1, 1>}, {pipeline_mode = #tpu.pipeline_mode<synchronous>, transform_indices = @transform_23, window_bounds = array<i64: 64, 32>}, {pipeline_mode = #tpu.pipeline_mode<synchronous>, transform_indices = @transform_24, window_bounds = array<i64: 34, 32>}, {pipeline_mode = #tpu.pipeline_mode<synchronous>, transform_indices = @transform_25, window_bounds = array<i64: 1, 32>}, {pipeline_mode = #tpu.pipeline_mode<synchronous>, transform_indices = @transform_26, window_bounds = array<i64: 32, 3>}, {pipeline_mode = #tpu.pipeline_mode<synchronous>, transform_indices = @transform_27, window_bounds = array<i64: 1, 3>}, {transform_indices = @transform_28, window_bounds = array<i64: 8, 256>}]} {
    %c0 = arith.constant 0 : index
    %c0_0 = arith.constant 0 : index
    %0 = vector.load %arg1[%c0, %c0_0] : memref<256x63xbf16, #tpu.memory_space<vmem>>, vector<256x63xbf16>
    %c0_1 = arith.constant 0 : index
    %c0_2 = arith.constant 0 : index
    %1 = vector.load %arg2[%c0_1, %c0_2] : memref<256x34xbf16, #tpu.memory_space<vmem>>, vector<256x34xbf16>
    %c0_3 = arith.constant 0 : index
    %c0_4 = arith.constant 0 : index
    %2 = vector.load %arg3[%c0_3, %c0_4] : memref<63x64xbf16, #tpu.memory_space<vmem>>, vector<63x64xbf16>
    %cst = arith.constant dense<0.000000e+00> : vector<256x64xf32>
    %3 = tpu.matmul %0, %2, %cst {dimension_numbers = #tpu.dot_dimension_numbers<[1], [0], [0], [1], [0, 0, 1, 1], [], []>} : vector<256x63xbf16>, vector<63x64xbf16>, vector<256x64xf32> -> vector<256x64xf32>
    %c0_5 = arith.constant 0 : index
    %c0_6 = arith.constant 0 : index
    %4 = vector.load %arg4[%c0_5, %c0_6] : memref<1x64xf32, #tpu.memory_space<vmem>>, vector<1x64xf32>
    %5 = vector.broadcast %4 : vector<1x64xf32> to vector<256x64xf32>
    %6 = arith.addf %3, %5 : vector<256x64xf32>
    %cst_7 = arith.constant 0.000000e+00 : f32
    %7 = vector.broadcast %cst_7 : f32 to vector<256x64xf32>
    %8 = arith.maximumf %6, %7 : vector<256x64xf32>
    %c0_8 = arith.constant 0 : index
    %c0_9 = arith.constant 0 : index
    %9 = vector.load %arg5[%c0_8, %c0_9] : memref<64x64xbf16, #tpu.memory_space<vmem>>, vector<64x64xbf16>
    %c0_10 = arith.constant 0 : index
    %c0_11 = arith.constant 0 : index
    %10 = vector.load %arg6[%c0_10, %c0_11] : memref<1x64xf32, #tpu.memory_space<vmem>>, vector<1x64xf32>
    %11 = arith.truncf %8 : vector<256x64xf32> to vector<256x64xbf16>
    %cst_12 = arith.constant dense<0.000000e+00> : vector<256x64xf32>
    %12 = tpu.matmul %11, %9, %cst_12 {dimension_numbers = #tpu.dot_dimension_numbers<[1], [0], [0], [1], [0, 0, 1, 1], [], []>} : vector<256x64xbf16>, vector<64x64xbf16>, vector<256x64xf32> -> vector<256x64xf32>
    %13 = vector.broadcast %10 : vector<1x64xf32> to vector<256x64xf32>
    %14 = arith.addf %12, %13 : vector<256x64xf32>
    %cst_13 = arith.constant 0.000000e+00 : f32
    %15 = vector.broadcast %cst_13 : f32 to vector<256x64xf32>
    %16 = arith.maximumf %14, %15 : vector<256x64xf32>
    %c0_14 = arith.constant 0 : index
    %c0_15 = arith.constant 0 : index
    %17 = vector.load %arg7[%c0_14, %c0_15] : memref<64x64xbf16, #tpu.memory_space<vmem>>, vector<64x64xbf16>
    %c0_16 = arith.constant 0 : index
    %c0_17 = arith.constant 0 : index
    %18 = vector.load %arg8[%c0_16, %c0_17] : memref<1x64xf32, #tpu.memory_space<vmem>>, vector<1x64xf32>
    %19 = arith.truncf %16 : vector<256x64xf32> to vector<256x64xbf16>
    %cst_18 = arith.constant dense<0.000000e+00> : vector<256x64xf32>
    %20 = tpu.matmul %19, %17, %cst_18 {dimension_numbers = #tpu.dot_dimension_numbers<[1], [0], [0], [1], [0, 0, 1, 1], [], []>} : vector<256x64xbf16>, vector<64x64xbf16>, vector<256x64xf32> -> vector<256x64xf32>
    %21 = vector.broadcast %18 : vector<1x64xf32> to vector<256x64xf32>
    %22 = arith.addf %20, %21 : vector<256x64xf32>
    %cst_19 = arith.constant 0.000000e+00 : f32
    %23 = vector.broadcast %cst_19 : f32 to vector<256x64xf32>
    %24 = arith.maximumf %22, %23 : vector<256x64xf32>
    %c0_20 = arith.constant 0 : index
    %c0_21 = arith.constant 0 : index
    %25 = vector.load %arg9[%c0_20, %c0_21] : memref<64x64xbf16, #tpu.memory_space<vmem>>, vector<64x64xbf16>
    %c0_22 = arith.constant 0 : index
    %c0_23 = arith.constant 0 : index
    %26 = vector.load %arg10[%c0_22, %c0_23] : memref<1x64xf32, #tpu.memory_space<vmem>>, vector<1x64xf32>
    %27 = arith.truncf %24 : vector<256x64xf32> to vector<256x64xbf16>
    %cst_24 = arith.constant dense<0.000000e+00> : vector<256x64xf32>
    %28 = tpu.matmul %27, %25, %cst_24 {dimension_numbers = #tpu.dot_dimension_numbers<[1], [0], [0], [1], [0, 0, 1, 1], [], []>} : vector<256x64xbf16>, vector<64x64xbf16>, vector<256x64xf32> -> vector<256x64xf32>
    %29 = vector.broadcast %26 : vector<1x64xf32> to vector<256x64xf32>
    %30 = arith.addf %28, %29 : vector<256x64xf32>
    %cst_25 = arith.constant 0.000000e+00 : f32
    %31 = vector.broadcast %cst_25 : f32 to vector<256x64xf32>
    %32 = arith.maximumf %30, %31 : vector<256x64xf32>
    %c0_26 = arith.constant 0 : index
    %c0_27 = arith.constant 0 : index
    %33 = vector.load %arg11[%c0_26, %c0_27] : memref<64x64xbf16, #tpu.memory_space<vmem>>, vector<64x64xbf16>
    %c0_28 = arith.constant 0 : index
    %c0_29 = arith.constant 0 : index
    %34 = vector.load %arg12[%c0_28, %c0_29] : memref<63x64xbf16, #tpu.memory_space<vmem>>, vector<63x64xbf16>
    %c0_30 = arith.constant 0 : index
    %c0_31 = arith.constant 0 : index
    %35 = vector.load %arg13[%c0_30, %c0_31] : memref<1x64xf32, #tpu.memory_space<vmem>>, vector<1x64xf32>
    %36 = arith.truncf %32 : vector<256x64xf32> to vector<256x64xbf16>
    %cst_32 = arith.constant dense<0.000000e+00> : vector<256x64xf32>
    %37 = tpu.matmul %36, %33, %cst_32 {dimension_numbers = #tpu.dot_dimension_numbers<[1], [0], [0], [1], [0, 0, 1, 1], [], []>} : vector<256x64xbf16>, vector<64x64xbf16>, vector<256x64xf32> -> vector<256x64xf32>
    %cst_33 = arith.constant dense<0.000000e+00> : vector<256x64xf32>
    %38 = tpu.matmul %0, %34, %cst_33 {dimension_numbers = #tpu.dot_dimension_numbers<[1], [0], [0], [1], [0, 0, 1, 1], [], []>} : vector<256x63xbf16>, vector<63x64xbf16>, vector<256x64xf32> -> vector<256x64xf32>
    %39 = arith.addf %37, %38 : vector<256x64xf32>
    %40 = vector.broadcast %35 : vector<1x64xf32> to vector<256x64xf32>
    %41 = arith.addf %39, %40 : vector<256x64xf32>
    %cst_34 = arith.constant 0.000000e+00 : f32
    %42 = vector.broadcast %cst_34 : f32 to vector<256x64xf32>
    %43 = arith.maximumf %41, %42 : vector<256x64xf32>
    %c0_35 = arith.constant 0 : index
    %c0_36 = arith.constant 0 : index
    %44 = vector.load %arg14[%c0_35, %c0_36] : memref<64x64xbf16, #tpu.memory_space<vmem>>, vector<64x64xbf16>
    %c0_37 = arith.constant 0 : index
    %c0_38 = arith.constant 0 : index
    %45 = vector.load %arg15[%c0_37, %c0_38] : memref<1x64xf32, #tpu.memory_space<vmem>>, vector<1x64xf32>
    %46 = arith.truncf %43 : vector<256x64xf32> to vector<256x64xbf16>
    %cst_39 = arith.constant dense<0.000000e+00> : vector<256x64xf32>
    %47 = tpu.matmul %46, %44, %cst_39 {dimension_numbers = #tpu.dot_dimension_numbers<[1], [0], [0], [1], [0, 0, 1, 1], [], []>} : vector<256x64xbf16>, vector<64x64xbf16>, vector<256x64xf32> -> vector<256x64xf32>
    %48 = vector.broadcast %45 : vector<1x64xf32> to vector<256x64xf32>
    %49 = arith.addf %47, %48 : vector<256x64xf32>
    %cst_40 = arith.constant 0.000000e+00 : f32
    %50 = vector.broadcast %cst_40 : f32 to vector<256x64xf32>
    %51 = arith.maximumf %49, %50 : vector<256x64xf32>
    %c0_41 = arith.constant 0 : index
    %c0_42 = arith.constant 0 : index
    %52 = vector.load %arg16[%c0_41, %c0_42] : memref<64x64xbf16, #tpu.memory_space<vmem>>, vector<64x64xbf16>
    %c0_43 = arith.constant 0 : index
    %c0_44 = arith.constant 0 : index
    %53 = vector.load %arg17[%c0_43, %c0_44] : memref<1x64xf32, #tpu.memory_space<vmem>>, vector<1x64xf32>
    %54 = arith.truncf %51 : vector<256x64xf32> to vector<256x64xbf16>
    %cst_45 = arith.constant dense<0.000000e+00> : vector<256x64xf32>
    %55 = tpu.matmul %54, %52, %cst_45 {dimension_numbers = #tpu.dot_dimension_numbers<[1], [0], [0], [1], [0, 0, 1, 1], [], []>} : vector<256x64xbf16>, vector<64x64xbf16>, vector<256x64xf32> -> vector<256x64xf32>
    %56 = vector.broadcast %53 : vector<1x64xf32> to vector<256x64xf32>
    %57 = arith.addf %55, %56 : vector<256x64xf32>
    %cst_46 = arith.constant 0.000000e+00 : f32
    %58 = vector.broadcast %cst_46 : f32 to vector<256x64xf32>
    %59 = arith.maximumf %57, %58 : vector<256x64xf32>
    %c0_47 = arith.constant 0 : index
    %c0_48 = arith.constant 0 : index
    %60 = vector.load %arg18[%c0_47, %c0_48] : memref<64x64xbf16, #tpu.memory_space<vmem>>, vector<64x64xbf16>
    %c0_49 = arith.constant 0 : index
    %c0_50 = arith.constant 0 : index
    %61 = vector.load %arg19[%c0_49, %c0_50] : memref<1x64xf32, #tpu.memory_space<vmem>>, vector<1x64xf32>
    %62 = arith.truncf %59 : vector<256x64xf32> to vector<256x64xbf16>
    %cst_51 = arith.constant dense<0.000000e+00> : vector<256x64xf32>
    %63 = tpu.matmul %62, %60, %cst_51 {dimension_numbers = #tpu.dot_dimension_numbers<[1], [0], [0], [1], [0, 0, 1, 1], [], []>} : vector<256x64xbf16>, vector<64x64xbf16>, vector<256x64xf32> -> vector<256x64xf32>
    %64 = vector.broadcast %61 : vector<1x64xf32> to vector<256x64xf32>
    %65 = arith.addf %63, %64 : vector<256x64xf32>
    %cst_52 = arith.constant 0.000000e+00 : f32
    %66 = vector.broadcast %cst_52 : f32 to vector<256x64xf32>
    %67 = arith.maximumf %65, %66 : vector<256x64xf32>
    %c0_53 = arith.constant 0 : index
    %c0_54 = arith.constant 0 : index
    %68 = vector.load %arg20[%c0_53, %c0_54] : memref<64x64xbf16, #tpu.memory_space<vmem>>, vector<64x64xbf16>
    %c0_55 = arith.constant 0 : index
    %c0_56 = arith.constant 0 : index
    %69 = vector.load %arg21[%c0_55, %c0_56] : memref<1x64xf32, #tpu.memory_space<vmem>>, vector<1x64xf32>
    %c0_57 = arith.constant 0 : index
    %c0_58 = arith.constant 0 : index
    %70 = vector.load %arg22[%c0_57, %c0_58] : memref<64x1xbf16, #tpu.memory_space<vmem>>, vector<64x1xbf16>
    %c0_59 = arith.constant 0 : index
    %c0_60 = arith.constant 0 : index
    %71 = vector.load %arg23[%c0_59, %c0_60] : memref<1x1xf32, #tpu.memory_space<vmem>>, vector<1x1xf32>
    %72 = arith.truncf %67 : vector<256x64xf32> to vector<256x64xbf16>
    %cst_61 = arith.constant dense<0.000000e+00> : vector<256x64xf32>
    %73 = tpu.matmul %72, %68, %cst_61 {dimension_numbers = #tpu.dot_dimension_numbers<[1], [0], [0], [1], [0, 0, 1, 1], [], []>} : vector<256x64xbf16>, vector<64x64xbf16>, vector<256x64xf32> -> vector<256x64xf32>
    %74 = vector.broadcast %69 : vector<1x64xf32> to vector<256x64xf32>
    %75 = arith.addf %73, %74 : vector<256x64xf32>
    %76 = arith.truncf %67 : vector<256x64xf32> to vector<256x64xbf16>
    %cst_62 = arith.constant dense<0.000000e+00> : vector<256x1xf32>
    %77 = tpu.matmul %76, %70, %cst_62 {dimension_numbers = #tpu.dot_dimension_numbers<[1], [0], [0], [1], [0, 0, 1, 1], [], []>} : vector<256x64xbf16>, vector<64x1xbf16>, vector<256x1xf32> -> vector<256x1xf32>
    %78 = vector.broadcast %71 : vector<1x1xf32> to vector<256x1xf32>
    %79 = arith.addf %77, %78 : vector<256x1xf32>
    %cst_63 = arith.constant 0.000000e+00 : f32
    %80 = vector.broadcast %cst_63 : f32 to vector<256x1xf32>
    %81 = arith.maximumf %79, %80 : vector<256x1xf32>
    %82 = math.absf %79 : vector<256x1xf32>
    %cst_64 = arith.constant 0.000000e+00 : f32
    %83 = vector.broadcast %cst_64 : f32 to vector<256x1xf32>
    %84 = arith.subf %83, %82 : vector<256x1xf32>
    %85 = math.exp %84 : vector<256x1xf32>
    %cst_65 = arith.constant 1.000000e+00 : f32
    %86 = vector.broadcast %cst_65 : f32 to vector<256x1xf32>
    %87 = arith.addf %86, %85 : vector<256x1xf32>
    %88 = math.log %87 : vector<256x1xf32>
    %89 = arith.addf %81, %88 : vector<256x1xf32>
    %c0_66 = arith.constant 0 : index
    %c0_67 = arith.constant 0 : index
    %90 = vector.load %arg24[%c0_66, %c0_67] : memref<64x32xbf16, #tpu.memory_space<vmem>>, vector<64x32xbf16>
    %c0_68 = arith.constant 0 : index
    %c0_69 = arith.constant 0 : index
    %91 = vector.load %arg25[%c0_68, %c0_69] : memref<34x32xbf16, #tpu.memory_space<vmem>>, vector<34x32xbf16>
    %c0_70 = arith.constant 0 : index
    %c0_71 = arith.constant 0 : index
    %92 = vector.load %arg26[%c0_70, %c0_71] : memref<1x32xf32, #tpu.memory_space<vmem>>, vector<1x32xf32>
    %93 = arith.truncf %75 : vector<256x64xf32> to vector<256x64xbf16>
    %cst_72 = arith.constant dense<0.000000e+00> : vector<256x32xf32>
    %94 = tpu.matmul %93, %90, %cst_72 {dimension_numbers = #tpu.dot_dimension_numbers<[1], [0], [0], [1], [0, 0, 1, 1], [], []>} : vector<256x64xbf16>, vector<64x32xbf16>, vector<256x32xf32> -> vector<256x32xf32>
    %cst_73 = arith.constant dense<0.000000e+00> : vector<256x32xf32>
    %95 = tpu.matmul %1, %91, %cst_73 {dimension_numbers = #tpu.dot_dimension_numbers<[1], [0], [0], [1], [0, 0, 1, 1], [], []>} : vector<256x34xbf16>, vector<34x32xbf16>, vector<256x32xf32> -> vector<256x32xf32>
    %96 = arith.addf %94, %95 : vector<256x32xf32>
    %97 = vector.broadcast %92 : vector<1x32xf32> to vector<256x32xf32>
    %98 = arith.addf %96, %97 : vector<256x32xf32>
    %cst_74 = arith.constant 0.000000e+00 : f32
    %99 = vector.broadcast %cst_74 : f32 to vector<256x32xf32>
    %100 = arith.maximumf %98, %99 : vector<256x32xf32>
    %c0_75 = arith.constant 0 : index
    %c0_76 = arith.constant 0 : index
    %101 = vector.load %arg27[%c0_75, %c0_76] : memref<32x3xbf16, #tpu.memory_space<vmem>>, vector<32x3xbf16>
    %c0_77 = arith.constant 0 : index
    %c0_78 = arith.constant 0 : index
    %102 = vector.load %arg28[%c0_77, %c0_78] : memref<1x3xf32, #tpu.memory_space<vmem>>, vector<1x3xf32>
    %103 = arith.truncf %100 : vector<256x32xf32> to vector<256x32xbf16>
    %cst_79 = arith.constant dense<0.000000e+00> : vector<256x3xf32>
    %104 = tpu.matmul %103, %101, %cst_79 {dimension_numbers = #tpu.dot_dimension_numbers<[1], [0], [0], [1], [0, 0, 1, 1], [], []>} : vector<256x32xbf16>, vector<32x3xbf16>, vector<256x3xf32> -> vector<256x3xf32>
    %105 = vector.broadcast %102 : vector<1x3xf32> to vector<256x3xf32>
    %106 = arith.addf %104, %105 : vector<256x3xf32>
    %cst_80 = arith.constant 5.000000e-01 : f32
    %107 = vector.broadcast %cst_80 : f32 to vector<256x3xf32>
    %108 = arith.mulf %107, %106 : vector<256x3xf32>
    %109 = math.tanh %108 : vector<256x3xf32>
    %cst_81 = arith.constant 1.000000e+00 : f32
    %110 = vector.broadcast %cst_81 : f32 to vector<256x3xf32>
    %111 = arith.addf %109, %110 : vector<256x3xf32>
    %cst_82 = arith.constant 5.000000e-01 : f32
    %112 = vector.broadcast %cst_82 : f32 to vector<256x3xf32>
    %113 = arith.mulf %112, %111 : vector<256x3xf32>
    %114 = tpu.concatenate %89, %113 in 1 : vector<256x1xf32>, vector<256x3xf32> -> vector<256x4xf32>
    %cst_83 = arith.constant 0.000000e+00 : f32
    %115 = vector.broadcast %cst_83 : f32 to vector<256x4xf32>
    %116 = tpu.concatenate %114, %115 in 1 : vector<256x4xf32>, vector<256x4xf32> -> vector<256x8xf32>
    %117 = tpu.transpose %116, [1, 0] : vector<256x8xf32> -> vector<8x256xf32>
    %c0_84 = arith.constant 0 : index
    %c0_85 = arith.constant 0 : index
    %118 = vector.load %arg29[%c0_84, %c0_85] : memref<8x256xf32, #tpu.memory_space<vmem>>, vector<8x256xf32>
    tpu.vector_store %arg29[%c0_84, %c0_85], %117 {strides = array<i32>} : memref<8x256xf32, #tpu.memory_space<vmem>>, vector<8x256xf32>,
    return
  }
  func.func @transform_0(%arg0: i32) -> (i32, i32) {
    %c0_i32 = arith.constant 0 : i32
    %c0_i32_0 = arith.constant 0 : i32
    return %arg0, %c0_i32 : i32, i32
  }
  func.func @transform_1(%arg0: i32) -> (i32, i32) {
    %c0_i32 = arith.constant 0 : i32
    %c0_i32_0 = arith.constant 0 : i32
    return %arg0, %c0_i32 : i32, i32
  }
  func.func @transform_2(%arg0: i32) -> (i32, i32) {
    %c0_i32 = arith.constant 0 : i32
    %c0_i32_0 = arith.constant 0 : i32
    %c0_i32_1 = arith.constant 0 : i32
    return %c0_i32, %c0_i32_0 : i32, i32
  }
  func.func @transform_3(%arg0: i32) -> (i32, i32) {
    %c0_i32 = arith.constant 0 : i32
    %c0_i32_0 = arith.constant 0 : i32
    %c0_i32_1 = arith.constant 0 : i32
    return %c0_i32, %c0_i32_0 : i32, i32
  }
  func.func @transform_4(%arg0: i32) -> (i32, i32) {
    %c0_i32 = arith.constant 0 : i32
    %c0_i32_0 = arith.constant 0 : i32
    %c0_i32_1 = arith.constant 0 : i32
    return %c0_i32, %c0_i32_0 : i32, i32
  }
  func.func @transform_5(%arg0: i32) -> (i32, i32) {
    %c0_i32 = arith.constant 0 : i32
    %c0_i32_0 = arith.constant 0 : i32
    %c0_i32_1 = arith.constant 0 : i32
    return %c0_i32, %c0_i32_0 : i32, i32
  }
  func.func @transform_6(%arg0: i32) -> (i32, i32) {
    %c0_i32 = arith.constant 0 : i32
    %c0_i32_0 = arith.constant 0 : i32
    %c0_i32_1 = arith.constant 0 : i32
    return %c0_i32, %c0_i32_0 : i32, i32
  }
  func.func @transform_7(%arg0: i32) -> (i32, i32) {
    %c0_i32 = arith.constant 0 : i32
    %c0_i32_0 = arith.constant 0 : i32
    %c0_i32_1 = arith.constant 0 : i32
    return %c0_i32, %c0_i32_0 : i32, i32
  }
  func.func @transform_8(%arg0: i32) -> (i32, i32) {
    %c0_i32 = arith.constant 0 : i32
    %c0_i32_0 = arith.constant 0 : i32
    %c0_i32_1 = arith.constant 0 : i32
    return %c0_i32, %c0_i32_0 : i32, i32
  }
  func.func @transform_9(%arg0: i32) -> (i32, i32) {
    %c0_i32 = arith.constant 0 : i32
    %c0_i32_0 = arith.constant 0 : i32
    %c0_i32_1 = arith.constant 0 : i32
    return %c0_i32, %c0_i32_0 : i32, i32
  }
  func.func @transform_10(%arg0: i32) -> (i32, i32) {
    %c0_i32 = arith.constant 0 : i32
    %c0_i32_0 = arith.constant 0 : i32
    %c0_i32_1 = arith.constant 0 : i32
    return %c0_i32, %c0_i32_0 : i32, i32
  }
  func.func @transform_11(%arg0: i32) -> (i32, i32) {
    %c0_i32 = arith.constant 0 : i32
    %c0_i32_0 = arith.constant 0 : i32
    %c0_i32_1 = arith.constant 0 : i32
    return %c0_i32, %c0_i32_0 : i32, i32
  }
  func.func @transform_12(%arg0: i32) -> (i32, i32) {
    %c0_i32 = arith.constant 0 : i32
    %c0_i32_0 = arith.constant 0 : i32
    %c0_i32_1 = arith.constant 0 : i32
    return %c0_i32, %c0_i32_0 : i32, i32
  }
  func.func @transform_13(%arg0: i32) -> (i32, i32) {
    %c0_i32 = arith.constant 0 : i32
    %c0_i32_0 = arith.constant 0 : i32
    %c0_i32_1 = arith.constant 0 : i32
    return %c0_i32, %c0_i32_0 : i32, i32
  }
  func.func @transform_14(%arg0: i32) -> (i32, i32) {
    %c0_i32 = arith.constant 0 : i32
    %c0_i32_0 = arith.constant 0 : i32
    %c0_i32_1 = arith.constant 0 : i32
    return %c0_i32, %c0_i32_0 : i32, i32
  }
  func.func @transform_15(%arg0: i32) -> (i32, i32) {
    %c0_i32 = arith.constant 0 : i32
    %c0_i32_0 = arith.constant 0 : i32
    %c0_i32_1 = arith.constant 0 : i32
    return %c0_i32, %c0_i32_0 : i32, i32
  }
  func.func @transform_16(%arg0: i32) -> (i32, i32) {
    %c0_i32 = arith.constant 0 : i32
    %c0_i32_0 = arith.constant 0 : i32
    %c0_i32_1 = arith.constant 0 : i32
    return %c0_i32, %c0_i32_0 : i32, i32
  }
  func.func @transform_17(%arg0: i32) -> (i32, i32) {
    %c0_i32 = arith.constant 0 : i32
    %c0_i32_0 = arith.constant 0 : i32
    %c0_i32_1 = arith.constant 0 : i32
    return %c0_i32, %c0_i32_0 : i32, i32
  }
  func.func @transform_18(%arg0: i32) -> (i32, i32) {
    %c0_i32 = arith.constant 0 : i32
    %c0_i32_0 = arith.constant 0 : i32
    %c0_i32_1 = arith.constant 0 : i32
    return %c0_i32, %c0_i32_0 : i32, i32
  }
  func.func @transform_19(%arg0: i32) -> (i32, i32) {
    %c0_i32 = arith.constant 0 : i32
    %c0_i32_0 = arith.constant 0 : i32
    %c0_i32_1 = arith.constant 0 : i32
    return %c0_i32, %c0_i32_0 : i32, i32
  }
  func.func @transform_20(%arg0: i32) -> (i32, i32) {
    %c0_i32 = arith.constant 0 : i32
    %c0_i32_0 = arith.constant 0 : i32
    %c0_i32_1 = arith.constant 0 : i32
    return %c0_i32, %c0_i32_0 : i32, i32
  }
  func.func @transform_21(%arg0: i32) -> (i32, i32) {
    %c0_i32 = arith.constant 0 : i32
    %c0_i32_0 = arith.constant 0 : i32
    %c0_i32_1 = arith.constant 0 : i32
    return %c0_i32, %c0_i32_0 : i32, i32
  }
  func.func @transform_22(%arg0: i32) -> (i32, i32) {
    %c0_i32 = arith.constant 0 : i32
    %c0_i32_0 = arith.constant 0 : i32
    %c0_i32_1 = arith.constant 0 : i32
    return %c0_i32, %c0_i32_0 : i32, i32
  }
  func.func @transform_23(%arg0: i32) -> (i32, i32) {
    %c0_i32 = arith.constant 0 : i32
    %c0_i32_0 = arith.constant 0 : i32
    %c0_i32_1 = arith.constant 0 : i32
    return %c0_i32, %c0_i32_0 : i32, i32
  }
  func.func @transform_24(%arg0: i32) -> (i32, i32) {
    %c0_i32 = arith.constant 0 : i32
    %c0_i32_0 = arith.constant 0 : i32
    %c0_i32_1 = arith.constant 0 : i32
    return %c0_i32, %c0_i32_0 : i32, i32
  }
  func.func @transform_25(%arg0: i32) -> (i32, i32) {
    %c0_i32 = arith.constant 0 : i32
    %c0_i32_0 = arith.constant 0 : i32
    %c0_i32_1 = arith.constant 0 : i32
    return %c0_i32, %c0_i32_0 : i32, i32
  }
  func.func @transform_26(%arg0: i32) -> (i32, i32) {
    %c0_i32 = arith.constant 0 : i32
    %c0_i32_0 = arith.constant 0 : i32
    %c0_i32_1 = arith.constant 0 : i32
    return %c0_i32, %c0_i32_0 : i32, i32
  }
  func.func @transform_27(%arg0: i32) -> (i32, i32) {
    %c0_i32 = arith.constant 0 : i32
    %c0_i32_0 = arith.constant 0 : i32
    %c0_i32_1 = arith.constant 0 : i32
    return %c0_i32, %c0_i32_0 : i32, i32
  }
  func.func @transform_28(%arg0: i32) -> (i32, i32) {
    %c0_i32 = arith.constant 0 : i32
    %c0_i32_0 = arith.constant 0 : i32
    return %c0_i32, %arg0 : i32, i32
  }
}

</mosaic_0001>

<llo_original>
// kernel: tpu_custom_call.1
$region0: #{tpu_custom_call.1}
  #allocation0 [shape = 'u32[]', space=smem, size = 0x4, offset = 0x4, fixed_abs, tag = 'smem constant byte address 0x4 - core index']
  #allocation1 [shape = 'u32[144,128]{1,0:T(1,128)}', space=vmem, size = 0x12000, scoped, tag = 'internal scratch']
  #allocation2 [shape = 'f32[1,1]{1,0:T(1,128)S(1)}', space=vmem, size = 0x200, scoped, tag = 'scoped memory for tpu_custom_call.1']
  %s0 = inlined_call_operand.vmem [shape: bf16[512,63], index: 0, kind: input, shape index: {}]
  %s1 = inlined_call_operand.vmem [shape: bf16[512,34], index: 1, kind: input, shape index: {}]
  %s2 = inlined_call_operand.vmem [shape: bf16[63,64], index: 2, kind: input, shape index: {}]
  %s3 = inlined_call_operand.vmem [shape: f32[1,64], index: 3, kind: input, shape index: {}]
  %s4 = inlined_call_operand.vmem [shape: bf16[64,64], index: 4, kind: input, shape index: {}]
  %s5 = inlined_call_operand.vmem [shape: f32[1,64], index: 5, kind: input, shape index: {}]
  %s6 = inlined_call_operand.vmem [shape: bf16[64,64], index: 6, kind: input, shape index: {}]
  %s7 = inlined_call_operand.vmem [shape: f32[1,64], index: 7, kind: input, shape index: {}]
  %s8 = inlined_call_operand.vmem [shape: bf16[64,64], index: 8, kind: input, shape index: {}]
  %s9 = inlined_call_operand.vmem [shape: f32[1,64], index: 9, kind: input, shape index: {}]
  %s10 = inlined_call_operand.vmem [shape: bf16[64,64], index: 10, kind: input, shape index: {}]
  %s11 = inlined_call_operand.vmem [shape: bf16[63,64], index: 11, kind: input, shape index: {}]
  %s12 = inlined_call_operand.vmem [shape: f32[1,64], index: 12, kind: input, shape index: {}]
  %s13 = inlined_call_operand.vmem [shape: bf16[64,64], index: 13, kind: input, shape index: {}]
  %s14 = inlined_call_operand.vmem [shape: f32[1,64], index: 14, kind: input, shape index: {}]
  %s15 = inlined_call_operand.vmem [shape: bf16[64,64], index: 15, kind: input, shape index: {}]
  %s16 = inlined_call_operand.vmem [shape: f32[1,64], index: 16, kind: input, shape index: {}]
  %s17 = inlined_call_operand.vmem [shape: bf16[64,64], index: 17, kind: input, shape index: {}]
  %s18 = inlined_call_operand.vmem [shape: f32[1,64], index: 18, kind: input, shape index: {}]
  %s19 = inlined_call_operand.vmem [shape: bf16[64,64], index: 19, kind: input, shape index: {}]
  %s20 = inlined_call_operand.vmem [shape: f32[1,64], index: 20, kind: input, shape index: {}]
  %s21 = inlined_call_operand.vmem [shape: bf16[64,1], index: 21, kind: input, shape index: {}]
  %s22 = inlined_call_operand.<no memory space> [shape: f32[1,1], index: 22, kind: input, shape index: {}]
  %s23 = inlined_call_operand.vmem [shape: bf16[64,32], index: 23, kind: input, shape index: {}]
  %s24 = inlined_call_operand.vmem [shape: bf16[34,32], index: 24, kind: input, shape index: {}]
  %s25 = inlined_call_operand.vmem [shape: f32[1,32], index: 25, kind: input, shape index: {}]
  %s26 = inlined_call_operand.vmem [shape: bf16[32,3], index: 26, kind: input, shape index: {}]
  %s27 = inlined_call_operand.vmem [shape: f32[1,3], index: 27, kind: input, shape index: {}]
  %s28 = inlined_call_operand.hbm [shape: f32[8,512], index: 28, kind: output, shape index: {}]
  %s29 = sld [smem:[#allocation0]]
  $region145: #{tpu_custom_call.1} parent=0
    _
  %s31 = ssub.s32 1, %s29
  %s32 = scalar_select 0, %s31, %s29
  %v33 = vstv %s22
  %34 = vst [vmem:[#allocation2] sm:$0x1] %v33
  $region1: #{tpu_custom_call.1} parent=0
    #allocation3 [shape = 'u8[16384]{0}', space=vmem, size = 0x4000, scoped, tag = 'output window, operand 0']
    #allocation4 [shape = 's32[2]{0}', space=sflag, size = 0x8, scoped, tag = 'scoped memory for tpu_custom_call.1']
    %35 = vsyncpa [#allocation4], 0
    %s36 = scalar_lea.sflag [#allocation4], 1
    %37 = vsyncpa %s36, 0
    loop: start=0, step=1, limit=4
    $region2: #{tpu_custom_call.1} parent=1 // loop_pre_header
      _
    $region3: #{tpu_custom_call.1} parent=1 // loop_header
      %s39 = sphi 0, %s43
      %p40 = scmp.ge.s32.totalorder %s39, 4
      %s49 = sphi 0, %s51
      %s52 = sphi 0, %s49
      %s53 = sphi 0, %s52
      %s69 = sphi 0, %s53
      %s75 = sphi 0, %s77
      %s78 = sphi 0, %s75
      %s79 = sphi 0, %s78
      %s95 = sphi 0, %s79
      %s99 = sphi 0, %s99
      %s101 = sphi 0, %s99
      %s102 = sphi 0, %s101
      %s116 = sphi 0, %s102
      %s120 = sphi 0, %s120
      %s122 = sphi 0, %s120
      %s123 = sphi 0, %s122
      %s137 = sphi 0, %s123
      %s141 = sphi 0, %s141
      %s143 = sphi 0, %s141
      %s144 = sphi 0, %s143
      %s158 = sphi 0, %s144
      %s162 = sphi 0, %s162
      %s164 = sphi 0, %s162
      %s165 = sphi 0, %s164
      %s179 = sphi 0, %s165
      %s183 = sphi 0, %s183
      %s185 = sphi 0, %s183
      %s186 = sphi 0, %s185
      %s200 = sphi 0, %s186
      %s204 = sphi 0, %s204
      %s206 = sphi 0, %s204
      %s207 = sphi 0, %s206
      %s221 = sphi 0, %s207
      %s225 = sphi 0, %s225
      %s227 = sphi 0, %s225
      %s228 = sphi 0, %s227
      %s242 = sphi 0, %s228
      %s246 = sphi 0, %s246
      %s248 = sphi 0, %s246
      %s249 = sphi 0, %s248
      %s263 = sphi 0, %s249
      %s267 = sphi 0, %s267
      %s269 = sphi 0, %s267
      %s270 = sphi 0, %s269
      %s284 = sphi 0, %s270
      %s288 = sphi 0, %s288
      %s290 = sphi 0, %s288
      %s291 = sphi 0, %s290
      %s305 = sphi 0, %s291
      %s309 = sphi 0, %s309
      %s311 = sphi 0, %s309
      %s312 = sphi 0, %s311
      %s326 = sphi 0, %s312
      %s330 = sphi 0, %s330
      %s332 = sphi 0, %s330
      %s333 = sphi 0, %s332
      %s347 = sphi 0, %s333
      %s351 = sphi 0, %s351
      %s353 = sphi 0, %s351
      %s354 = sphi 0, %s353
      %s368 = sphi 0, %s354
      %s372 = sphi 0, %s372
      %s374 = sphi 0, %s372
      %s375 = sphi 0, %s374
      %s389 = sphi 0, %s375
      %s393 = sphi 0, %s393
      %s395 = sphi 0, %s393
      %s396 = sphi 0, %s395
      %s410 = sphi 0, %s396
      %s414 = sphi 0, %s414
      %s416 = sphi 0, %s414
      %s417 = sphi 0, %s416
      %s431 = sphi 0, %s417
      %s435 = sphi 0, %s435
      %s437 = sphi 0, %s435
      %s438 = sphi 0, %s437
      %s452 = sphi 0, %s438
      %s456 = sphi 0, %s456
      %s458 = sphi 0, %s456
      %s459 = sphi 0, %s458
      %s473 = sphi 0, %s459
      %s477 = sphi 0, %s477
      %s479 = sphi 0, %s477
      %s480 = sphi 0, %s479
      %s494 = sphi 0, %s480
      %s498 = sphi 0, %s498
      %s500 = sphi 0, %s498
      %s501 = sphi 0, %s500
      %s515 = sphi 0, %s501
      %s519 = sphi 0, %s519
      %s521 = sphi 0, %s519
      %s522 = sphi 0, %s521
      %s536 = sphi 0, %s522
      %s540 = sphi 0, %s540
      %s542 = sphi 0, %s540
      %s543 = sphi 0, %s542
      %s557 = sphi 0, %s543
      %s561 = sphi 0, %s561
      %s563 = sphi 0, %s561
      %s564 = sphi 0, %s563
      %s578 = sphi 0, %s564
      %s582 = sphi 0, %s582
      %s584 = sphi 0, %s582
      %s585 = sphi 0, %s584
      %s599 = sphi 0, %s585
      %s603 = sphi 0, %s603
      %s605 = sphi 0, %s603
      %s606 = sphi 0, %s605
      %s620 = sphi 0, %s606
      %s624 = sphi 0, %s624
      %s626 = sphi 0, %s624
      %s627 = sphi 0, %s626
      %s641 = sphi 0, %s627
      %s647 = sphi 0, %s649
      %s650 = sphi 0, %s647
      %s651 = sphi 0, %s650
      %s667 = sphi 0, %s651
    $region4: #{tpu_custom_call.1} parent=1 // loop_header_branch
      %42 = sbr.rel (%p40) target = $region8
    $region5: #{tpu_custom_call.1} parent=1 // loop_body
      %s44 = ssub.s32 %s39, 1
      %s45 = ssub.s32 %s39, 2
      %s46 = sadd.s32 %s39, 1
      %s47 = ssub.s32 %s39, %s46
      %p48 = scmp.eq.s32.totalorder %s47, 0
      %s50 = sadd.s32 %s49, 1
      %s51 = scalar_select %p48, %s49, %s50
      %p54 = pneg %p48
      %p55 = scmp.eq.s32.totalorder %s39, 1
      %p56 = por %p54, %p55
      %p57 = scmp.ne.s32.totalorder %s49, %s52
      %p58 = scmp.eq.s32.totalorder %s39, 0
      %p59 = por %p57, %p58
      %p60 = scmp.ne.s32.totalorder %s49, %s52
      %p61 = scmp.eq.s32.totalorder %s44, 1
      %p62 = por %p60, %p61
      %p63 = scmp.ne.s32.totalorder %s52, %s53
      %p64 = scmp.eq.s32.totalorder %s44, 0
      %p65 = por %p63, %p64
      %p66 = scmp.ne.s32.totalorder %s52, %s53
      %p67 = scmp.eq.s32.totalorder %s45, 1
      %p68 = por %p66, %p67
      %p70 = scmp.ne.s32.totalorder %s53, %s69
      %p71 = scmp.eq.s32.totalorder %s45, 0
      %p72 = por %p70, %p71
      %s73 = ssub.s32 %s39, %s46
      %p74 = scmp.eq.s32.totalorder %s73, 0
      %s76 = sadd.s32 %s75, 1
      %s77 = scalar_select %p74, %s75, %s76
      %p80 = pneg %p74
      %p81 = scmp.eq.s32.totalorder %s39, 1
      %p82 = por %p80, %p81
      %p83 = scmp.ne.s32.totalorder %s75, %s78
      %p84 = scmp.eq.s32.totalorder %s39, 0
      %p85 = por %p83, %p84
      %p86 = scmp.ne.s32.totalorder %s75, %s78
      %p87 = scmp.eq.s32.totalorder %s44, 1
      %p88 = por %p86, %p87
      %p89 = scmp.ne.s32.totalorder %s78, %s79
      %p90 = scmp.eq.s32.totalorder %s44, 0
      %p91 = por %p89, %p90
      %p92 = scmp.ne.s32.totalorder %s78, %s79
      %p93 = scmp.eq.s32.totalorder %s45, 1
      %p94 = por %p92, %p93
      %p96 = scmp.ne.s32.totalorder %s79, %s95
      %p97 = scmp.eq.s32.totalorder %s45, 0
      %p98 = por %p96, %p97
      %s100 = sadd.s32 %s99, 1
      %p103 = scmp.eq.s32.totalorder %s39, 1
      %p104 = scmp.ne.s32.totalorder %s99, %s101
      %p105 = scmp.eq.s32.totalorder %s39, 0
      %p106 = por %p104, %p105
      %p107 = scmp.ne.s32.totalorder %s99, %s101
      %p108 = scmp.eq.s32.totalorder %s44, 1
      %p109 = por %p107, %p108
      %p110 = scmp.ne.s32.totalorder %s101, %s102
      %p111 = scmp.eq.s32.totalorder %s44, 0
      %p112 = por %p110, %p111
      %p113 = scmp.ne.s32.totalorder %s101, %s102
      %p114 = scmp.eq.s32.totalorder %s45, 1
      %p115 = por %p113, %p114
      %p117 = scmp.ne.s32.totalorder %s102, %s116
      %p118 = scmp.eq.s32.totalorder %s45, 0
      %p119 = por %p117, %p118
      %s121 = sadd.s32 %s120, 1
      %p124 = scmp.eq.s32.totalorder %s39, 1
      %p125 = scmp.ne.s32.totalorder %s120, %s122
      %p126 = scmp.eq.s32.totalorder %s39, 0
      %p127 = por %p125, %p126
      %p128 = scmp.ne.s32.totalorder %s120, %s122
      %p129 = scmp.eq.s32.totalorder %s44, 1
      %p130 = por %p128, %p129
      %p131 = scmp.ne.s32.totalorder %s122, %s123
      %p132 = scmp.eq.s32.totalorder %s44, 0
      %p133 = por %p131, %p132
      %p134 = scmp.ne.s32.totalorder %s122, %s123
      %p135 = scmp.eq.s32.totalorder %s45, 1
      %p136 = por %p134, %p135
      %p138 = scmp.ne.s32.totalorder %s123, %s137
      %p139 = scmp.eq.s32.totalorder %s45, 0
      %p140 = por %p138, %p139
      %s142 = sadd.s32 %s141, 1
      %p145 = scmp.eq.s32.totalorder %s39, 1
      %p146 = scmp.ne.s32.totalorder %s141, %s143
      %p147 = scmp.eq.s32.totalorder %s39, 0
      %p148 = por %p146, %p147
      %p149 = scmp.ne.s32.totalorder %s141, %s143
      %p150 = scmp.eq.s32.totalorder %s44, 1
      %p151 = por %p149, %p150
      %p152 = scmp.ne.s32.totalorder %s143, %s144
      %p153 = scmp.eq.s32.totalorder %s44, 0
      %p154 = por %p152, %p153
      %p155 = scmp.ne.s32.totalorder %s143, %s144
      %p156 = scmp.eq.s32.totalorder %s45, 1
      %p157 = por %p155, %p156
      %p159 = scmp.ne.s32.totalorder %s144, %s158
      %p160 = scmp.eq.s32.totalorder %s45, 0
      %p161 = por %p159, %p160
      %s163 = sadd.s32 %s162, 1
      %p166 = scmp.eq.s32.totalorder %s39, 1
      %p167 = scmp.ne.s32.totalorder %s162, %s164
      %p168 = scmp.eq.s32.totalorder %s39, 0
      %p169 = por %p167, %p168
      %p170 = scmp.ne.s32.totalorder %s162, %s164
      %p171 = scmp.eq.s32.totalorder %s44, 1
      %p172 = por %p170, %p171
      %p173 = scmp.ne.s32.totalorder %s164, %s165
      %p174 = scmp.eq.s32.totalorder %s44, 0
      %p175 = por %p173, %p174
      %p176 = scmp.ne.s32.totalorder %s164, %s165
      %p177 = scmp.eq.s32.totalorder %s45, 1
      %p178 = por %p176, %p177
      %p180 = scmp.ne.s32.totalorder %s165, %s179
      %p181 = scmp.eq.s32.totalorder %s45, 0
      %p182 = por %p180, %p181
      %s184 = sadd.s32 %s183, 1
      %p187 = scmp.eq.s32.totalorder %s39, 1
      %p188 = scmp.ne.s32.totalorder %s183, %s185
      %p189 = scmp.eq.s32.totalorder %s39, 0
      %p190 = por %p188, %p189
      %p191 = scmp.ne.s32.totalorder %s183, %s185
      %p192 = scmp.eq.s32.totalorder %s44, 1
      %p193 = por %p191, %p192
      %p194 = scmp.ne.s32.totalorder %s185, %s186
      %p195 = scmp.eq.s32.totalorder %s44, 0
      %p196 = por %p194, %p195
      %p197 = scmp.ne.s32.totalorder %s185, %s186
      %p198 = scmp.eq.s32.totalorder %s45, 1
      %p199 = por %p197, %p198
      %p201 = scmp.ne.s32.totalorder %s186, %s200
      %p202 = scmp.eq.s32.totalorder %s45, 0
      %p203 = por %p201, %p202
      %s205 = sadd.s32 %s204, 1
      %p208 = scmp.eq.s32.totalorder %s39, 1
      %p209 = scmp.ne.s32.totalorder %s204, %s206
      %p210 = scmp.eq.s32.totalorder %s39, 0
      %p211 = por %p209, %p210
      %p212 = scmp.ne.s32.totalorder %s204, %s206
      %p213 = scmp.eq.s32.totalorder %s44, 1
      %p214 = por %p212, %p213
      %p215 = scmp.ne.s32.totalorder %s206, %s207
      %p216 = scmp.eq.s32.totalorder %s44, 0
      %p217 = por %p215, %p216
      %p218 = scmp.ne.s32.totalorder %s206, %s207
      %p219 = scmp.eq.s32.totalorder %s45, 1
      %p220 = por %p218, %p219
      %p222 = scmp.ne.s32.totalorder %s207, %s221
      %p223 = scmp.eq.s32.totalorder %s45, 0
      %p224 = por %p222, %p223
      %s226 = sadd.s32 %s225, 1
      %p229 = scmp.eq.s32.totalorder %s39, 1
      %p230 = scmp.ne.s32.totalorder %s225, %s227
      %p231 = scmp.eq.s32.totalorder %s39, 0
      %p232 = por %p230, %p231
      %p233 = scmp.ne.s32.totalorder %s225, %s227
      %p234 = scmp.eq.s32.totalorder %s44, 1
      %p235 = por %p233, %p234
      %p236 = scmp.ne.s32.totalorder %s227, %s228
      %p237 = scmp.eq.s32.totalorder %s44, 0
      %p238 = por %p236, %p237
      %p239 = scmp.ne.s32.totalorder %s227, %s228
      %p240 = scmp.eq.s32.totalorder %s45, 1
      %p241 = por %p239, %p240
      %p243 = scmp.ne.s32.totalorder %s228, %s242
      %p244 = scmp.eq.s32.totalorder %s45, 0
      %p245 = por %p243, %p244
      %s247 = sadd.s32 %s246, 1
      %p250 = scmp.eq.s32.totalorder %s39, 1
      %p251 = scmp.ne.s32.totalorder %s246, %s248
      %p252 = scmp.eq.s32.totalorder %s39, 0
      %p253 = por %p251, %p252
      %p254 = scmp.ne.s32.totalorder %s246, %s248
      %p255 = scmp.eq.s32.totalorder %s44, 1
      %p256 = por %p254, %p255
      %p257 = scmp.ne.s32.totalorder %s248, %s249
      %p258 = scmp.eq.s32.totalorder %s44, 0
      %p259 = por %p257, %p258
      %p260 = scmp.ne.s32.totalorder %s248, %s249
      %p261 = scmp.eq.s32.totalorder %s45, 1
      %p262 = por %p260, %p261
      %p264 = scmp.ne.s32.totalorder %s249, %s263
      %p265 = scmp.eq.s32.totalorder %s45, 0
      %p266 = por %p264, %p265
      %s268 = sadd.s32 %s267, 1
      %p271 = scmp.eq.s32.totalorder %s39, 1
      %p272 = scmp.ne.s32.totalorder %s267, %s269
      %p273 = scmp.eq.s32.totalorder %s39, 0
      %p274 = por %p272, %p273
      %p275 = scmp.ne.s32.totalorder %s267, %s269
      %p276 = scmp.eq.s32.totalorder %s44, 1
      %p277 = por %p275, %p276
      %p278 = scmp.ne.s32.totalorder %s269, %s270
      %p279 = scmp.eq.s32.totalorder %s44, 0
      %p280 = por %p278, %p279
      %p281 = scmp.ne.s32.totalorder %s269, %s270
      %p282 = scmp.eq.s32.totalorder %s45, 1
      %p283 = por %p281, %p282
      %p285 = scmp.ne.s32.totalorder %s270, %s284
      %p286 = scmp.eq.s32.totalorder %s45, 0
      %p287 = por %p285, %p286
      %s289 = sadd.s32 %s288, 1
      %p292 = scmp.eq.s32.totalorder %s39, 1
      %p293 = scmp.ne.s32.totalorder %s288, %s290
      %p294 = scmp.eq.s32.totalorder %s39, 0
      %p295 = por %p293, %p294
      %p296 = scmp.ne.s32.totalorder %s288, %s290
      %p297 = scmp.eq.s32.totalorder %s44, 1
      %p298 = por %p296, %p297
      %p299 = scmp.ne.s32.totalorder %s290, %s291
      %p300 = scmp.eq.s32.totalorder %s44, 0
      %p301 = por %p299, %p300
      %p302 = scmp.ne.s32.totalorder %s290, %s291
      %p303 = scmp.eq.s32.totalorder %s45, 1
      %p304 = por %p302, %p303
      %p306 = scmp.ne.s32.totalorder %s291, %s305
      %p307 = scmp.eq.s32.totalorder %s45, 0
      %p308 = por %p306, %p307
      %s310 = sadd.s32 %s309, 1
      %p313 = scmp.eq.s32.totalorder %s39, 1
      %p314 = scmp.ne.s32.totalorder %s309, %s311
      %p315 = scmp.eq.s32.totalorder %s39, 0
      %p316 = por %p314, %p315
      %p317 = scmp.ne.s32.totalorder %s309, %s311
      %p318 = scmp.eq.s32.totalorder %s44, 1
      %p319 = por %p317, %p318
      %p320 = scmp.ne.s32.totalorder %s311, %s312
      %p321 = scmp.eq.s32.totalorder %s44, 0
      %p322 = por %p320, %p321
      %p323 = scmp.ne.s32.totalorder %s311, %s312
      %p324 = scmp.eq.s32.totalorder %s45, 1
      %p325 = por %p323, %p324
      %p327 = scmp.ne.s32.totalorder %s312, %s326
      %p328 = scmp.eq.s32.totalorder %s45, 0
      %p329 = por %p327, %p328
      %s331 = sadd.s32 %s330, 1
      %p334 = scmp.eq.s32.totalorder %s39, 1
      %p335 = scmp.ne.s32.totalorder %s330, %s332
      %p336 = scmp.eq.s32.totalorder %s39, 0
      %p337 = por %p335, %p336
      %p338 = scmp.ne.s32.totalorder %s330, %s332
      %p339 = scmp.eq.s32.totalorder %s44, 1
      %p340 = por %p338, %p339
      %p341 = scmp.ne.s32.totalorder %s332, %s333
      %p342 = scmp.eq.s32.totalorder %s44, 0
      %p343 = por %p341, %p342
      %p344 = scmp.ne.s32.totalorder %s332, %s333
      %p345 = scmp.eq.s32.totalorder %s45, 1
      %p346 = por %p344, %p345
      %p348 = scmp.ne.s32.totalorder %s333, %s347
      %p349 = scmp.eq.s32.totalorder %s45, 0
      %p350 = por %p348, %p349
      %s352 = sadd.s32 %s351, 1
      %p355 = scmp.eq.s32.totalorder %s39, 1
      %p356 = scmp.ne.s32.totalorder %s351, %s353
      %p357 = scmp.eq.s32.totalorder %s39, 0
      %p358 = por %p356, %p357
      %p359 = scmp.ne.s32.totalorder %s351, %s353
      %p360 = scmp.eq.s32.totalorder %s44, 1
      %p361 = por %p359, %p360
      %p362 = scmp.ne.s32.totalorder %s353, %s354
      %p363 = scmp.eq.s32.totalorder %s44, 0
      %p364 = por %p362, %p363
      %p365 = scmp.ne.s32.totalorder %s353, %s354
      %p366 = scmp.eq.s32.totalorder %s45, 1
      %p367 = por %p365, %p366
      %p369 = scmp.ne.s32.totalorder %s354, %s368
      %p370 = scmp.eq.s32.totalorder %s45, 0
      %p371 = por %p369, %p370
      %s373 = sadd.s32 %s372, 1
      %p376 = scmp.eq.s32.totalorder %s39, 1
      %p377 = scmp.ne.s32.totalorder %s372, %s374
      %p378 = scmp.eq.s32.totalorder %s39, 0
      %p379 = por %p377, %p378
      %p380 = scmp.ne.s32.totalorder %s372, %s374
      %p381 = scmp.eq.s32.totalorder %s44, 1
      %p382 = por %p380, %p381
      %p383 = scmp.ne.s32.totalorder %s374, %s375
      %p384 = scmp.eq.s32.totalorder %s44, 0
      %p385 = por %p383, %p384
      %p386 = scmp.ne.s32.totalorder %s374, %s375
      %p387 = scmp.eq.s32.totalorder %s45, 1
      %p388 = por %p386, %p387
      %p390 = scmp.ne.s32.totalorder %s375, %s389
      %p391 = scmp.eq.s32.totalorder %s45, 0
      %p392 = por %p390, %p391
      %s394 = sadd.s32 %s393, 1
      %p397 = scmp.eq.s32.totalorder %s39, 1
      %p398 = scmp.ne.s32.totalorder %s393, %s395
      %p399 = scmp.eq.s32.totalorder %s39, 0
      %p400 = por %p398, %p399
      %p401 = scmp.ne.s32.totalorder %s393, %s395
      %p402 = scmp.eq.s32.totalorder %s44, 1
      %p403 = por %p401, %p402
      %p404 = scmp.ne.s32.totalorder %s395, %s396
      %p405 = scmp.eq.s32.totalorder %s44, 0
      %p406 = por %p404, %p405
      %p407 = scmp.ne.s32.totalorder %s395, %s396
      %p408 = scmp.eq.s32.totalorder %s45, 1
      %p409 = por %p407, %p408
      %p411 = scmp.ne.s32.totalorder %s396, %s410
      %p412 = scmp.eq.s32.totalorder %s45, 0
      %p413 = por %p411, %p412
      %s415 = sadd.s32 %s414, 1
      %p418 = scmp.eq.s32.totalorder %s39, 1
      %p419 = scmp.ne.s32.totalorder %s414, %s416
      %p420 = scmp.eq.s32.totalorder %s39, 0
      %p421 = por %p419, %p420
      %p422 = scmp.ne.s32.totalorder %s414, %s416
      %p423 = scmp.eq.s32.totalorder %s44, 1
      %p424 = por %p422, %p423
      %p425 = scmp.ne.s32.totalorder %s416, %s417
      %p426 = scmp.eq.s32.totalorder %s44, 0
      %p427 = por %p425, %p426
      %p428 = scmp.ne.s32.totalorder %s416, %s417
      %p429 = scmp.eq.s32.totalorder %s45, 1
      %p430 = por %p428, %p429
      %p432 = scmp.ne.s32.totalorder %s417, %s431
      %p433 = scmp.eq.s32.totalorder %s45, 0
      %p434 = por %p432, %p433
      %s436 = sadd.s32 %s435, 1
      %p439 = scmp.eq.s32.totalorder %s39, 1
      %p440 = scmp.ne.s32.totalorder %s435, %s437
      %p441 = scmp.eq.s32.totalorder %s39, 0
      %p442 = por %p440, %p441
      %p443 = scmp.ne.s32.totalorder %s435, %s437
      %p444 = scmp.eq.s32.totalorder %s44, 1
      %p445 = por %p443, %p444
      %p446 = scmp.ne.s32.totalorder %s437, %s438
      %p447 = scmp.eq.s32.totalorder %s44, 0
      %p448 = por %p446, %p447
      %p449 = scmp.ne.s32.totalorder %s437, %s438
      %p450 = scmp.eq.s32.totalorder %s45, 1
      %p451 = por %p449, %p450
      %p453 = scmp.ne.s32.totalorder %s438, %s452
      %p454 = scmp.eq.s32.totalorder %s45, 0
      %p455 = por %p453, %p454
      %s457 = sadd.s32 %s456, 1
      %p460 = scmp.eq.s32.totalorder %s39, 1
      %p461 = scmp.ne.s32.totalorder %s456, %s458
      %p462 = scmp.eq.s32.totalorder %s39, 0
      %p463 = por %p461, %p462
      %p464 = scmp.ne.s32.totalorder %s456, %s458
      %p465 = scmp.eq.s32.totalorder %s44, 1
      %p466 = por %p464, %p465
      %p467 = scmp.ne.s32.totalorder %s458, %s459
      %p468 = scmp.eq.s32.totalorder %s44, 0
      %p469 = por %p467, %p468
      %p470 = scmp.ne.s32.totalorder %s458, %s459
      %p471 = scmp.eq.s32.totalorder %s45, 1
      %p472 = por %p470, %p471
      %p474 = scmp.ne.s32.totalorder %s459, %s473
      %p475 = scmp.eq.s32.totalorder %s45, 0
      %p476 = por %p474, %p475
      %s478 = sadd.s32 %s477, 1
      %p481 = scmp.eq.s32.totalorder %s39, 1
      %p482 = scmp.ne.s32.totalorder %s477, %s479
      %p483 = scmp.eq.s32.totalorder %s39, 0
      %p484 = por %p482, %p483
      %p485 = scmp.ne.s32.totalorder %s477, %s479
      %p486 = scmp.eq.s32.totalorder %s44, 1
      %p487 = por %p485, %p486
      %p488 = scmp.ne.s32.totalorder %s479, %s480
      %p489 = scmp.eq.s32.totalorder %s44, 0
      %p490 = por %p488, %p489
      %p491 = scmp.ne.s32.totalorder %s479, %s480
      %p492 = scmp.eq.s32.totalorder %s45, 1
      %p493 = por %p491, %p492
      %p495 = scmp.ne.s32.totalorder %s480, %s494
      %p496 = scmp.eq.s32.totalorder %s45, 0
      %p497 = por %p495, %p496
      %s499 = sadd.s32 %s498, 1
      %p502 = scmp.eq.s32.totalorder %s39, 1
      %p503 = scmp.ne.s32.totalorder %s498, %s500
      %p504 = scmp.eq.s32.totalorder %s39, 0
      %p505 = por %p503, %p504
      %p506 = scmp.ne.s32.totalorder %s498, %s500
      %p507 = scmp.eq.s32.totalorder %s44, 1
      %p508 = por %p506, %p507
      %p509 = scmp.ne.s32.totalorder %s500, %s501
      %p510 = scmp.eq.s32.totalorder %s44, 0
      %p511 = por %p509, %p510
      %p512 = scmp.ne.s32.totalorder %s500, %s501
      %p513 = scmp.eq.s32.totalorder %s45, 1
      %p514 = por %p512, %p513
      %p516 = scmp.ne.s32.totalorder %s501, %s515
      %p517 = scmp.eq.s32.totalorder %s45, 0
      %p518 = por %p516, %p517
      %s520 = sadd.s32 %s519, 1
      %p523 = scmp.eq.s32.totalorder %s39, 1
      %p524 = scmp.ne.s32.totalorder %s519, %s521
      %p525 = scmp.eq.s32.totalorder %s39, 0
      %p526 = por %p524, %p525
      %p527 = scmp.ne.s32.totalorder %s519, %s521
      %p528 = scmp.eq.s32.totalorder %s44, 1
      %p529 = por %p527, %p528
      %p530 = scmp.ne.s32.totalorder %s521, %s522
      %p531 = scmp.eq.s32.totalorder %s44, 0
      %p532 = por %p530, %p531
      %p533 = scmp.ne.s32.totalorder %s521, %s522
      %p534 = scmp.eq.s32.totalorder %s45, 1
      %p535 = por %p533, %p534
      %p537 = scmp.ne.s32.totalorder %s522, %s536
      %p538 = scmp.eq.s32.totalorder %s45, 0
      %p539 = por %p537, %p538
      %s541 = sadd.s32 %s540, 1
      %p544 = scmp.eq.s32.totalorder %s39, 1
      %p545 = scmp.ne.s32.totalorder %s540, %s542
      %p546 = scmp.eq.s32.totalorder %s39, 0
      %p547 = por %p545, %p546
      %p548 = scmp.ne.s32.totalorder %s540, %s542
      %p549 = scmp.eq.s32.totalorder %s44, 1
      %p550 = por %p548, %p549
      %p551 = scmp.ne.s32.totalorder %s542, %s543
      %p552 = scmp.eq.s32.totalorder %s44, 0
      %p553 = por %p551, %p552
      %p554 = scmp.ne.s32.totalorder %s542, %s543
      %p555 = scmp.eq.s32.totalorder %s45, 1
      %p556 = por %p554, %p555
      %p558 = scmp.ne.s32.totalorder %s543, %s557
      %p559 = scmp.eq.s32.totalorder %s45, 0
      %p560 = por %p558, %p559
      %s562 = sadd.s32 %s561, 1
      %p565 = scmp.eq.s32.totalorder %s39, 1
      %p566 = scmp.ne.s32.totalorder %s561, %s563
      %p567 = scmp.eq.s32.totalorder %s39, 0
      %p568 = por %p566, %p567
      %p569 = scmp.ne.s32.totalorder %s561, %s563
      %p570 = scmp.eq.s32.totalorder %s44, 1
      %p571 = por %p569, %p570
      %p572 = scmp.ne.s32.totalorder %s563, %s564
      %p573 = scmp.eq.s32.totalorder %s44, 0
      %p574 = por %p572, %p573
      %p575 = scmp.ne.s32.totalorder %s563, %s564
      %p576 = scmp.eq.s32.totalorder %s45, 1
      %p577 = por %p575, %p576
      %p579 = scmp.ne.s32.totalorder %s564, %s578
      %p580 = scmp.eq.s32.totalorder %s45, 0
      %p581 = por %p579, %p580
      %s583 = sadd.s32 %s582, 1
      %p586 = scmp.eq.s32.totalorder %s39, 1
      %p587 = scmp.ne.s32.totalorder %s582, %s584
      %p588 = scmp.eq.s32.totalorder %s39, 0
      %p589 = por %p587, %p588
      %p590 = scmp.ne.s32.totalorder %s582, %s584
      %p591 = scmp.eq.s32.totalorder %s44, 1
      %p592 = por %p590, %p591
      %p593 = scmp.ne.s32.totalorder %s584, %s585
      %p594 = scmp.eq.s32.totalorder %s44, 0
      %p595 = por %p593, %p594
      %p596 = scmp.ne.s32.totalorder %s584, %s585
      %p597 = scmp.eq.s32.totalorder %s45, 1
      %p598 = por %p596, %p597
      %p600 = scmp.ne.s32.totalorder %s585, %s599
      %p601 = scmp.eq.s32.totalorder %s45, 0
      %p602 = por %p600, %p601
      %s604 = sadd.s32 %s603, 1
      %p607 = scmp.eq.s32.totalorder %s39, 1
      %p608 = scmp.ne.s32.totalorder %s603, %s605
      %p609 = scmp.eq.s32.totalorder %s39, 0
      %p610 = por %p608, %p609
      %p611 = scmp.ne.s32.totalorder %s603, %s605
      %p612 = scmp.eq.s32.totalorder %s44, 1
      %p613 = por %p611, %p612
      %p614 = scmp.ne.s32.totalorder %s605, %s606
      %p615 = scmp.eq.s32.totalorder %s44, 0
      %p616 = por %p614, %p615
      %p617 = scmp.ne.s32.totalorder %s605, %s606
      %p618 = scmp.eq.s32.totalorder %s45, 1
      %p619 = por %p617, %p618
      %p621 = scmp.ne.s32.totalorder %s606, %s620
      %p622 = scmp.eq.s32.totalorder %s45, 0
      %p623 = por %p621, %p622
      %s625 = sadd.s32 %s624, 1
      %p628 = scmp.eq.s32.totalorder %s39, 1
      %p629 = scmp.ne.s32.totalorder %s624, %s626
      %p630 = scmp.eq.s32.totalorder %s39, 0
      %p631 = por %p629, %p630
      %p632 = scmp.ne.s32.totalorder %s624, %s626
      %p633 = scmp.eq.s32.totalorder %s44, 1
      %p634 = por %p632, %p633
      %p635 = scmp.ne.s32.totalorder %s626, %s627
      %p636 = scmp.eq.s32.totalorder %s44, 0
      %p637 = por %p635, %p636
      %p638 = scmp.ne.s32.totalorder %s626, %s627
      %p639 = scmp.eq.s32.totalorder %s45, 1
      %p640 = por %p638, %p639
      %p642 = scmp.ne.s32.totalorder %s627, %s641
      %p643 = scmp.eq.s32.totalorder %s45, 0
      %p644 = por %p642, %p643
      %s645 = ssub.s32 %s39, %s46
      %p646 = scmp.eq.s32.totalorder %s645, 0
      %s648 = sadd.s32 %s647, 1
      %s649 = scalar_select %p646, %s647, %s648
      %p652 = pneg %p646
      %p653 = scmp.eq.s32.totalorder %s39, 1
      %p654 = por %p652, %p653
      %p655 = scmp.ne.s32.totalorder %s647, %s650
      %p656 = scmp.eq.s32.totalorder %s39, 0
      %p657 = por %p655, %p656
      %p658 = scmp.ne.s32.totalorder %s647, %s650
      %p659 = scmp.eq.s32.totalorder %s44, 1
      %p660 = por %p658, %p659
      %p661 = scmp.ne.s32.totalorder %s650, %s651
      %p662 = scmp.eq.s32.totalorder %s44, 0
      %p663 = por %p661, %p662
      %p664 = scmp.ne.s32.totalorder %s650, %s651
      %p665 = scmp.eq.s32.totalorder %s45, 1
      %p666 = por %p664, %p665
      %p668 = scmp.ne.s32.totalorder %s651, %s667
      %p669 = scmp.eq.s32.totalorder %s45, 0
      %p670 = por %p668, %p669
      %p671 = scmp.le.s32.totalorder 1, %s39
      %p672 = scmp.lt.s32.totalorder %s39, 3
      %p673 = pnand %p671, %p672
      %p674 = pneg %p673
      // Predicated region
      $region9: #{tpu_custom_call.1} parent=5 // pred_check
        _
      $region10: #{tpu_custom_call.1} parent=5 // pred_check_branch
        %676 = sbr.rel (%p673) target = $region12
      $region11: #{tpu_custom_call.1} parent=5 // pred_region
        %s677 = ssub.s32 %s39, 1
        // Predicated region
        $region13: #{tpu_custom_call.1} parent=11 // pred_check
          %p678 = pneg %p112
        $region14: #{tpu_custom_call.1} parent=11 // pred_check_branch
          %680 = sbr.rel (%p678) target = $region16
        $region15: #{tpu_custom_call.1} parent=11 // pred_region
          _
        $region16: #{tpu_custom_call.1} parent=11 // pred_fallthru
          _
        // Predicated region
        $region17: #{tpu_custom_call.1} parent=11 // pred_check
          %p681 = pneg %p133
        $region18: #{tpu_custom_call.1} parent=11 // pred_check_branch
          %683 = sbr.rel (%p681) target = $region20
        $region19: #{tpu_custom_call.1} parent=11 // pred_region
          _
        $region20: #{tpu_custom_call.1} parent=11 // pred_fallthru
          _
        // Predicated region
        $region21: #{tpu_custom_call.1} parent=11 // pred_check
          %p684 = pneg %p154
        $region22: #{tpu_custom_call.1} parent=11 // pred_check_branch
          %686 = sbr.rel (%p684) target = $region24
        $region23: #{tpu_custom_call.1} parent=11 // pred_region
          _
        $region24: #{tpu_custom_call.1} parent=11 // pred_fallthru
          _
        // Predicated region
        $region25: #{tpu_custom_call.1} parent=11 // pred_check
          %p687 = pneg %p175
        $region26: #{tpu_custom_call.1} parent=11 // pred_check_branch
          %689 = sbr.rel (%p687) target = $region28
        $region27: #{tpu_custom_call.1} parent=11 // pred_region
          _
        $region28: #{tpu_custom_call.1} parent=11 // pred_fallthru
          _
        // Predicated region
        $region29: #{tpu_custom_call.1} parent=11 // pred_check
          %p690 = pneg %p196
        $region30: #{tpu_custom_call.1} parent=11 // pred_check_branch
          %692 = sbr.rel (%p690) target = $region32
        $region31: #{tpu_custom_call.1} parent=11 // pred_region
          _
        $region32: #{tpu_custom_call.1} parent=11 // pred_fallthru
          _
        // Predicated region
        $region33: #{tpu_custom_call.1} parent=11 // pred_check
          %p693 = pneg %p217
        $region34: #{tpu_custom_call.1} parent=11 // pred_check_branch
          %695 = sbr.rel (%p693) target = $region36
        $region35: #{tpu_custom_call.1} parent=11 // pred_region
          _
        $region36: #{tpu_custom_call.1} parent=11 // pred_fallthru
          _
        // Predicated region
        $region37: #{tpu_custom_call.1} parent=11 // pred_check
          %p696 = pneg %p238
        $region38: #{tpu_custom_call.1} parent=11 // pred_check_branch
          %698 = sbr.rel (%p696) target = $region40
        $region39: #{tpu_custom_call.1} parent=11 // pred_region
          _
        $region40: #{tpu_custom_call.1} parent=11 // pred_fallthru
          _
        // Predicated region
        $region41: #{tpu_custom_call.1} parent=11 // pred_check
          %p699 = pneg %p259
        $region42: #{tpu_custom_call.1} parent=11 // pred_check_branch
          %701 = sbr.rel (%p699) target = $region44
        $region43: #{tpu_custom_call.1} parent=11 // pred_region
          _
        $region44: #{tpu_custom_call.1} parent=11 // pred_fallthru
          _
        // Predicated region
        $region45: #{tpu_custom_call.1} parent=11 // pred_check
          %p702 = pneg %p280
        $region46: #{tpu_custom_call.1} parent=11 // pred_check_branch
          %704 = sbr.rel (%p702) target = $region48
        $region47: #{tpu_custom_call.1} parent=11 // pred_region
          _
        $region48: #{tpu_custom_call.1} parent=11 // pred_fallthru
          _
        // Predicated region
        $region49: #{tpu_custom_call.1} parent=11 // pred_check
          %p705 = pneg %p301
        $region50: #{tpu_custom_call.1} parent=11 // pred_check_branch
          %707 = sbr.rel (%p705) target = $region52
        $region51: #{tpu_custom_call.1} parent=11 // pred_region
          _
        $region52: #{tpu_custom_call.1} parent=11 // pred_fallthru
          _
        // Predicated region
        $region53: #{tpu_custom_call.1} parent=11 // pred_check
          %p708 = pneg %p322
        $region54: #{tpu_custom_call.1} parent=11 // pred_check_branch
          %710 = sbr.rel (%p708) target = $region56
        $region55: #{tpu_custom_call.1} parent=11 // pred_region
          _
        $region56: #{tpu_custom_call.1} parent=11 // pred_fallthru
          _
        // Predicated region
        $region57: #{tpu_custom_call.1} parent=11 // pred_check
          %p711 = pneg %p343
        $region58: #{tpu_custom_call.1} parent=11 // pred_check_branch
          %713 = sbr.rel (%p711) target = $region60
        $region59: #{tpu_custom_call.1} parent=11 // pred_region
          _
        $region60: #{tpu_custom_call.1} parent=11 // pred_fallthru
          _
        // Predicated region
        $region61: #{tpu_custom_call.1} parent=11 // pred_check
          %p714 = pneg %p364
        $region62: #{tpu_custom_call.1} parent=11 // pred_check_branch
          %716 = sbr.rel (%p714) target = $region64
        $region63: #{tpu_custom_call.1} parent=11 // pred_region
          _
        $region64: #{tpu_custom_call.1} parent=11 // pred_fallthru
          _
        // Predicated region
        $region65: #{tpu_custom_call.1} parent=11 // pred_check
          %p717 = pneg %p385
        $region66: #{tpu_custom_call.1} parent=11 // pred_check_branch
          %719 = sbr.rel (%p717) target = $region68
        $region67: #{tpu_custom_call.1} parent=11 // pred_region
          _
        $region68: #{tpu_custom_call.1} parent=11 // pred_fallthru
          _
        // Predicated region
        $region69: #{tpu_custom_call.1} parent=11 // pred_check
          %p720 = pneg %p406
        $region70: #{tpu_custom_call.1} parent=11 // pred_check_branch
          %722 = sbr.rel (%p720) target = $region72
        $region71: #{tpu_custom_call.1} parent=11 // pred_region
          _
        $region72: #{tpu_custom_call.1} parent=11 // pred_fallthru
          _
        // Predicated region
        $region73: #{tpu_custom_call.1} parent=11 // pred_check
          %p723 = pneg %p427
        $region74: #{tpu_custom_call.1} parent=11 // pred_check_branch
          %725 = sbr.rel (%p723) target = $region76
        $region75: #{tpu_custom_call.1} parent=11 // pred_region
          _
        $region76: #{tpu_custom_call.1} parent=11 // pred_fallthru
          _
        // Predicated region
        $region77: #{tpu_custom_call.1} parent=11 // pred_check
          %p726 = pneg %p448
        $region78: #{tpu_custom_call.1} parent=11 // pred_check_branch
          %728 = sbr.rel (%p726) target = $region80
        $region79: #{tpu_custom_call.1} parent=11 // pred_region
          _
        $region80: #{tpu_custom_call.1} parent=11 // pred_fallthru
          _
        // Predicated region
        $region81: #{tpu_custom_call.1} parent=11 // pred_check
          %p729 = pneg %p469
        $region82: #{tpu_custom_call.1} parent=11 // pred_check_branch
          %731 = sbr.rel (%p729) target = $region84
        $region83: #{tpu_custom_call.1} parent=11 // pred_region
          _
        $region84: #{tpu_custom_call.1} parent=11 // pred_fallthru
          _
        // Predicated region
        $region85: #{tpu_custom_call.1} parent=11 // pred_check
          %p732 = pneg %p490
        $region86: #{tpu_custom_call.1} parent=11 // pred_check_branch
          %734 = sbr.rel (%p732) target = $region88
        $region87: #{tpu_custom_call.1} parent=11 // pred_region
          _
        $region88: #{tpu_custom_call.1} parent=11 // pred_fallthru
          _
        // Predicated region
        $region89: #{tpu_custom_call.1} parent=11 // pred_check
          %p735 = pneg %p511
        $region90: #{tpu_custom_call.1} parent=11 // pred_check_branch
          %737 = sbr.rel (%p735) target = $region92
        $region91: #{tpu_custom_call.1} parent=11 // pred_region
          _
        $region92: #{tpu_custom_call.1} parent=11 // pred_fallthru
          _
        // Predicated region
        $region93: #{tpu_custom_call.1} parent=11 // pred_check
          %p738 = pneg %p532
        $region94: #{tpu_custom_call.1} parent=11 // pred_check_branch
          %740 = sbr.rel (%p738) target = $region96
        $region95: #{tpu_custom_call.1} parent=11 // pred_region
          _
        $region96: #{tpu_custom_call.1} parent=11 // pred_fallthru
          _
        // Predicated region
        $region97: #{tpu_custom_call.1} parent=11 // pred_check
          %p741 = pneg %p553
        $region98: #{tpu_custom_call.1} parent=11 // pred_check_branch
          %743 = sbr.rel (%p741) target = $region100
        $region99: #{tpu_custom_call.1} parent=11 // pred_region
          _
        $region100: #{tpu_custom_call.1} parent=11 // pred_fallthru
          _
        // Predicated region
        $region101: #{tpu_custom_call.1} parent=11 // pred_check
          %p744 = pneg %p574
        $region102: #{tpu_custom_call.1} parent=11 // pred_check_branch
          %746 = sbr.rel (%p744) target = $region104
        $region103: #{tpu_custom_call.1} parent=11 // pred_region
          _
        $region104: #{tpu_custom_call.1} parent=11 // pred_fallthru
          _
        // Predicated region
        $region105: #{tpu_custom_call.1} parent=11 // pred_check
          %p747 = pneg %p595
        $region106: #{tpu_custom_call.1} parent=11 // pred_check_branch
          %749 = sbr.rel (%p747) target = $region108
        $region107: #{tpu_custom_call.1} parent=11 // pred_region
          _
        $region108: #{tpu_custom_call.1} parent=11 // pred_fallthru
          _
        // Predicated region
        $region109: #{tpu_custom_call.1} parent=11 // pred_check
          %p750 = pneg %p616
        $region110: #{tpu_custom_call.1} parent=11 // pred_check_branch
          %752 = sbr.rel (%p750) target = $region112
        $region111: #{tpu_custom_call.1} parent=11 // pred_region
          _
        $region112: #{tpu_custom_call.1} parent=11 // pred_fallthru
          _
        // Predicated region
        $region113: #{tpu_custom_call.1} parent=11 // pred_check
          %p753 = pneg %p637
        $region114: #{tpu_custom_call.1} parent=11 // pred_check_branch
          %755 = sbr.rel (%p753) target = $region116
        $region115: #{tpu_custom_call.1} parent=11 // pred_region
          _
        $region116: #{tpu_custom_call.1} parent=11 // pred_fallthru
          _
      $region12: #{tpu_custom_call.1} parent=5 // pred_fallthru
        _
      %p756 = scmp.lt.s32.totalorder %s39, 2
      // Predicated region
      $region117: #{tpu_custom_call.1} parent=5 // pred_check
        %p757 = pneg %p756
      $region118: #{tpu_custom_call.1} parent=5 // pred_check_branch
        %759 = sbr.rel (%p757) target = $region120
      $region119: #{tpu_custom_call.1} parent=5 // pred_region
        // Predicated region
        $region121: #{tpu_custom_call.1} parent=119 // pred_check
          %p760 = pneg %p59
        $region122: #{tpu_custom_call.1} parent=119 // pred_check_branch
          %762 = sbr.rel (%p760) target = $region124
        $region123: #{tpu_custom_call.1} parent=119 // pred_region
          %s763 = smul.u32 32, %s39
          %p764 = scmp.lt.s32.totalorder %s763, 63
          %s765 = scalar_select %p764, %s763, 63
          %s766 = smul.addr %s765, 4
          %s767 = scalar_lea.vmem %s0, %s766
          %s768 = smul.u32 32, %s39
        $region124: #{tpu_custom_call.1} parent=119 // pred_fallthru
          _
        // Predicated region
        $region125: #{tpu_custom_call.1} parent=119 // pred_check
          %p769 = pneg %p85
        $region126: #{tpu_custom_call.1} parent=119 // pred_check_branch
          %771 = sbr.rel (%p769) target = $region128
        $region127: #{tpu_custom_call.1} parent=119 // pred_region
          %s772 = smul.u32 32, %s39
          %p773 = scmp.lt.s32.totalorder %s772, 63
          %s774 = scalar_select %p773, %s772, 63
          %s775 = smul.addr %s774, 4
          %s776 = scalar_lea.vmem %s1, %s775
          %s777 = smul.u32 32, %s39
        $region128: #{tpu_custom_call.1} parent=119 // pred_fallthru
          _
      $region120: #{tpu_custom_call.1} parent=5 // pred_fallthru
        _
      %p778 = scmp.le.s32.totalorder 1, %s39
      %p779 = scmp.lt.s32.totalorder %s39, 3
      %p780 = pnand %p778, %p779
      %p781 = pneg %p780
      // Predicated region
      $region129: #{tpu_custom_call.1} parent=5 // pred_check
        _
      $region130: #{tpu_custom_call.1} parent=5 // pred_check_branch
        %783 = sbr.rel (%p780) target = $region132
      $region131: #{tpu_custom_call.1} parent=5 // pred_region
        %s784 = ssub.s32 %s39, 1
        %s785 = smul.u32 32, %s44
        %p786 = scmp.lt.s32.totalorder %s785, 63
        %s787 = scalar_select %p786, %s785, 63
        %s788 = smul.addr %s787, 4
        %s789 = scalar_lea.vmem %s0, %s788
        %p790 = pneg %p65
        %p791 = pneg %p62
        %s792 = smul.u32 32, %s44
        %p793 = scmp.lt.s32.totalorder %s792, 63
        %s794 = scalar_select %p793, %s792, 63
        %s795 = smul.addr %s794, 4
        %s796 = scalar_lea.vmem %s1, %s795
        %p797 = pneg %p91
        %p798 = pneg %p88
        %p799 = pneg %p112
        %p800 = pneg %p109
        %p801 = pneg %p133
        %p802 = pneg %p130
        %p803 = pneg %p154
        %p804 = pneg %p151
        %p805 = pneg %p175
        %p806 = pneg %p172
        %p807 = pneg %p196
        %p808 = pneg %p193
        %p809 = pneg %p217
        %p810 = pneg %p214
        %p811 = pneg %p238
        %p812 = pneg %p235
        %p813 = pneg %p259
        %p814 = pneg %p256
        %p815 = pneg %p280
        %p816 = pneg %p277
        %p817 = pneg %p301
        %p818 = pneg %p298
        %p819 = pneg %p322
        %p820 = pneg %p319
        %p821 = pneg %p343
        %p822 = pneg %p340
        %p823 = pneg %p364
        %p824 = pneg %p361
        %p825 = pneg %p385
        %p826 = pneg %p382
        %p827 = pneg %p406
        %p828 = pneg %p403
        %p829 = pneg %p427
        %p830 = pneg %p424
        %p831 = pneg %p448
        %p832 = pneg %p445
        %p833 = pneg %p469
        %p834 = pneg %p466
        %p835 = pneg %p490
        %p836 = pneg %p487
        %p837 = pneg %p511
        %p838 = pneg %p508
        %p839 = pneg %p532
        %p840 = pneg %p529
        %p841 = pneg %p553
        %p842 = pneg %p550
        %p843 = pneg %p574
        %p844 = pneg %p571
        %p845 = pneg %p595
        %p846 = pneg %p592
        %p847 = pneg %p616
        %p848 = pneg %p613
        %p849 = pneg %p637
        %p850 = pneg %p634
        %p851 = pneg %p663
        %p852 = pneg %p660
        %s853 = sand.u32 %s650, 1
        %s854 = scalar_lea.sflag [#allocation4], %s853
        %s855 = sand.u32 %s650, 1
        %s856 = smul.addr %s855, 16
        %s857 = scalar_lea.vmem [#allocation3], %s856
        %s858 = smul.u32 32, %s44
        %p859 = scmp.lt.s32.totalorder %s858, 63
        %s860 = scalar_select %p859, %s858, 63
        %s861 = smul.addr %s860, 4
        %s862 = scalar_lea.vmem %s0, %s861
        %s863 = smul.u32 32, %s44
        %s864 = smul.u32 32, %s44
        %p865 = scmp.lt.s32.totalorder %s864, 63
        %s866 = scalar_select %p865, %s864, 63
        %s867 = smul.addr %s866, 4
        %s868 = scalar_lea.vmem %s1, %s867
        %s869 = smul.u32 32, %s44
        %s870 = smul.u32 2, %s44
        %v872 = vld [vmem:[%s862] sm:$0xf]
        %v873 = vld [vmem:[%s862 + $0x4] sm:$0xf]
        %v874 = vld [vmem:[%s862 + $0x8] sm:$0xf]
        %v875 = vld [vmem:[%s862 + $0xc] sm:$0xf]
        %v876 = vld [vmem:[%s862 + $0x10] sm:$0xf]
        %v877 = vld [vmem:[%s862 + $0x14] sm:$0xf]
        %v878 = vld [vmem:[%s862 + $0x18] sm:$0xf]
        %v879 = vld [vmem:[%s862 + $0x1c] sm:$0xf]
        %v880 = vld [vmem:[%s862 + $0x20] sm:$0xf]
        %v881 = vld [vmem:[%s862 + $0x24] sm:$0xf]
        %v882 = vld [vmem:[%s862 + $0x28] sm:$0xf]
        %v883 = vld [vmem:[%s862 + $0x2c] sm:$0xf]
        %v884 = vld [vmem:[%s862 + $0x30] sm:$0xf]
        %v885 = vld [vmem:[%s862 + $0x34] sm:$0xf]
        %v886 = vld [vmem:[%s862 + $0x38] sm:$0xf]
        %v887 = vld [vmem:[%s862 + $0x3c] sm:$0xf]
        %v888 = vld [vmem:[%s862 + $0x40] sm:$0xf]
        %v889 = vld [vmem:[%s862 + $0x44] sm:$0xf]
        %v890 = vld [vmem:[%s862 + $0x48] sm:$0xf]
        %v891 = vld [vmem:[%s862 + $0x4c] sm:$0xf]
        %v892 = vld [vmem:[%s862 + $0x50] sm:$0xf]
        %v893 = vld [vmem:[%s862 + $0x54] sm:$0xf]
        %v894 = vld [vmem:[%s862 + $0x58] sm:$0xf]
        %v895 = vld [vmem:[%s862 + $0x5c] sm:$0xf]
        %v896 = vld [vmem:[%s862 + $0x60] sm:$0xf]
        %v897 = vld [vmem:[%s862 + $0x64] sm:$0xf]
        %v898 = vld [vmem:[%s862 + $0x68] sm:$0xf]
        %v899 = vld [vmem:[%s862 + $0x6c] sm:$0xf]
        %v900 = vld [vmem:[%s862 + $0x70] sm:$0xf]
        %v901 = vld [vmem:[%s862 + $0x74] sm:$0xf]
        %v902 = vld [vmem:[%s862 + $0x78] sm:$0xf]
        %v903 = vld [vmem:[%s862 + $0x7c] sm:$0xf]
        %v904 = vld [vmem:[%s868] sm:$0xf]
        %v905 = vld [vmem:[%s868 + $0x4] sm:$0xf]
        %v906 = vld [vmem:[%s868 + $0x8] sm:$0xf]
        %v907 = vld [vmem:[%s868 + $0xc] sm:$0xf]
        %v908 = vld [vmem:[%s868 + $0x10] sm:$0xf]
        %v909 = vld [vmem:[%s868 + $0x14] sm:$0xf]
        %v910 = vld [vmem:[%s868 + $0x18] sm:$0xf]
        %v911 = vld [vmem:[%s868 + $0x1c] sm:$0xf]
        %v912 = vld [vmem:[%s868 + $0x20] sm:$0xf]
        %v913 = vld [vmem:[%s868 + $0x24] sm:$0xf]
        %v914 = vld [vmem:[%s868 + $0x28] sm:$0xf]
        %v915 = vld [vmem:[%s868 + $0x2c] sm:$0xf]
        %v916 = vld [vmem:[%s868 + $0x30] sm:$0xf]
        %v917 = vld [vmem:[%s868 + $0x34] sm:$0xf]
        %v918 = vld [vmem:[%s868 + $0x38] sm:$0xf]
        %v919 = vld [vmem:[%s868 + $0x3c] sm:$0xf]
        %v920 = vld [vmem:[%s868 + $0x40] sm:$0xf]
        %v921 = vld [vmem:[%s868 + $0x44] sm:$0xf]
        %v922 = vld [vmem:[%s868 + $0x48] sm:$0xf]
        %v923 = vld [vmem:[%s868 + $0x4c] sm:$0xf]
        %v924 = vld [vmem:[%s868 + $0x50] sm:$0xf]
        %v925 = vld [vmem:[%s868 + $0x54] sm:$0xf]
        %v926 = vld [vmem:[%s868 + $0x58] sm:$0xf]
        %v927 = vld [vmem:[%s868 + $0x5c] sm:$0xf]
        %v928 = vld [vmem:[%s868 + $0x60] sm:$0xf]
        %v929 = vld [vmem:[%s868 + $0x64] sm:$0xf]
        %v930 = vld [vmem:[%s868 + $0x68] sm:$0xf]
        %v931 = vld [vmem:[%s868 + $0x6c] sm:$0xf]
        %v932 = vld [vmem:[%s868 + $0x70] sm:$0xf]
        %v933 = vld [vmem:[%s868 + $0x74] sm:$0xf]
        %v934 = vld [vmem:[%s868 + $0x78] sm:$0xf]
        %v935 = vld [vmem:[%s868 + $0x7c] sm:$0xf]
        %v936 = vld [vmem:[%s2] sm:$0xf]
        %v937 = vld [vmem:[%s2 + $0x4] sm:$0xf]
        %v938 = vld [vmem:[%s2 + $0x8] sm:$0xf]
        %v939 = vld [vmem:[%s2 + $0xc] sm:$0xf]
        %v940 = vld [vmem:[%s2 + $0x10] sm:$0xf]
        %v941 = vld [vmem:[%s2 + $0x14] sm:$0xf]
        %v942 = vld [vmem:[%s2 + $0x18] sm:$0xf]
        %v943 = vld [vmem:[%s2 + $0x1c] sm:$0xf]
        %v944 = vld [vmem:[%s3] sm:$0x1]
        %v946 = vlaneseq
        %v947 = vshrl.u32 %v946, 7
        %v948 = vsub.s32 0, %v947
        %v949 = vrot.slane %v944, %v948
        %v983 = vunpack.c.l.b16 %v872
        %v984 = vunpack.c.l.b16 %v873
        %v985 = vunpack.c.l.b16 %v874
        %v986 = vunpack.c.l.b16 %v875
        %v987 = vunpack.c.l.b16 %v876
        %v988 = vunpack.c.l.b16 %v877
        %v989 = vunpack.c.l.b16 %v878
        %v990 = vunpack.c.l.b16 %v879
        %v991 = vunpack.c.l.b16 %v880
        %v992 = vunpack.c.l.b16 %v881
        %v993 = vunpack.c.l.b16 %v882
        %v994 = vunpack.c.l.b16 %v883
        %v995 = vunpack.c.l.b16 %v884
        %v996 = vunpack.c.l.b16 %v885
        %v997 = vunpack.c.l.b16 %v886
        %v998 = vunpack.c.l.b16 %v887
        %v999 = vunpack.c.l.b16 %v888
        %v1000 = vunpack.c.l.b16 %v889
        %v1001 = vunpack.c.l.b16 %v890
        %v1002 = vunpack.c.l.b16 %v891
        %v1003 = vunpack.c.l.b16 %v892
        %v1004 = vunpack.c.l.b16 %v893
        %v1005 = vunpack.c.l.b16 %v894
        %v1006 = vunpack.c.l.b16 %v895
        %v1007 = vunpack.c.l.b16 %v896
        %v1008 = vunpack.c.l.b16 %v897
        %v1009 = vunpack.c.l.b16 %v898
        %v1010 = vunpack.c.l.b16 %v899
        %v1011 = vunpack.c.l.b16 %v900
        %v1012 = vunpack.c.l.b16 %v901
        %v1013 = vunpack.c.l.b16 %v902
        %v1014 = vunpack.c.l.b16 %v903
        %v1015 = vpack.c.b16 %v984, %v983
        %v1016 = vpack.c.b16 %v986, %v985
        %v1017 = vpack.c.b16 %v988, %v987
        %v1018 = vpack.c.b16 %v990, %v989
        %v1019 = vpack.c.b16 %v992, %v991
        %v1020 = vpack.c.b16 %v994, %v993
        %v1021 = vpack.c.b16 %v996, %v995
        %v1022 = vpack.c.b16 %v998, %v997
        %v1023 = vpack.c.b16 %v1000, %v999
        %v1024 = vpack.c.b16 %v1002, %v1001
        %v1025 = vpack.c.b16 %v1004, %v1003
        %v1026 = vpack.c.b16 %v1006, %v1005
        %v1027 = vpack.c.b16 %v1008, %v1007
        %v1028 = vpack.c.b16 %v1010, %v1009
        %v1029 = vpack.c.b16 %v1012, %v1011
        %v1030 = vpack.c.b16 %v1014, %v1013
        %v1039 = vunpack.c.l.b16 %v936
        %v1040 = vunpack.c.l.b16 %v937
        %v1041 = vunpack.c.l.b16 %v938
        %v1042 = vunpack.c.l.b16 %v939
        %v1043 = vunpack.c.l.b16 %v940
        %v1044 = vunpack.c.l.b16 %v941
        %v1045 = vunpack.c.l.b16 %v942
        %v1046 = vunpack.c.l.b16 %v943
        %v1047 = vpack.c.b16 %v1040, %v1039
        %v1048 = vpack.c.b16 %v1042, %v1041
        %v1049 = vpack.c.b16 %v1044, %v1043
        %v1050 = vpack.c.b16 %v1046, %v1045
        %vm1054 = vcmask 515072
        %v1056 = vsel %vm1054, %v1015, 0
        %v1059 = vsel %vm1054, %v1016, 0
        %v1062 = vsel %vm1054, %v1017, 0
        %v1065 = vsel %vm1054, %v1018, 0
        %v1068 = vsel %vm1054, %v1019, 0
        %v1071 = vsel %vm1054, %v1020, 0
        %v1074 = vsel %vm1054, %v1021, 0
        %v1077 = vsel %vm1054, %v1022, 0
        %v1080 = vsel %vm1054, %v1023, 0
        %v1083 = vsel %vm1054, %v1024, 0
        %v1086 = vsel %vm1054, %v1025, 0
        %v1089 = vsel %vm1054, %v1026, 0
        %v1092 = vsel %vm1054, %v1027, 0
        %v1095 = vsel %vm1054, %v1028, 0
        %v1098 = vsel %vm1054, %v1029, 0
        %v1101 = vsel %vm1054, %v1030, 0
        %vm1103 = vcmask 1046528
        %vm1104 = vcmask 1047552
        %v1105 = vsel %vm1103, 4294967295, 65535
        %v1106 = vsel %vm1104, %v1105, 0
        %v1108 = vand.u32 %v1050, %v1106
        %1110 = vmatprep.subr.bf16.mxu0 0
        %1111 = vmatpush1.bf16.msra.mxu0 0
        %1112 = vmatprep.subr.bf16.mxu0 0
        %1113 = vmatpush1.bf16.msra.mxu0 0
        %1114 = vmatprep.subr.bf16.mxu0 0
        %1115 = vmatpush1.bf16.msra.mxu0 0
        %1116 = vmatprep.subr.bf16.mxu0 0
        %1117 = vmatpush1.bf16.msra.mxu0 0
        %1118 = vmatprep.subr.bf16.mxu0 0
        %1119 = vmatpush1.bf16.msra.mxu0 %v1108
        %1120 = vmatprep.subr.bf16.mxu0 0
        %1121 = vmatpush1.bf16.msra.mxu0 %v1049
        %1122 = vmatprep.subr.bf16.mxu0 0
        %1123 = vmatpush1.bf16.msra.mxu0 %v1048
        %1124 = vmatprep.subr.bf16.mxu0 0
        %1125 = vmatpush1.bf16.msra.mxu0 %v1047
        %1126 = vmatprep.subr.bf16.mxu0 0
        %1127 = vmatpush2.bf16.msra.mxu0 0
        %1128 = vmatprep.subr.bf16.mxu0 0
        %1129 = vmatpush2.bf16.msra.mxu0 0
        %1130 = vmatprep.subr.bf16.mxu0 0
        %1131 = vmatpush2.bf16.msra.mxu0 0
        %1132 = vmatprep.subr.bf16.mxu0 0
        %1133 = vmatpush2.bf16.msra.mxu0 0
        %1134 = vmatprep.subr.bf16.mxu0 0
        %1135 = vmatpush2.bf16.msra.mxu0 0
        %1136 = vmatprep.subr.bf16.mxu0 0
        %1137 = vmatpush2.bf16.msra.mxu0 0
        %1138 = vmatprep.subr.bf16.mxu0 0
        %1139 = vmatpush2.bf16.msra.mxu0 0
        %1140 = vmatprep.subr.bf16.mxu0 0
        %1141 = vmatpush2.bf16.msra.mxu0 0
        %1142 = vmatprep.mubr.bf16.mxu0 0
        %1143 = vmatmul.mubr.bf16.gmra.mxu0 %v1056
        %v1144 = vpop.f32.mrf.mxu0
        %v1145 = vadd.f32 %v949, %v1144
        %v1146 = vpop.f32.mrf.mxu0
        %v1147 = vpop.f32.mrf.mxu0
        %v1148 = vadd.f32 %v949, %v1147
        %v1149 = vpop.f32.mrf.mxu0
        %1150 = vmatprep.mubr.bf16.mxu0 0
        %1151 = vmatmul.mubr.bf16.gmra.mxu0 %v1059
        %v1152 = vpop.f32.mrf.mxu0
        %v1153 = vadd.f32 %v949, %v1152
        %v1154 = vpop.f32.mrf.mxu0
        %v1155 = vpop.f32.mrf.mxu0
        %v1156 = vadd.f32 %v949, %v1155
        %v1157 = vpop.f32.mrf.mxu0
        %1158 = vmatprep.mubr.bf16.mxu0 0
        %1159 = vmatmul.mubr.bf16.gmra.mxu0 %v1062
        %v1160 = vpop.f32.mrf.mxu0
        %v1161 = vadd.f32 %v949, %v1160
        %v1162 = vpop.f32.mrf.mxu0
        %v1163 = vpop.f32.mrf.mxu0
        %v1164 = vadd.f32 %v949, %v1163
        %v1165 = vpop.f32.mrf.mxu0
        %1166 = vmatprep.mubr.bf16.mxu0 0
        %1167 = vmatmul.mubr.bf16.gmra.mxu0 %v1065
        %v1168 = vpop.f32.mrf.mxu0
        %v1169 = vadd.f32 %v949, %v1168
        %v1170 = vpop.f32.mrf.mxu0
        %v1171 = vpop.f32.mrf.mxu0
        %v1172 = vadd.f32 %v949, %v1171
        %v1173 = vpop.f32.mrf.mxu0
        %1174 = vmatprep.mubr.bf16.mxu0 0
        %1175 = vmatmul.mubr.bf16.gmra.mxu0 %v1068
        %v1176 = vpop.f32.mrf.mxu0
        %v1177 = vadd.f32 %v949, %v1176
        %v1178 = vpop.f32.mrf.mxu0
        %v1179 = vpop.f32.mrf.mxu0
        %v1180 = vadd.f32 %v949, %v1179
        %v1181 = vpop.f32.mrf.mxu0
        %1182 = vmatprep.mubr.bf16.mxu0 0
        %1183 = vmatmul.mubr.bf16.gmra.mxu0 %v1071
        %v1184 = vpop.f32.mrf.mxu0
        %v1185 = vadd.f32 %v949, %v1184
        %v1186 = vpop.f32.mrf.mxu0
        %v1187 = vpop.f32.mrf.mxu0
        %v1188 = vadd.f32 %v949, %v1187
        %v1189 = vpop.f32.mrf.mxu0
        %1190 = vmatprep.mubr.bf16.mxu0 0
        %1191 = vmatmul.mubr.bf16.gmra.mxu0 %v1074
        %v1192 = vpop.f32.mrf.mxu0
        %v1193 = vadd.f32 %v949, %v1192
        %v1194 = vpop.f32.mrf.mxu0
        %v1195 = vpop.f32.mrf.mxu0
        %v1196 = vadd.f32 %v949, %v1195
        %v1197 = vpop.f32.mrf.mxu0
        %1198 = vmatprep.mubr.bf16.mxu0 0
        %1199 = vmatmul.mubr.bf16.gmra.mxu0 %v1077
        %v1200 = vpop.f32.mrf.mxu0
        %v1201 = vadd.f32 %v949, %v1200
        %v1202 = vpop.f32.mrf.mxu0
        %v1203 = vpop.f32.mrf.mxu0
        %v1204 = vadd.f32 %v949, %v1203
        %v1205 = vpop.f32.mrf.mxu0
        %1206 = vmatprep.mubr.bf16.mxu0 0
        %1207 = vmatmul.mubr.bf16.gmra.mxu0 %v1080
        %v1208 = vpop.f32.mrf.mxu0
        %v1209 = vadd.f32 %v949, %v1208
        %v1210 = vpop.f32.mrf.mxu0
        %v1211 = vpop.f32.mrf.mxu0
        %v1212 = vadd.f32 %v949, %v1211
        %v1213 = vpop.f32.mrf.mxu0
        %1214 = vmatprep.mubr.bf16.mxu0 0
        %1215 = vmatmul.mubr.bf16.gmra.mxu0 %v1083
        %v1216 = vpop.f32.mrf.mxu0
        %v1217 = vadd.f32 %v949, %v1216
        %v1218 = vpop.f32.mrf.mxu0
        %v1219 = vpop.f32.mrf.mxu0
        %v1220 = vadd.f32 %v949, %v1219
        %v1221 = vpop.f32.mrf.mxu0
        %1222 = vmatprep.mubr.bf16.mxu0 0
        %1223 = vmatmul.mubr.bf16.gmra.mxu0 %v1086
        %v1224 = vpop.f32.mrf.mxu0
        %v1225 = vadd.f32 %v949, %v1224
        %v1226 = vpop.f32.mrf.mxu0
        %v1227 = vpop.f32.mrf.mxu0
        %v1228 = vadd.f32 %v949, %v1227
        %v1229 = vpop.f32.mrf.mxu0
        %1230 = vmatprep.mubr.bf16.mxu0 0
        %1231 = vmatmul.mubr.bf16.gmra.mxu0 %v1089
        %v1232 = vpop.f32.mrf.mxu0
        %v1233 = vadd.f32 %v949, %v1232
        %v1234 = vpop.f32.mrf.mxu0
        %v1235 = vpop.f32.mrf.mxu0
        %v1236 = vadd.f32 %v949, %v1235
        %v1237 = vpop.f32.mrf.mxu0
        %1238 = vmatprep.mubr.bf16.mxu0 0
        %1239 = vmatmul.mubr.bf16.gmra.mxu0 %v1092
        %v1240 = vpop.f32.mrf.mxu0
        %v1241 = vadd.f32 %v949, %v1240
        %v1242 = vpop.f32.mrf.mxu0
        %v1243 = vpop.f32.mrf.mxu0
        %v1244 = vadd.f32 %v949, %v1243
        %v1245 = vpop.f32.mrf.mxu0
        %1246 = vmatprep.mubr.bf16.mxu0 0
        %1247 = vmatmul.mubr.bf16.gmra.mxu0 %v1095
        %v1248 = vpop.f32.mrf.mxu0
        %v1249 = vadd.f32 %v949, %v1248
        %v1250 = vpop.f32.mrf.mxu0
        %v1251 = vpop.f32.mrf.mxu0
        %v1252 = vadd.f32 %v949, %v1251
        %v1253 = vpop.f32.mrf.mxu0
        %1254 = vmatprep.mubr.bf16.mxu0 0
        %1255 = vmatmul.mubr.bf16.gmra.mxu0 %v1098
        %v1256 = vpop.f32.mrf.mxu0
        %v1257 = vadd.f32 %v949, %v1256
        %v1258 = vpop.f32.mrf.mxu0
        %v1259 = vpop.f32.mrf.mxu0
        %v1260 = vadd.f32 %v949, %v1259
        %v1261 = vpop.f32.mrf.mxu0
        %1262 = vmatprep.mubr.bf16.mxu0 0
        %1263 = vmatmul.mubr.bf16.gmra.mxu0 %v1101
        %v1264 = vpop.f32.mrf.mxu0
        %v1265 = vadd.f32 %v949, %v1264
        %v1266 = vpop.f32.mrf.mxu0
        %v1267 = vpop.f32.mrf.mxu0
        %v1268 = vadd.f32 %v949, %v1267
        %v1269 = vpop.f32.mrf.mxu0
        %1270 = vdwg.mxu0
        %v1271 = vmax.f32 %v1145, 0.0
        %v1272 = vmax.f32 %v1148, 0.0
        %v1273 = vmax.f32 %v1153, 0.0
        %v1274 = vmax.f32 %v1156, 0.0
        %v1275 = vmax.f32 %v1161, 0.0
        %v1276 = vmax.f32 %v1164, 0.0
        %v1277 = vmax.f32 %v1169, 0.0
        %v1278 = vmax.f32 %v1172, 0.0
        %v1279 = vmax.f32 %v1177, 0.0
        %v1280 = vmax.f32 %v1180, 0.0
        %v1281 = vmax.f32 %v1185, 0.0
        %v1282 = vmax.f32 %v1188, 0.0
        %v1283 = vmax.f32 %v1193, 0.0
        %v1284 = vmax.f32 %v1196, 0.0
        %v1285 = vmax.f32 %v1201, 0.0
        %v1286 = vmax.f32 %v1204, 0.0
        %v1287 = vmax.f32 %v1209, 0.0
        %v1288 = vmax.f32 %v1212, 0.0
        %v1289 = vmax.f32 %v1217, 0.0
        %v1290 = vmax.f32 %v1220, 0.0
        %v1291 = vmax.f32 %v1225, 0.0
        %v1292 = vmax.f32 %v1228, 0.0
        %v1293 = vmax.f32 %v1233, 0.0
        %v1294 = vmax.f32 %v1236, 0.0
        %v1295 = vmax.f32 %v1241, 0.0
        %v1296 = vmax.f32 %v1244, 0.0
        %v1297 = vmax.f32 %v1249, 0.0
        %v1298 = vmax.f32 %v1252, 0.0
        %v1299 = vmax.f32 %v1257, 0.0
        %v1300 = vmax.f32 %v1260, 0.0
        %v1301 = vmax.f32 %v1265, 0.0
        %v1302 = vmax.f32 %v1268, 0.0
        %v1303 = vld [vmem:[%s4] sm:$0xf]
        %v1304 = vld [vmem:[%s4 + $0x4] sm:$0xf]
        %v1305 = vld [vmem:[%s4 + $0x8] sm:$0xf]
        %v1306 = vld [vmem:[%s4 + $0xc] sm:$0xf]
        %v1307 = vld [vmem:[%s4 + $0x10] sm:$0xf]
        %v1308 = vld [vmem:[%s4 + $0x14] sm:$0xf]
        %v1309 = vld [vmem:[%s4 + $0x18] sm:$0xf]
        %v1310 = vld [vmem:[%s4 + $0x1c] sm:$0xf]
        %v1311 = vld [vmem:[%s5] sm:$0x1]
        %v1312 = vpack.c.bf16 %v1272, %v1271
        %v1313 = vpack.c.bf16 %v1274, %v1273
        %v1314 = vpack.c.bf16 %v1276, %v1275
        %v1315 = vpack.c.bf16 %v1278, %v1277
        %v1316 = vpack.c.bf16 %v1280, %v1279
        %v1317 = vpack.c.bf16 %v1282, %v1281
        %v1318 = vpack.c.bf16 %v1284, %v1283
        %v1319 = vpack.c.bf16 %v1286, %v1285
        %v1320 = vpack.c.bf16 %v1288, %v1287
        %v1321 = vpack.c.bf16 %v1290, %v1289
        %v1322 = vpack.c.bf16 %v1292, %v1291
        %v1323 = vpack.c.bf16 %v1294, %v1293
        %v1324 = vpack.c.bf16 %v1296, %v1295
        %v1325 = vpack.c.bf16 %v1298, %v1297
        %v1326 = vpack.c.bf16 %v1300, %v1299
        %v1327 = vpack.c.bf16 %v1302, %v1301
        %v1329 = vlaneseq
        %v1330 = vshrl.u32 %v1329, 7
        %v1331 = vsub.s32 0, %v1330
        %v1332 = vrot.slane %v1311, %v1331
        %v1342 = vunpack.c.l.b16 %v1303
        %v1343 = vunpack.c.l.b16 %v1304
        %v1344 = vunpack.c.l.b16 %v1305
        %v1345 = vunpack.c.l.b16 %v1306
        %v1346 = vunpack.c.l.b16 %v1307
        %v1347 = vunpack.c.l.b16 %v1308
        %v1348 = vunpack.c.l.b16 %v1309
        %v1349 = vunpack.c.l.b16 %v1310
        %v1350 = vpack.c.b16 %v1343, %v1342
        %v1351 = vpack.c.b16 %v1345, %v1344
        %v1352 = vpack.c.b16 %v1347, %v1346
        %v1353 = vpack.c.b16 %v1349, %v1348
        %vm1358 = vcmask 523264
        %v1360 = vsel %vm1358, %v1312, 0
        %v1363 = vsel %vm1358, %v1313, 0
        %v1366 = vsel %vm1358, %v1314, 0
        %v1369 = vsel %vm1358, %v1315, 0
        %v1372 = vsel %vm1358, %v1316, 0
        %v1375 = vsel %vm1358, %v1317, 0
        %v1378 = vsel %vm1358, %v1318, 0
        %v1381 = vsel %vm1358, %v1319, 0
        %v1384 = vsel %vm1358, %v1320, 0
        %v1387 = vsel %vm1358, %v1321, 0
        %v1390 = vsel %vm1358, %v1322, 0
        %v1393 = vsel %vm1358, %v1323, 0
        %v1396 = vsel %vm1358, %v1324, 0
        %v1399 = vsel %vm1358, %v1325, 0
        %v1402 = vsel %vm1358, %v1326, 0
        %v1405 = vsel %vm1358, %v1327, 0
        %1407 = vmatprep.subr.bf16.mxu0 0
        %1408 = vmatpush1.bf16.msra.mxu0 0
        %1409 = vmatprep.subr.bf16.mxu0 0
        %1410 = vmatpush1.bf16.msra.mxu0 0
        %1411 = vmatprep.subr.bf16.mxu0 0
        %1412 = vmatpush1.bf16.msra.mxu0 0
        %1413 = vmatprep.subr.bf16.mxu0 0
        %1414 = vmatpush1.bf16.msra.mxu0 0
        %1415 = vmatprep.subr.bf16.mxu0 0
        %1416 = vmatpush1.bf16.msra.mxu0 %v1353
        %1417 = vmatprep.subr.bf16.mxu0 0
        %1418 = vmatpush1.bf16.msra.mxu0 %v1352
        %1419 = vmatprep.subr.bf16.mxu0 0
        %1420 = vmatpush1.bf16.msra.mxu0 %v1351
        %1421 = vmatprep.subr.bf16.mxu0 0
        %1422 = vmatpush1.bf16.msra.mxu0 %v1350
        %1423 = vmatprep.subr.bf16.mxu0 0
        %1424 = vmatpush2.bf16.msra.mxu0 0
        %1425 = vmatprep.subr.bf16.mxu0 0
        %1426 = vmatpush2.bf16.msra.mxu0 0
        %1427 = vmatprep.subr.bf16.mxu0 0
        %1428 = vmatpush2.bf16.msra.mxu0 0
        %1429 = vmatprep.subr.bf16.mxu0 0
        %1430 = vmatpush2.bf16.msra.mxu0 0
        %1431 = vmatprep.subr.bf16.mxu0 0
        %1432 = vmatpush2.bf16.msra.mxu0 0
        %1433 = vmatprep.subr.bf16.mxu0 0
        %1434 = vmatpush2.bf16.msra.mxu0 0
        %1435 = vmatprep.subr.bf16.mxu0 0
        %1436 = vmatpush2.bf16.msra.mxu0 0
        %1437 = vmatprep.subr.bf16.mxu0 0
        %1438 = vmatpush2.bf16.msra.mxu0 0
        %1439 = vmatprep.mubr.bf16.mxu0 0
        %1440 = vmatmul.mubr.bf16.gmra.mxu0 %v1360
        %v1441 = vpop.f32.mrf.mxu0
        %v1442 = vadd.f32 %v1332, %v1441
        %v1443 = vpop.f32.mrf.mxu0
        %v1444 = vpop.f32.mrf.mxu0
        %v1445 = vadd.f32 %v1332, %v1444
        %v1446 = vpop.f32.mrf.mxu0
        %1447 = vmatprep.mubr.bf16.mxu0 0
        %1448 = vmatmul.mubr.bf16.gmra.mxu0 %v1363
        %v1449 = vpop.f32.mrf.mxu0
        %v1450 = vadd.f32 %v1332, %v1449
        %v1451 = vpop.f32.mrf.mxu0
        %v1452 = vpop.f32.mrf.mxu0
        %v1453 = vadd.f32 %v1332, %v1452
        %v1454 = vpop.f32.mrf.mxu0
        %1455 = vmatprep.mubr.bf16.mxu0 0
        %1456 = vmatmul.mubr.bf16.gmra.mxu0 %v1366
        %v1457 = vpop.f32.mrf.mxu0
        %v1458 = vadd.f32 %v1332, %v1457
        %v1459 = vpop.f32.mrf.mxu0
        %v1460 = vpop.f32.mrf.mxu0
        %v1461 = vadd.f32 %v1332, %v1460
        %v1462 = vpop.f32.mrf.mxu0
        %1463 = vmatprep.mubr.bf16.mxu0 0
        %1464 = vmatmul.mubr.bf16.gmra.mxu0 %v1369
        %v1465 = vpop.f32.mrf.mxu0
        %v1466 = vadd.f32 %v1332, %v1465
        %v1467 = vpop.f32.mrf.mxu0
        %v1468 = vpop.f32.mrf.mxu0
        %v1469 = vadd.f32 %v1332, %v1468
        %v1470 = vpop.f32.mrf.mxu0
        %1471 = vmatprep.mubr.bf16.mxu0 0
        %1472 = vmatmul.mubr.bf16.gmra.mxu0 %v1372
        %v1473 = vpop.f32.mrf.mxu0
        %v1474 = vadd.f32 %v1332, %v1473
        %v1475 = vpop.f32.mrf.mxu0
        %v1476 = vpop.f32.mrf.mxu0
        %v1477 = vadd.f32 %v1332, %v1476
        %v1478 = vpop.f32.mrf.mxu0
        %1479 = vmatprep.mubr.bf16.mxu0 0
        %1480 = vmatmul.mubr.bf16.gmra.mxu0 %v1375
        %v1481 = vpop.f32.mrf.mxu0
        %v1482 = vadd.f32 %v1332, %v1481
        %v1483 = vpop.f32.mrf.mxu0
        %v1484 = vpop.f32.mrf.mxu0
        %v1485 = vadd.f32 %v1332, %v1484
        %v1486 = vpop.f32.mrf.mxu0
        %1487 = vmatprep.mubr.bf16.mxu0 0
        %1488 = vmatmul.mubr.bf16.gmra.mxu0 %v1378
        %v1489 = vpop.f32.mrf.mxu0
        %v1490 = vadd.f32 %v1332, %v1489
        %v1491 = vpop.f32.mrf.mxu0
        %v1492 = vpop.f32.mrf.mxu0
        %v1493 = vadd.f32 %v1332, %v1492
        %v1494 = vpop.f32.mrf.mxu0
        %1495 = vmatprep.mubr.bf16.mxu0 0
        %1496 = vmatmul.mubr.bf16.gmra.mxu0 %v1381
        %v1497 = vpop.f32.mrf.mxu0
        %v1498 = vadd.f32 %v1332, %v1497
        %v1499 = vpop.f32.mrf.mxu0
        %v1500 = vpop.f32.mrf.mxu0
        %v1501 = vadd.f32 %v1332, %v1500
        %v1502 = vpop.f32.mrf.mxu0
        %1503 = vmatprep.mubr.bf16.mxu0 0
        %1504 = vmatmul.mubr.bf16.gmra.mxu0 %v1384
        %v1505 = vpop.f32.mrf.mxu0
        %v1506 = vadd.f32 %v1332, %v1505
        %v1507 = vpop.f32.mrf.mxu0
        %v1508 = vpop.f32.mrf.mxu0
        %v1509 = vadd.f32 %v1332, %v1508
        %v1510 = vpop.f32.mrf.mxu0
        %1511 = vmatprep.mubr.bf16.mxu0 0
        %1512 = vmatmul.mubr.bf16.gmra.mxu0 %v1387
        %v1513 = vpop.f32.mrf.mxu0
        %v1514 = vadd.f32 %v1332, %v1513
        %v1515 = vpop.f32.mrf.mxu0
        %v1516 = vpop.f32.mrf.mxu0
        %v1517 = vadd.f32 %v1332, %v1516
        %v1518 = vpop.f32.mrf.mxu0
        %1519 = vmatprep.mubr.bf16.mxu0 0
        %1520 = vmatmul.mubr.bf16.gmra.mxu0 %v1390
        %v1521 = vpop.f32.mrf.mxu0
        %v1522 = vadd.f32 %v1332, %v1521
        %v1523 = vpop.f32.mrf.mxu0
        %v1524 = vpop.f32.mrf.mxu0
        %v1525 = vadd.f32 %v1332, %v1524
        %v1526 = vpop.f32.mrf.mxu0
        %1527 = vmatprep.mubr.bf16.mxu0 0
        %1528 = vmatmul.mubr.bf16.gmra.mxu0 %v1393
        %v1529 = vpop.f32.mrf.mxu0
        %v1530 = vadd.f32 %v1332, %v1529
        %v1531 = vpop.f32.mrf.mxu0
        %v1532 = vpop.f32.mrf.mxu0
        %v1533 = vadd.f32 %v1332, %v1532
        %v1534 = vpop.f32.mrf.mxu0
        %1535 = vmatprep.mubr.bf16.mxu0 0
        %1536 = vmatmul.mubr.bf16.gmra.mxu0 %v1396
        %v1537 = vpop.f32.mrf.mxu0
        %v1538 = vadd.f32 %v1332, %v1537
        %v1539 = vpop.f32.mrf.mxu0
        %v1540 = vpop.f32.mrf.mxu0
        %v1541 = vadd.f32 %v1332, %v1540
        %v1542 = vpop.f32.mrf.mxu0
        %1543 = vmatprep.mubr.bf16.mxu0 0
        %1544 = vmatmul.mubr.bf16.gmra.mxu0 %v1399
        %v1545 = vpop.f32.mrf.mxu0
        %v1546 = vadd.f32 %v1332, %v1545
        %v1547 = vpop.f32.mrf.mxu0
        %v1548 = vpop.f32.mrf.mxu0
        %v1549 = vadd.f32 %v1332, %v1548
        %v1550 = vpop.f32.mrf.mxu0
        %1551 = vmatprep.mubr.bf16.mxu0 0
        %1552 = vmatmul.mubr.bf16.gmra.mxu0 %v1402
        %v1553 = vpop.f32.mrf.mxu0
        %v1554 = vadd.f32 %v1332, %v1553
        %v1555 = vpop.f32.mrf.mxu0
        %v1556 = vpop.f32.mrf.mxu0
        %v1557 = vadd.f32 %v1332, %v1556
        %v1558 = vpop.f32.mrf.mxu0
        %1559 = vmatprep.mubr.bf16.mxu0 0
        %1560 = vmatmul.mubr.bf16.gmra.mxu0 %v1405
        %v1561 = vpop.f32.mrf.mxu0
        %v1562 = vadd.f32 %v1332, %v1561
        %v1563 = vpop.f32.mrf.mxu0
        %v1564 = vpop.f32.mrf.mxu0
        %v1565 = vadd.f32 %v1332, %v1564
        %v1566 = vpop.f32.mrf.mxu0
        %1567 = vdwg.mxu0
        %v1568 = vmax.f32 %v1442, 0.0
        %v1569 = vmax.f32 %v1445, 0.0
        %v1570 = vmax.f32 %v1450, 0.0
        %v1571 = vmax.f32 %v1453, 0.0
        %v1572 = vmax.f32 %v1458, 0.0
        %v1573 = vmax.f32 %v1461, 0.0
        %v1574 = vmax.f32 %v1466, 0.0
        %v1575 = vmax.f32 %v1469, 0.0
        %v1576 = vmax.f32 %v1474, 0.0
        %v1577 = vmax.f32 %v1477, 0.0
        %v1578 = vmax.f32 %v1482, 0.0
        %v1579 = vmax.f32 %v1485, 0.0
        %v1580 = vmax.f32 %v1490, 0.0
        %v1581 = vmax.f32 %v1493, 0.0
        %v1582 = vmax.f32 %v1498, 0.0
        %v1583 = vmax.f32 %v1501, 0.0
        %v1584 = vmax.f32 %v1506, 0.0
        %v1585 = vmax.f32 %v1509, 0.0
        %v1586 = vmax.f32 %v1514, 0.0
        %v1587 = vmax.f32 %v1517, 0.0
        %v1588 = vmax.f32 %v1522, 0.0
        %v1589 = vmax.f32 %v1525, 0.0
        %v1590 = vmax.f32 %v1530, 0.0
        %v1591 = vmax.f32 %v1533, 0.0
        %v1592 = vmax.f32 %v1538, 0.0
        %v1593 = vmax.f32 %v1541, 0.0
        %v1594 = vmax.f32 %v1546, 0.0
        %v1595 = vmax.f32 %v1549, 0.0
        %v1596 = vmax.f32 %v1554, 0.0
        %v1597 = vmax.f32 %v1557, 0.0
        %v1598 = vmax.f32 %v1562, 0.0
        %v1599 = vmax.f32 %v1565, 0.0
        %v1600 = vld [vmem:[%s6] sm:$0xf]
        %v1601 = vld [vmem:[%s6 + $0x4] sm:$0xf]
        %v1602 = vld [vmem:[%s6 + $0x8] sm:$0xf]
        %v1603 = vld [vmem:[%s6 + $0xc] sm:$0xf]
        %v1604 = vld [vmem:[%s6 + $0x10] sm:$0xf]
        %v1605 = vld [vmem:[%s6 + $0x14] sm:$0xf]
        %v1606 = vld [vmem:[%s6 + $0x18] sm:$0xf]
        %v1607 = vld [vmem:[%s6 + $0x1c] sm:$0xf]
        %v1608 = vld [vmem:[%s7] sm:$0x1]
        %v1609 = vpack.c.bf16 %v1569, %v1568
        %v1610 = vpack.c.bf16 %v1571, %v1570
        %v1611 = vpack.c.bf16 %v1573, %v1572
        %v1612 = vpack.c.bf16 %v1575, %v1574
        %v1613 = vpack.c.bf16 %v1577, %v1576
        %v1614 = vpack.c.bf16 %v1579, %v1578
        %v1615 = vpack.c.bf16 %v1581, %v1580
        %v1616 = vpack.c.bf16 %v1583, %v1582
        %v1617 = vpack.c.bf16 %v1585, %v1584
        %v1618 = vpack.c.bf16 %v1587, %v1586
        %v1619 = vpack.c.bf16 %v1589, %v1588
        %v1620 = vpack.c.bf16 %v1591, %v1590
        %v1621 = vpack.c.bf16 %v1593, %v1592
        %v1622 = vpack.c.bf16 %v1595, %v1594
        %v1623 = vpack.c.bf16 %v1597, %v1596
        %v1624 = vpack.c.bf16 %v1599, %v1598
        %v1626 = vlaneseq
        %v1627 = vshrl.u32 %v1626, 7
        %v1628 = vsub.s32 0, %v1627
        %v1629 = vrot.slane %v1608, %v1628
        %v1639 = vunpack.c.l.b16 %v1600
        %v1640 = vunpack.c.l.b16 %v1601
        %v1641 = vunpack.c.l.b16 %v1602
        %v1642 = vunpack.c.l.b16 %v1603
        %v1643 = vunpack.c.l.b16 %v1604
        %v1644 = vunpack.c.l.b16 %v1605
        %v1645 = vunpack.c.l.b16 %v1606
        %v1646 = vunpack.c.l.b16 %v1607
        %v1647 = vpack.c.b16 %v1640, %v1639
        %v1648 = vpack.c.b16 %v1642, %v1641
        %v1649 = vpack.c.b16 %v1644, %v1643
        %v1650 = vpack.c.b16 %v1646, %v1645
        %v1656 = vsel %vm1358, %v1609, 0
        %v1659 = vsel %vm1358, %v1610, 0
        %v1662 = vsel %vm1358, %v1611, 0
        %v1665 = vsel %vm1358, %v1612, 0
        %v1668 = vsel %vm1358, %v1613, 0
        %v1671 = vsel %vm1358, %v1614, 0
        %v1674 = vsel %vm1358, %v1615, 0
        %v1677 = vsel %vm1358, %v1616, 0
        %v1680 = vsel %vm1358, %v1617, 0
        %v1683 = vsel %vm1358, %v1618, 0
        %v1686 = vsel %vm1358, %v1619, 0
        %v1689 = vsel %vm1358, %v1620, 0
        %v1692 = vsel %vm1358, %v1621, 0
        %v1695 = vsel %vm1358, %v1622, 0
        %v1698 = vsel %vm1358, %v1623, 0
        %v1701 = vsel %vm1358, %v1624, 0
        %1703 = vmatprep.subr.bf16.mxu0 0
        %1704 = vmatpush1.bf16.msra.mxu0 0
        %1705 = vmatprep.subr.bf16.mxu0 0
        %1706 = vmatpush1.bf16.msra.mxu0 0
        %1707 = vmatprep.subr.bf16.mxu0 0
        %1708 = vmatpush1.bf16.msra.mxu0 0
        %1709 = vmatprep.subr.bf16.mxu0 0
        %1710 = vmatpush1.bf16.msra.mxu0 0
        %1711 = vmatprep.subr.bf16.mxu0 0
        %1712 = vmatpush1.bf16.msra.mxu0 %v1650
        %1713 = vmatprep.subr.bf16.mxu0 0
        %1714 = vmatpush1.bf16.msra.mxu0 %v1649
        %1715 = vmatprep.subr.bf16.mxu0 0
        %1716 = vmatpush1.bf16.msra.mxu0 %v1648
        %1717 = vmatprep.subr.bf16.mxu0 0
        %1718 = vmatpush1.bf16.msra.mxu0 %v1647
        %1719 = vmatprep.subr.bf16.mxu0 0
        %1720 = vmatpush2.bf16.msra.mxu0 0
        %1721 = vmatprep.subr.bf16.mxu0 0
        %1722 = vmatpush2.bf16.msra.mxu0 0
        %1723 = vmatprep.subr.bf16.mxu0 0
        %1724 = vmatpush2.bf16.msra.mxu0 0
        %1725 = vmatprep.subr.bf16.mxu0 0
        %1726 = vmatpush2.bf16.msra.mxu0 0
        %1727 = vmatprep.subr.bf16.mxu0 0
        %1728 = vmatpush2.bf16.msra.mxu0 0
        %1729 = vmatprep.subr.bf16.mxu0 0
        %1730 = vmatpush2.bf16.msra.mxu0 0
        %1731 = vmatprep.subr.bf16.mxu0 0
        %1732 = vmatpush2.bf16.msra.mxu0 0
        %1733 = vmatprep.subr.bf16.mxu0 0
        %1734 = vmatpush2.bf16.msra.mxu0 0
        %1735 = vmatprep.mubr.bf16.mxu0 0
        %1736 = vmatmul.mubr.bf16.gmra.mxu0 %v1656
        %v1737 = vpop.f32.mrf.mxu0
        %v1738 = vadd.f32 %v1629, %v1737
        %v1739 = vpop.f32.mrf.mxu0
        %v1740 = vpop.f32.mrf.mxu0
        %v1741 = vadd.f32 %v1629, %v1740
        %v1742 = vpop.f32.mrf.mxu0
        %1743 = vmatprep.mubr.bf16.mxu0 0
        %1744 = vmatmul.mubr.bf16.gmra.mxu0 %v1659
        %v1745 = vpop.f32.mrf.mxu0
        %v1746 = vadd.f32 %v1629, %v1745
        %v1747 = vpop.f32.mrf.mxu0
        %v1748 = vpop.f32.mrf.mxu0
        %v1749 = vadd.f32 %v1629, %v1748
        %v1750 = vpop.f32.mrf.mxu0
        %1751 = vmatprep.mubr.bf16.mxu0 0
        %1752 = vmatmul.mubr.bf16.gmra.mxu0 %v1662
        %v1753 = vpop.f32.mrf.mxu0
        %v1754 = vadd.f32 %v1629, %v1753
        %v1755 = vpop.f32.mrf.mxu0
        %v1756 = vpop.f32.mrf.mxu0
        %v1757 = vadd.f32 %v1629, %v1756
        %v1758 = vpop.f32.mrf.mxu0
        %1759 = vmatprep.mubr.bf16.mxu0 0
        %1760 = vmatmul.mubr.bf16.gmra.mxu0 %v1665
        %v1761 = vpop.f32.mrf.mxu0
        %v1762 = vadd.f32 %v1629, %v1761
        %v1763 = vpop.f32.mrf.mxu0
        %v1764 = vpop.f32.mrf.mxu0
        %v1765 = vadd.f32 %v1629, %v1764
        %v1766 = vpop.f32.mrf.mxu0
        %1767 = vmatprep.mubr.bf16.mxu0 0
        %1768 = vmatmul.mubr.bf16.gmra.mxu0 %v1668
        %v1769 = vpop.f32.mrf.mxu0
        %v1770 = vadd.f32 %v1629, %v1769
        %v1771 = vpop.f32.mrf.mxu0
        %v1772 = vpop.f32.mrf.mxu0
        %v1773 = vadd.f32 %v1629, %v1772
        %v1774 = vpop.f32.mrf.mxu0
        %1775 = vmatprep.mubr.bf16.mxu0 0
        %1776 = vmatmul.mubr.bf16.gmra.mxu0 %v1671
        %v1777 = vpop.f32.mrf.mxu0
        %v1778 = vadd.f32 %v1629, %v1777
        %v1779 = vpop.f32.mrf.mxu0
        %v1780 = vpop.f32.mrf.mxu0
        %v1781 = vadd.f32 %v1629, %v1780
        %v1782 = vpop.f32.mrf.mxu0
        %1783 = vmatprep.mubr.bf16.mxu0 0
        %1784 = vmatmul.mubr.bf16.gmra.mxu0 %v1674
        %v1785 = vpop.f32.mrf.mxu0
        %v1786 = vadd.f32 %v1629, %v1785
        %v1787 = vpop.f32.mrf.mxu0
        %v1788 = vpop.f32.mrf.mxu0
        %v1789 = vadd.f32 %v1629, %v1788
        %v1790 = vpop.f32.mrf.mxu0
        %1791 = vmatprep.mubr.bf16.mxu0 0
        %1792 = vmatmul.mubr.bf16.gmra.mxu0 %v1677
        %v1793 = vpop.f32.mrf.mxu0
        %v1794 = vadd.f32 %v1629, %v1793
        %v1795 = vpop.f32.mrf.mxu0
        %v1796 = vpop.f32.mrf.mxu0
        %v1797 = vadd.f32 %v1629, %v1796
        %v1798 = vpop.f32.mrf.mxu0
        %1799 = vmatprep.mubr.bf16.mxu0 0
        %1800 = vmatmul.mubr.bf16.gmra.mxu0 %v1680
        %v1801 = vpop.f32.mrf.mxu0
        %v1802 = vadd.f32 %v1629, %v1801
        %v1803 = vpop.f32.mrf.mxu0
        %v1804 = vpop.f32.mrf.mxu0
        %v1805 = vadd.f32 %v1629, %v1804
        %v1806 = vpop.f32.mrf.mxu0
        %1807 = vmatprep.mubr.bf16.mxu0 0
        %1808 = vmatmul.mubr.bf16.gmra.mxu0 %v1683
        %v1809 = vpop.f32.mrf.mxu0
        %v1810 = vadd.f32 %v1629, %v1809
        %v1811 = vpop.f32.mrf.mxu0
        %v1812 = vpop.f32.mrf.mxu0
        %v1813 = vadd.f32 %v1629, %v1812
        %v1814 = vpop.f32.mrf.mxu0
        %1815 = vmatprep.mubr.bf16.mxu0 0
        %1816 = vmatmul.mubr.bf16.gmra.mxu0 %v1686
        %v1817 = vpop.f32.mrf.mxu0
        %v1818 = vadd.f32 %v1629, %v1817
        %v1819 = vpop.f32.mrf.mxu0
        %v1820 = vpop.f32.mrf.mxu0
        %v1821 = vadd.f32 %v1629, %v1820
        %v1822 = vpop.f32.mrf.mxu0
        %1823 = vmatprep.mubr.bf16.mxu0 0
        %1824 = vmatmul.mubr.bf16.gmra.mxu0 %v1689
        %v1825 = vpop.f32.mrf.mxu0
        %v1826 = vadd.f32 %v1629, %v1825
        %v1827 = vpop.f32.mrf.mxu0
        %v1828 = vpop.f32.mrf.mxu0
        %v1829 = vadd.f32 %v1629, %v1828
        %v1830 = vpop.f32.mrf.mxu0
        %1831 = vmatprep.mubr.bf16.mxu0 0
        %1832 = vmatmul.mubr.bf16.gmra.mxu0 %v1692
        %v1833 = vpop.f32.mrf.mxu0
        %v1834 = vadd.f32 %v1629, %v1833
        %v1835 = vpop.f32.mrf.mxu0
        %v1836 = vpop.f32.mrf.mxu0
        %v1837 = vadd.f32 %v1629, %v1836
        %v1838 = vpop.f32.mrf.mxu0
        %1839 = vmatprep.mubr.bf16.mxu0 0
        %1840 = vmatmul.mubr.bf16.gmra.mxu0 %v1695
        %v1841 = vpop.f32.mrf.mxu0
        %v1842 = vadd.f32 %v1629, %v1841
        %v1843 = vpop.f32.mrf.mxu0
        %v1844 = vpop.f32.mrf.mxu0
        %v1845 = vadd.f32 %v1629, %v1844
        %v1846 = vpop.f32.mrf.mxu0
        %1847 = vmatprep.mubr.bf16.mxu0 0
        %1848 = vmatmul.mubr.bf16.gmra.mxu0 %v1698
        %v1849 = vpop.f32.mrf.mxu0
        %v1850 = vadd.f32 %v1629, %v1849
        %v1851 = vpop.f32.mrf.mxu0
        %v1852 = vpop.f32.mrf.mxu0
        %v1853 = vadd.f32 %v1629, %v1852
        %v1854 = vpop.f32.mrf.mxu0
        %1855 = vmatprep.mubr.bf16.mxu0 0
        %1856 = vmatmul.mubr.bf16.gmra.mxu0 %v1701
        %v1857 = vpop.f32.mrf.mxu0
        %v1858 = vadd.f32 %v1629, %v1857
        %v1859 = vpop.f32.mrf.mxu0
        %v1860 = vpop.f32.mrf.mxu0
        %v1861 = vadd.f32 %v1629, %v1860
        %v1862 = vpop.f32.mrf.mxu0
        %1863 = vdwg.mxu0
        %v1864 = vmax.f32 %v1738, 0.0
        %v1865 = vmax.f32 %v1741, 0.0
        %v1866 = vmax.f32 %v1746, 0.0
        %v1867 = vmax.f32 %v1749, 0.0
        %v1868 = vmax.f32 %v1754, 0.0
        %v1869 = vmax.f32 %v1757, 0.0
        %v1870 = vmax.f32 %v1762, 0.0
        %v1871 = vmax.f32 %v1765, 0.0
        %v1872 = vmax.f32 %v1770, 0.0
        %v1873 = vmax.f32 %v1773, 0.0
        %v1874 = vmax.f32 %v1778, 0.0
        %v1875 = vmax.f32 %v1781, 0.0
        %v1876 = vmax.f32 %v1786, 0.0
        %v1877 = vmax.f32 %v1789, 0.0
        %v1878 = vmax.f32 %v1794, 0.0
        %v1879 = vmax.f32 %v1797, 0.0
        %v1880 = vmax.f32 %v1802, 0.0
        %v1881 = vmax.f32 %v1805, 0.0
        %v1882 = vmax.f32 %v1810, 0.0
        %v1883 = vmax.f32 %v1813, 0.0
        %v1884 = vmax.f32 %v1818, 0.0
        %v1885 = vmax.f32 %v1821, 0.0
        %v1886 = vmax.f32 %v1826, 0.0
        %v1887 = vmax.f32 %v1829, 0.0
        %v1888 = vmax.f32 %v1834, 0.0
        %v1889 = vmax.f32 %v1837, 0.0
        %v1890 = vmax.f32 %v1842, 0.0
        %v1891 = vmax.f32 %v1845, 0.0
        %v1892 = vmax.f32 %v1850, 0.0
        %v1893 = vmax.f32 %v1853, 0.0
        %v1894 = vmax.f32 %v1858, 0.0
        %v1895 = vmax.f32 %v1861, 0.0
        %v1896 = vld [vmem:[%s8] sm:$0xf]
        %v1897 = vld [vmem:[%s8 + $0x4] sm:$0xf]
        %v1898 = vld [vmem:[%s8 + $0x8] sm:$0xf]
        %v1899 = vld [vmem:[%s8 + $0xc] sm:$0xf]
        %v1900 = vld [vmem:[%s8 + $0x10] sm:$0xf]
        %v1901 = vld [vmem:[%s8 + $0x14] sm:$0xf]
        %v1902 = vld [vmem:[%s8 + $0x18] sm:$0xf]
        %v1903 = vld [vmem:[%s8 + $0x1c] sm:$0xf]
        %v1904 = vld [vmem:[%s9] sm:$0x1]
        %v1905 = vpack.c.bf16 %v1865, %v1864
        %v1906 = vpack.c.bf16 %v1867, %v1866
        %v1907 = vpack.c.bf16 %v1869, %v1868
        %v1908 = vpack.c.bf16 %v1871, %v1870
        %v1909 = vpack.c.bf16 %v1873, %v1872
        %v1910 = vpack.c.bf16 %v1875, %v1874
        %v1911 = vpack.c.bf16 %v1877, %v1876
        %v1912 = vpack.c.bf16 %v1879, %v1878
        %v1913 = vpack.c.bf16 %v1881, %v1880
        %v1914 = vpack.c.bf16 %v1883, %v1882
        %v1915 = vpack.c.bf16 %v1885, %v1884
        %v1916 = vpack.c.bf16 %v1887, %v1886
        %v1917 = vpack.c.bf16 %v1889, %v1888
        %v1918 = vpack.c.bf16 %v1891, %v1890
        %v1919 = vpack.c.bf16 %v1893, %v1892
        %v1920 = vpack.c.bf16 %v1895, %v1894
        %v1922 = vlaneseq
        %v1923 = vshrl.u32 %v1922, 7
        %v1924 = vsub.s32 0, %v1923
        %v1925 = vrot.slane %v1904, %v1924
        %v1935 = vunpack.c.l.b16 %v1896
        %v1936 = vunpack.c.l.b16 %v1897
        %v1937 = vunpack.c.l.b16 %v1898
        %v1938 = vunpack.c.l.b16 %v1899
        %v1939 = vunpack.c.l.b16 %v1900
        %v1940 = vunpack.c.l.b16 %v1901
        %v1941 = vunpack.c.l.b16 %v1902
        %v1942 = vunpack.c.l.b16 %v1903
        %v1943 = vpack.c.b16 %v1936, %v1935
        %v1944 = vpack.c.b16 %v1938, %v1937
        %v1945 = vpack.c.b16 %v1940, %v1939
        %v1946 = vpack.c.b16 %v1942, %v1941
        %v1952 = vsel %vm1358, %v1905, 0
        %v1955 = vsel %vm1358, %v1906, 0
        %v1958 = vsel %vm1358, %v1907, 0
        %v1961 = vsel %vm1358, %v1908, 0
        %v1964 = vsel %vm1358, %v1909, 0
        %v1967 = vsel %vm1358, %v1910, 0
        %v1970 = vsel %vm1358, %v1911, 0
        %v1973 = vsel %vm1358, %v1912, 0
        %v1976 = vsel %vm1358, %v1913, 0
        %v1979 = vsel %vm1358, %v1914, 0
        %v1982 = vsel %vm1358, %v1915, 0
        %v1985 = vsel %vm1358, %v1916, 0
        %v1988 = vsel %vm1358, %v1917, 0
        %v1991 = vsel %vm1358, %v1918, 0
        %v1994 = vsel %vm1358, %v1919, 0
        %v1997 = vsel %vm1358, %v1920, 0
        %1999 = vmatprep.subr.bf16.mxu0 0
        %2000 = vmatpush1.bf16.msra.mxu0 0
        %2001 = vmatprep.subr.bf16.mxu0 0
        %2002 = vmatpush1.bf16.msra.mxu0 0
        %2003 = vmatprep.subr.bf16.mxu0 0
        %2004 = vmatpush1.bf16.msra.mxu0 0
        %2005 = vmatprep.subr.bf16.mxu0 0
        %2006 = vmatpush1.bf16.msra.mxu0 0
        %2007 = vmatprep.subr.bf16.mxu0 0
        %2008 = vmatpush1.bf16.msra.mxu0 %v1946
        %2009 = vmatprep.subr.bf16.mxu0 0
        %2010 = vmatpush1.bf16.msra.mxu0 %v1945
        %2011 = vmatprep.subr.bf16.mxu0 0
        %2012 = vmatpush1.bf16.msra.mxu0 %v1944
        %2013 = vmatprep.subr.bf16.mxu0 0
        %2014 = vmatpush1.bf16.msra.mxu0 %v1943
        %2015 = vmatprep.subr.bf16.mxu0 0
        %2016 = vmatpush2.bf16.msra.mxu0 0
        %2017 = vmatprep.subr.bf16.mxu0 0
        %2018 = vmatpush2.bf16.msra.mxu0 0
        %2019 = vmatprep.subr.bf16.mxu0 0
        %2020 = vmatpush2.bf16.msra.mxu0 0
        %2021 = vmatprep.subr.bf16.mxu0 0
        %2022 = vmatpush2.bf16.msra.mxu0 0
        %2023 = vmatprep.subr.bf16.mxu0 0
        %2024 = vmatpush2.bf16.msra.mxu0 0
        %2025 = vmatprep.subr.bf16.mxu0 0
        %2026 = vmatpush2.bf16.msra.mxu0 0
        %2027 = vmatprep.subr.bf16.mxu0 0
        %2028 = vmatpush2.bf16.msra.mxu0 0
        %2029 = vmatprep.subr.bf16.mxu0 0
        %2030 = vmatpush2.bf16.msra.mxu0 0
        %2031 = vmatprep.mubr.bf16.mxu0 0
        %2032 = vmatmul.mubr.bf16.gmra.mxu0 %v1952
        %v2033 = vpop.f32.mrf.mxu0
        %v2034 = vadd.f32 %v1925, %v2033
        %v2035 = vpop.f32.mrf.mxu0
        %v2036 = vpop.f32.mrf.mxu0
        %v2037 = vadd.f32 %v1925, %v2036
        %v2038 = vpop.f32.mrf.mxu0
        %2039 = vmatprep.mubr.bf16.mxu0 0
        %2040 = vmatmul.mubr.bf16.gmra.mxu0 %v1955
        %v2041 = vpop.f32.mrf.mxu0
        %v2042 = vadd.f32 %v1925, %v2041
        %v2043 = vpop.f32.mrf.mxu0
        %v2044 = vpop.f32.mrf.mxu0
        %v2045 = vadd.f32 %v1925, %v2044
        %v2046 = vpop.f32.mrf.mxu0
        %2047 = vmatprep.mubr.bf16.mxu0 0
        %2048 = vmatmul.mubr.bf16.gmra.mxu0 %v1958
        %v2049 = vpop.f32.mrf.mxu0
        %v2050 = vadd.f32 %v1925, %v2049
        %v2051 = vpop.f32.mrf.mxu0
        %v2052 = vpop.f32.mrf.mxu0
        %v2053 = vadd.f32 %v1925, %v2052
        %v2054 = vpop.f32.mrf.mxu0
        %2055 = vmatprep.mubr.bf16.mxu0 0
        %2056 = vmatmul.mubr.bf16.gmra.mxu0 %v1961
        %v2057 = vpop.f32.mrf.mxu0
        %v2058 = vadd.f32 %v1925, %v2057
        %v2059 = vpop.f32.mrf.mxu0
        %v2060 = vpop.f32.mrf.mxu0
        %v2061 = vadd.f32 %v1925, %v2060
        %v2062 = vpop.f32.mrf.mxu0
        %2063 = vmatprep.mubr.bf16.mxu0 0
        %2064 = vmatmul.mubr.bf16.gmra.mxu0 %v1964
        %v2065 = vpop.f32.mrf.mxu0
        %v2066 = vadd.f32 %v1925, %v2065
        %v2067 = vpop.f32.mrf.mxu0
        %v2068 = vpop.f32.mrf.mxu0
        %v2069 = vadd.f32 %v1925, %v2068
        %v2070 = vpop.f32.mrf.mxu0
        %2071 = vmatprep.mubr.bf16.mxu0 0
        %2072 = vmatmul.mubr.bf16.gmra.mxu0 %v1967
        %v2073 = vpop.f32.mrf.mxu0
        %v2074 = vadd.f32 %v1925, %v2073
        %v2075 = vpop.f32.mrf.mxu0
        %v2076 = vpop.f32.mrf.mxu0
        %v2077 = vadd.f32 %v1925, %v2076
        %v2078 = vpop.f32.mrf.mxu0
        %2079 = vmatprep.mubr.bf16.mxu0 0
        %2080 = vmatmul.mubr.bf16.gmra.mxu0 %v1970
        %v2081 = vpop.f32.mrf.mxu0
        %v2082 = vadd.f32 %v1925, %v2081
        %v2083 = vpop.f32.mrf.mxu0
        %v2084 = vpop.f32.mrf.mxu0
        %v2085 = vadd.f32 %v1925, %v2084
        %v2086 = vpop.f32.mrf.mxu0
        %2087 = vmatprep.mubr.bf16.mxu0 0
        %2088 = vmatmul.mubr.bf16.gmra.mxu0 %v1973
        %v2089 = vpop.f32.mrf.mxu0
        %v2090 = vadd.f32 %v1925, %v2089
        %v2091 = vpop.f32.mrf.mxu0
        %v2092 = vpop.f32.mrf.mxu0
        %v2093 = vadd.f32 %v1925, %v2092
        %v2094 = vpop.f32.mrf.mxu0
        %2095 = vmatprep.mubr.bf16.mxu0 0
        %2096 = vmatmul.mubr.bf16.gmra.mxu0 %v1976
        %v2097 = vpop.f32.mrf.mxu0
        %v2098 = vadd.f32 %v1925, %v2097
        %v2099 = vpop.f32.mrf.mxu0
        %v2100 = vpop.f32.mrf.mxu0
        %v2101 = vadd.f32 %v1925, %v2100
        %v2102 = vpop.f32.mrf.mxu0
        %2103 = vmatprep.mubr.bf16.mxu0 0
        %2104 = vmatmul.mubr.bf16.gmra.mxu0 %v1979
        %v2105 = vpop.f32.mrf.mxu0
        %v2106 = vadd.f32 %v1925, %v2105
        %v2107 = vpop.f32.mrf.mxu0
        %v2108 = vpop.f32.mrf.mxu0
        %v2109 = vadd.f32 %v1925, %v2108
        %v2110 = vpop.f32.mrf.mxu0
        %2111 = vmatprep.mubr.bf16.mxu0 0
        %2112 = vmatmul.mubr.bf16.gmra.mxu0 %v1982
        %v2113 = vpop.f32.mrf.mxu0
        %v2114 = vadd.f32 %v1925, %v2113
        %v2115 = vpop.f32.mrf.mxu0
        %v2116 = vpop.f32.mrf.mxu0
        %v2117 = vadd.f32 %v1925, %v2116
        %v2118 = vpop.f32.mrf.mxu0
        %2119 = vmatprep.mubr.bf16.mxu0 0
        %2120 = vmatmul.mubr.bf16.gmra.mxu0 %v1985
        %v2121 = vpop.f32.mrf.mxu0
        %v2122 = vadd.f32 %v1925, %v2121
        %v2123 = vpop.f32.mrf.mxu0
        %v2124 = vpop.f32.mrf.mxu0
        %v2125 = vadd.f32 %v1925, %v2124
        %v2126 = vpop.f32.mrf.mxu0
        %2127 = vmatprep.mubr.bf16.mxu0 0
        %2128 = vmatmul.mubr.bf16.gmra.mxu0 %v1988
        %v2129 = vpop.f32.mrf.mxu0
        %v2130 = vadd.f32 %v1925, %v2129
        %v2131 = vpop.f32.mrf.mxu0
        %v2132 = vpop.f32.mrf.mxu0
        %v2133 = vadd.f32 %v1925, %v2132
        %v2134 = vpop.f32.mrf.mxu0
        %2135 = vmatprep.mubr.bf16.mxu0 0
        %2136 = vmatmul.mubr.bf16.gmra.mxu0 %v1991
        %v2137 = vpop.f32.mrf.mxu0
        %v2138 = vadd.f32 %v1925, %v2137
        %v2139 = vpop.f32.mrf.mxu0
        %v2140 = vpop.f32.mrf.mxu0
        %v2141 = vadd.f32 %v1925, %v2140
        %v2142 = vpop.f32.mrf.mxu0
        %2143 = vmatprep.mubr.bf16.mxu0 0
        %2144 = vmatmul.mubr.bf16.gmra.mxu0 %v1994
        %v2145 = vpop.f32.mrf.mxu0
        %v2146 = vadd.f32 %v1925, %v2145
        %v2147 = vpop.f32.mrf.mxu0
        %v2148 = vpop.f32.mrf.mxu0
        %v2149 = vadd.f32 %v1925, %v2148
        %v2150 = vpop.f32.mrf.mxu0
        %2151 = vmatprep.mubr.bf16.mxu0 0
        %2152 = vmatmul.mubr.bf16.gmra.mxu0 %v1997
        %v2153 = vpop.f32.mrf.mxu0
        %v2154 = vadd.f32 %v1925, %v2153
        %v2155 = vpop.f32.mrf.mxu0
        %v2156 = vpop.f32.mrf.mxu0
        %v2157 = vadd.f32 %v1925, %v2156
        %v2158 = vpop.f32.mrf.mxu0
        %2159 = vdwg.mxu0
        %v2160 = vmax.f32 %v2034, 0.0
        %v2161 = vmax.f32 %v2037, 0.0
        %v2162 = vmax.f32 %v2042, 0.0
        %v2163 = vmax.f32 %v2045, 0.0
        %v2164 = vmax.f32 %v2050, 0.0
        %v2165 = vmax.f32 %v2053, 0.0
        %v2166 = vmax.f32 %v2058, 0.0
        %v2167 = vmax.f32 %v2061, 0.0
        %v2168 = vmax.f32 %v2066, 0.0
        %v2169 = vmax.f32 %v2069, 0.0
        %v2170 = vmax.f32 %v2074, 0.0
        %v2171 = vmax.f32 %v2077, 0.0
        %v2172 = vmax.f32 %v2082, 0.0
        %v2173 = vmax.f32 %v2085, 0.0
        %v2174 = vmax.f32 %v2090, 0.0
        %v2175 = vmax.f32 %v2093, 0.0
        %v2176 = vmax.f32 %v2098, 0.0
        %v2177 = vmax.f32 %v2101, 0.0
        %v2178 = vmax.f32 %v2106, 0.0
        %v2179 = vmax.f32 %v2109, 0.0
        %v2180 = vmax.f32 %v2114, 0.0
        %v2181 = vmax.f32 %v2117, 0.0
        %v2182 = vmax.f32 %v2122, 0.0
        %v2183 = vmax.f32 %v2125, 0.0
        %v2184 = vmax.f32 %v2130, 0.0
        %v2185 = vmax.f32 %v2133, 0.0
        %v2186 = vmax.f32 %v2138, 0.0
        %v2187 = vmax.f32 %v2141, 0.0
        %v2188 = vmax.f32 %v2146, 0.0
        %v2189 = vmax.f32 %v2149, 0.0
        %v2190 = vmax.f32 %v2154, 0.0
        %v2191 = vmax.f32 %v2157, 0.0
        %v2192 = vld [vmem:[%s10] sm:$0xf]
        %v2193 = vld [vmem:[%s10 + $0x4] sm:$0xf]
        %v2194 = vld [vmem:[%s10 + $0x8] sm:$0xf]
        %v2195 = vld [vmem:[%s10 + $0xc] sm:$0xf]
        %v2196 = vld [vmem:[%s10 + $0x10] sm:$0xf]
        %v2197 = vld [vmem:[%s10 + $0x14] sm:$0xf]
        %v2198 = vld [vmem:[%s10 + $0x18] sm:$0xf]
        %v2199 = vld [vmem:[%s10 + $0x1c] sm:$0xf]
        %v2200 = vld [vmem:[%s11] sm:$0xf]
        %v2201 = vld [vmem:[%s11 + $0x4] sm:$0xf]
        %v2202 = vld [vmem:[%s11 + $0x8] sm:$0xf]
        %v2203 = vld [vmem:[%s11 + $0xc] sm:$0xf]
        %v2204 = vld [vmem:[%s11 + $0x10] sm:$0xf]
        %v2205 = vld [vmem:[%s11 + $0x14] sm:$0xf]
        %v2206 = vld [vmem:[%s11 + $0x18] sm:$0xf]
        %v2207 = vld [vmem:[%s11 + $0x1c] sm:$0xf]
        %v2208 = vld [vmem:[%s12] sm:$0x1]
        %v2209 = vpack.c.bf16 %v2161, %v2160
        %v2210 = vpack.c.bf16 %v2163, %v2162
        %v2211 = vpack.c.bf16 %v2165, %v2164
        %v2212 = vpack.c.bf16 %v2167, %v2166
        %v2213 = vpack.c.bf16 %v2169, %v2168
        %v2214 = vpack.c.bf16 %v2171, %v2170
        %v2215 = vpack.c.bf16 %v2173, %v2172
        %v2216 = vpack.c.bf16 %v2175, %v2174
        %v2217 = vpack.c.bf16 %v2177, %v2176
        %v2218 = vpack.c.bf16 %v2179, %v2178
        %v2219 = vpack.c.bf16 %v2181, %v2180
        %v2220 = vpack.c.bf16 %v2183, %v2182
        %v2221 = vpack.c.bf16 %v2185, %v2184
        %v2222 = vpack.c.bf16 %v2187, %v2186
        %v2223 = vpack.c.bf16 %v2189, %v2188
        %v2224 = vpack.c.bf16 %v2191, %v2190
        %v2233 = vunpack.c.l.b16 %v2200
        %v2234 = vunpack.c.l.b16 %v2201
        %v2235 = vunpack.c.l.b16 %v2202
        %v2236 = vunpack.c.l.b16 %v2203
        %v2237 = vunpack.c.l.b16 %v2204
        %v2238 = vunpack.c.l.b16 %v2205
        %v2239 = vunpack.c.l.b16 %v2206
        %v2240 = vunpack.c.l.b16 %v2207
        %v2241 = vpack.c.b16 %v2234, %v2233
        %v2242 = vpack.c.b16 %v2236, %v2235
        %v2243 = vpack.c.b16 %v2238, %v2237
        %v2244 = vpack.c.b16 %v2240, %v2239
        %v2249 = vand.u32 %v2244, %v1106
        %2251 = vmatprep.subr.bf16.mxu0 0
        %2252 = vmatpush1.bf16.msra.mxu0 0
        %2253 = vmatprep.subr.bf16.mxu0 0
        %2254 = vmatpush1.bf16.msra.mxu0 0
        %2255 = vmatprep.subr.bf16.mxu0 0
        %2256 = vmatpush1.bf16.msra.mxu0 0
        %2257 = vmatprep.subr.bf16.mxu0 0
        %2258 = vmatpush1.bf16.msra.mxu0 0
        %2259 = vmatprep.subr.bf16.mxu0 0
        %2260 = vmatpush1.bf16.msra.mxu0 %v2249
        %2261 = vmatprep.subr.bf16.mxu0 0
        %2262 = vmatpush1.bf16.msra.mxu0 %v2243
        %2263 = vmatprep.subr.bf16.mxu0 0
        %2264 = vmatpush1.bf16.msra.mxu0 %v2242
        %2265 = vmatprep.subr.bf16.mxu0 0
        %2266 = vmatpush1.bf16.msra.mxu0 %v2241
        %2267 = vmatprep.subr.bf16.mxu0 0
        %2268 = vmatpush2.bf16.msra.mxu0 0
        %2269 = vmatprep.subr.bf16.mxu0 0
        %2270 = vmatpush2.bf16.msra.mxu0 0
        %2271 = vmatprep.subr.bf16.mxu0 0
        %2272 = vmatpush2.bf16.msra.mxu0 0
        %2273 = vmatprep.subr.bf16.mxu0 0
        %2274 = vmatpush2.bf16.msra.mxu0 0
        %2275 = vmatprep.subr.bf16.mxu0 0
        %2276 = vmatpush2.bf16.msra.mxu0 0
        %2277 = vmatprep.subr.bf16.mxu0 0
        %2278 = vmatpush2.bf16.msra.mxu0 0
        %2279 = vmatprep.subr.bf16.mxu0 0
        %2280 = vmatpush2.bf16.msra.mxu0 0
        %2281 = vmatprep.subr.bf16.mxu0 0
        %2282 = vmatpush2.bf16.msra.mxu0 0
        %2283 = vmatprep.mubr.bf16.mxu0 0
        %2284 = vmatmul.mubr.bf16.gmra.mxu0 %v1056
        %v2285 = vpop.f32.mrf.mxu0
        %v2286 = vadd.f32 0.0, %v2285
        %v2287 = vpop.f32.mrf.mxu0
        %v2288 = vpop.f32.mrf.mxu0
        %v2289 = vadd.f32 0.0, %v2288
        %v2290 = vpop.f32.mrf.mxu0
        %2291 = vmatprep.mubr.bf16.mxu0 0
        %2292 = vmatmul.mubr.bf16.gmra.mxu0 %v1059
        %v2293 = vpop.f32.mrf.mxu0
        %v2294 = vadd.f32 0.0, %v2293
        %v2295 = vpop.f32.mrf.mxu0
        %v2296 = vpop.f32.mrf.mxu0
        %v2297 = vadd.f32 0.0, %v2296
        %v2298 = vpop.f32.mrf.mxu0
        %2299 = vmatprep.mubr.bf16.mxu0 0
        %2300 = vmatmul.mubr.bf16.gmra.mxu0 %v1062
        %v2301 = vpop.f32.mrf.mxu0
        %v2302 = vadd.f32 0.0, %v2301
        %v2303 = vpop.f32.mrf.mxu0
        %v2304 = vpop.f32.mrf.mxu0
        %v2305 = vadd.f32 0.0, %v2304
        %v2306 = vpop.f32.mrf.mxu0
        %2307 = vmatprep.mubr.bf16.mxu0 0
        %2308 = vmatmul.mubr.bf16.gmra.mxu0 %v1065
        %v2309 = vpop.f32.mrf.mxu0
        %v2310 = vadd.f32 0.0, %v2309
        %v2311 = vpop.f32.mrf.mxu0
        %v2312 = vpop.f32.mrf.mxu0
        %v2313 = vadd.f32 0.0, %v2312
        %v2314 = vpop.f32.mrf.mxu0
        %2315 = vmatprep.mubr.bf16.mxu0 0
        %2316 = vmatmul.mubr.bf16.gmra.mxu0 %v1068
        %v2317 = vpop.f32.mrf.mxu0
        %v2318 = vadd.f32 0.0, %v2317
        %v2319 = vpop.f32.mrf.mxu0
        %v2320 = vpop.f32.mrf.mxu0
        %v2321 = vadd.f32 0.0, %v2320
        %v2322 = vpop.f32.mrf.mxu0
        %2323 = vmatprep.mubr.bf16.mxu0 0
        %2324 = vmatmul.mubr.bf16.gmra.mxu0 %v1071
        %v2325 = vpop.f32.mrf.mxu0
        %v2326 = vadd.f32 0.0, %v2325
        %v2327 = vpop.f32.mrf.mxu0
        %v2328 = vpop.f32.mrf.mxu0
        %v2329 = vadd.f32 0.0, %v2328
        %v2330 = vpop.f32.mrf.mxu0
        %2331 = vmatprep.mubr.bf16.mxu0 0
        %2332 = vmatmul.mubr.bf16.gmra.mxu0 %v1074
        %v2333 = vpop.f32.mrf.mxu0
        %v2334 = vadd.f32 0.0, %v2333
        %v2335 = vpop.f32.mrf.mxu0
        %v2336 = vpop.f32.mrf.mxu0
        %v2337 = vadd.f32 0.0, %v2336
        %v2338 = vpop.f32.mrf.mxu0
        %2339 = vmatprep.mubr.bf16.mxu0 0
        %2340 = vmatmul.mubr.bf16.gmra.mxu0 %v1077
        %v2341 = vpop.f32.mrf.mxu0
        %v2342 = vadd.f32 0.0, %v2341
        %v2343 = vpop.f32.mrf.mxu0
        %v2344 = vpop.f32.mrf.mxu0
        %v2345 = vadd.f32 0.0, %v2344
        %v2346 = vpop.f32.mrf.mxu0
        %2347 = vmatprep.mubr.bf16.mxu0 0
        %2348 = vmatmul.mubr.bf16.gmra.mxu0 %v1080
        %v2349 = vpop.f32.mrf.mxu0
        %v2350 = vadd.f32 0.0, %v2349
        %v2351 = vpop.f32.mrf.mxu0
        %v2352 = vpop.f32.mrf.mxu0
        %v2353 = vadd.f32 0.0, %v2352
        %v2354 = vpop.f32.mrf.mxu0
        %2355 = vmatprep.mubr.bf16.mxu0 0
        %2356 = vmatmul.mubr.bf16.gmra.mxu0 %v1083
        %v2357 = vpop.f32.mrf.mxu0
        %v2358 = vadd.f32 0.0, %v2357
        %v2359 = vpop.f32.mrf.mxu0
        %v2360 = vpop.f32.mrf.mxu0
        %v2361 = vadd.f32 0.0, %v2360
        %v2362 = vpop.f32.mrf.mxu0
        %2363 = vmatprep.mubr.bf16.mxu0 0
        %2364 = vmatmul.mubr.bf16.gmra.mxu0 %v1086
        %v2365 = vpop.f32.mrf.mxu0
        %v2366 = vadd.f32 0.0, %v2365
        %v2367 = vpop.f32.mrf.mxu0
        %v2368 = vpop.f32.mrf.mxu0
        %v2369 = vadd.f32 0.0, %v2368
        %v2370 = vpop.f32.mrf.mxu0
        %2371 = vmatprep.mubr.bf16.mxu0 0
        %2372 = vmatmul.mubr.bf16.gmra.mxu0 %v1089
        %v2373 = vpop.f32.mrf.mxu0
        %v2374 = vadd.f32 0.0, %v2373
        %v2375 = vpop.f32.mrf.mxu0
        %v2376 = vpop.f32.mrf.mxu0
        %v2377 = vadd.f32 0.0, %v2376
        %v2378 = vpop.f32.mrf.mxu0
        %2379 = vmatprep.mubr.bf16.mxu0 0
        %2380 = vmatmul.mubr.bf16.gmra.mxu0 %v1092
        %v2381 = vpop.f32.mrf.mxu0
        %v2382 = vadd.f32 0.0, %v2381
        %v2383 = vpop.f32.mrf.mxu0
        %v2384 = vpop.f32.mrf.mxu0
        %v2385 = vadd.f32 0.0, %v2384
        %v2386 = vpop.f32.mrf.mxu0
        %2387 = vmatprep.mubr.bf16.mxu0 0
        %2388 = vmatmul.mubr.bf16.gmra.mxu0 %v1095
        %v2389 = vpop.f32.mrf.mxu0
        %v2390 = vadd.f32 0.0, %v2389
        %v2391 = vpop.f32.mrf.mxu0
        %v2392 = vpop.f32.mrf.mxu0
        %v2393 = vadd.f32 0.0, %v2392
        %v2394 = vpop.f32.mrf.mxu0
        %2395 = vmatprep.mubr.bf16.mxu0 0
        %2396 = vmatmul.mubr.bf16.gmra.mxu0 %v1098
        %v2397 = vpop.f32.mrf.mxu0
        %v2398 = vadd.f32 0.0, %v2397
        %v2399 = vpop.f32.mrf.mxu0
        %v2400 = vpop.f32.mrf.mxu0
        %v2401 = vadd.f32 0.0, %v2400
        %v2402 = vpop.f32.mrf.mxu0
        %2403 = vmatprep.mubr.bf16.mxu0 0
        %2404 = vmatmul.mubr.bf16.gmra.mxu0 %v1101
        %v2405 = vpop.f32.mrf.mxu0
        %v2406 = vadd.f32 0.0, %v2405
        %v2407 = vpop.f32.mrf.mxu0
        %v2408 = vpop.f32.mrf.mxu0
        %v2409 = vadd.f32 0.0, %v2408
        %v2410 = vpop.f32.mrf.mxu0
        %2411 = vdwg.mxu0
        %v2420 = vunpack.c.l.b16 %v2192
        %v2421 = vunpack.c.l.b16 %v2193
        %v2422 = vunpack.c.l.b16 %v2194
        %v2423 = vunpack.c.l.b16 %v2195
        %v2424 = vunpack.c.l.b16 %v2196
        %v2425 = vunpack.c.l.b16 %v2197
        %v2426 = vunpack.c.l.b16 %v2198
        %v2427 = vunpack.c.l.b16 %v2199
        %v2428 = vpack.c.b16 %v2421, %v2420
        %v2429 = vpack.c.b16 %v2423, %v2422
        %v2430 = vpack.c.b16 %v2425, %v2424
        %v2431 = vpack.c.b16 %v2427, %v2426
        %v2437 = vsel %vm1358, %v2209, 0
        %v2440 = vsel %vm1358, %v2210, 0
        %v2443 = vsel %vm1358, %v2211, 0
        %v2446 = vsel %vm1358, %v2212, 0
        %v2449 = vsel %vm1358, %v2213, 0
        %v2452 = vsel %vm1358, %v2214, 0
        %v2455 = vsel %vm1358, %v2215, 0
        %v2458 = vsel %vm1358, %v2216, 0
        %v2461 = vsel %vm1358, %v2217, 0
        %v2464 = vsel %vm1358, %v2218, 0
        %v2467 = vsel %vm1358, %v2219, 0
        %v2470 = vsel %vm1358, %v2220, 0
        %v2473 = vsel %vm1358, %v2221, 0
        %v2476 = vsel %vm1358, %v2222, 0
        %v2479 = vsel %vm1358, %v2223, 0
        %v2482 = vsel %vm1358, %v2224, 0
        %2484 = vmatprep.subr.bf16.mxu0 0
        %2485 = vmatpush1.bf16.msra.mxu0 0
        %2486 = vmatprep.subr.bf16.mxu0 0
        %2487 = vmatpush1.bf16.msra.mxu0 0
        %2488 = vmatprep.subr.bf16.mxu0 0
        %2489 = vmatpush1.bf16.msra.mxu0 0
        %2490 = vmatprep.subr.bf16.mxu0 0
        %2491 = vmatpush1.bf16.msra.mxu0 0
        %2492 = vmatprep.subr.bf16.mxu0 0
        %2493 = vmatpush1.bf16.msra.mxu0 %v2431
        %2494 = vmatprep.subr.bf16.mxu0 0
        %2495 = vmatpush1.bf16.msra.mxu0 %v2430
        %2496 = vmatprep.subr.bf16.mxu0 0
        %2497 = vmatpush1.bf16.msra.mxu0 %v2429
        %2498 = vmatprep.subr.bf16.mxu0 0
        %2499 = vmatpush1.bf16.msra.mxu0 %v2428
        %2500 = vmatprep.subr.bf16.mxu0 0
        %2501 = vmatpush2.bf16.msra.mxu0 0
        %2502 = vmatprep.subr.bf16.mxu0 0
        %2503 = vmatpush2.bf16.msra.mxu0 0
        %2504 = vmatprep.subr.bf16.mxu0 0
        %2505 = vmatpush2.bf16.msra.mxu0 0
        %2506 = vmatprep.subr.bf16.mxu0 0
        %2507 = vmatpush2.bf16.msra.mxu0 0
        %2508 = vmatprep.subr.bf16.mxu0 0
        %2509 = vmatpush2.bf16.msra.mxu0 0
        %2510 = vmatprep.subr.bf16.mxu0 0
        %2511 = vmatpush2.bf16.msra.mxu0 0
        %2512 = vmatprep.subr.bf16.mxu0 0
        %2513 = vmatpush2.bf16.msra.mxu0 0
        %2514 = vmatprep.subr.bf16.mxu0 0
        %2515 = vmatpush2.bf16.msra.mxu0 0
        %2516 = vmatprep.mubr.bf16.mxu0 0
        %2517 = vmatmul.mubr.bf16.gmra.mxu0 %v2437
        %v2518 = vpop.f32.mrf.mxu0
        %v2519 = vadd.f32 %v2286, %v2518
        %v2520 = vpop.f32.mrf.mxu0
        %v2521 = vpop.f32.mrf.mxu0
        %v2522 = vadd.f32 %v2289, %v2521
        %v2523 = vpop.f32.mrf.mxu0
        %2524 = vmatprep.mubr.bf16.mxu0 0
        %2525 = vmatmul.mubr.bf16.gmra.mxu0 %v2440
        %v2526 = vpop.f32.mrf.mxu0
        %v2527 = vadd.f32 %v2294, %v2526
        %v2528 = vpop.f32.mrf.mxu0
        %v2529 = vpop.f32.mrf.mxu0
        %v2530 = vadd.f32 %v2297, %v2529
        %v2531 = vpop.f32.mrf.mxu0
        %2532 = vmatprep.mubr.bf16.mxu0 0
        %2533 = vmatmul.mubr.bf16.gmra.mxu0 %v2443
        %v2534 = vpop.f32.mrf.mxu0
        %v2535 = vadd.f32 %v2302, %v2534
        %v2536 = vpop.f32.mrf.mxu0
        %v2537 = vpop.f32.mrf.mxu0
        %v2538 = vadd.f32 %v2305, %v2537
        %v2539 = vpop.f32.mrf.mxu0
        %2540 = vmatprep.mubr.bf16.mxu0 0
        %2541 = vmatmul.mubr.bf16.gmra.mxu0 %v2446
        %v2542 = vpop.f32.mrf.mxu0
        %v2543 = vadd.f32 %v2310, %v2542
        %v2544 = vpop.f32.mrf.mxu0
        %v2545 = vpop.f32.mrf.mxu0
        %v2546 = vadd.f32 %v2313, %v2545
        %v2547 = vpop.f32.mrf.mxu0
        %2548 = vmatprep.mubr.bf16.mxu0 0
        %2549 = vmatmul.mubr.bf16.gmra.mxu0 %v2449
        %v2550 = vpop.f32.mrf.mxu0
        %v2551 = vadd.f32 %v2318, %v2550
        %v2552 = vpop.f32.mrf.mxu0
        %v2553 = vpop.f32.mrf.mxu0
        %v2554 = vadd.f32 %v2321, %v2553
        %v2555 = vpop.f32.mrf.mxu0
        %2556 = vmatprep.mubr.bf16.mxu0 0
        %2557 = vmatmul.mubr.bf16.gmra.mxu0 %v2452
        %v2558 = vpop.f32.mrf.mxu0
        %v2559 = vadd.f32 %v2326, %v2558
        %v2560 = vpop.f32.mrf.mxu0
        %v2561 = vpop.f32.mrf.mxu0
        %v2562 = vadd.f32 %v2329, %v2561
        %v2563 = vpop.f32.mrf.mxu0
        %2564 = vmatprep.mubr.bf16.mxu0 0
        %2565 = vmatmul.mubr.bf16.gmra.mxu0 %v2455
        %v2566 = vpop.f32.mrf.mxu0
        %v2567 = vadd.f32 %v2334, %v2566
        %v2568 = vpop.f32.mrf.mxu0
        %v2569 = vpop.f32.mrf.mxu0
        %v2570 = vadd.f32 %v2337, %v2569
        %v2571 = vpop.f32.mrf.mxu0
        %2572 = vmatprep.mubr.bf16.mxu0 0
        %2573 = vmatmul.mubr.bf16.gmra.mxu0 %v2458
        %v2574 = vpop.f32.mrf.mxu0
        %v2575 = vadd.f32 %v2342, %v2574
        %v2576 = vpop.f32.mrf.mxu0
        %v2577 = vpop.f32.mrf.mxu0
        %v2578 = vadd.f32 %v2345, %v2577
        %v2579 = vpop.f32.mrf.mxu0
        %2580 = vmatprep.mubr.bf16.mxu0 0
        %2581 = vmatmul.mubr.bf16.gmra.mxu0 %v2461
        %v2582 = vpop.f32.mrf.mxu0
        %v2583 = vadd.f32 %v2350, %v2582
        %v2584 = vpop.f32.mrf.mxu0
        %v2585 = vpop.f32.mrf.mxu0
        %v2586 = vadd.f32 %v2353, %v2585
        %v2587 = vpop.f32.mrf.mxu0
        %2588 = vmatprep.mubr.bf16.mxu0 0
        %2589 = vmatmul.mubr.bf16.gmra.mxu0 %v2464
        %v2590 = vpop.f32.mrf.mxu0
        %v2591 = vadd.f32 %v2358, %v2590
        %v2592 = vpop.f32.mrf.mxu0
        %v2593 = vpop.f32.mrf.mxu0
        %v2594 = vadd.f32 %v2361, %v2593
        %v2595 = vpop.f32.mrf.mxu0
        %2596 = vmatprep.mubr.bf16.mxu0 0
        %2597 = vmatmul.mubr.bf16.gmra.mxu0 %v2467
        %v2598 = vpop.f32.mrf.mxu0
        %v2599 = vadd.f32 %v2366, %v2598
        %v2600 = vpop.f32.mrf.mxu0
        %v2601 = vpop.f32.mrf.mxu0
        %v2602 = vadd.f32 %v2369, %v2601
        %v2603 = vpop.f32.mrf.mxu0
        %2604 = vmatprep.mubr.bf16.mxu0 0
        %2605 = vmatmul.mubr.bf16.gmra.mxu0 %v2470
        %v2606 = vpop.f32.mrf.mxu0
        %v2607 = vadd.f32 %v2374, %v2606
        %v2608 = vpop.f32.mrf.mxu0
        %v2609 = vpop.f32.mrf.mxu0
        %v2610 = vadd.f32 %v2377, %v2609
        %v2611 = vpop.f32.mrf.mxu0
        %2612 = vmatprep.mubr.bf16.mxu0 0
        %2613 = vmatmul.mubr.bf16.gmra.mxu0 %v2473
        %v2614 = vpop.f32.mrf.mxu0
        %v2615 = vadd.f32 %v2382, %v2614
        %v2616 = vpop.f32.mrf.mxu0
        %v2617 = vpop.f32.mrf.mxu0
        %v2618 = vadd.f32 %v2385, %v2617
        %v2619 = vpop.f32.mrf.mxu0
        %2620 = vmatprep.mubr.bf16.mxu0 0
        %2621 = vmatmul.mubr.bf16.gmra.mxu0 %v2476
        %v2622 = vpop.f32.mrf.mxu0
        %v2623 = vadd.f32 %v2390, %v2622
        %v2624 = vpop.f32.mrf.mxu0
        %v2625 = vpop.f32.mrf.mxu0
        %v2626 = vadd.f32 %v2393, %v2625
        %v2627 = vpop.f32.mrf.mxu0
        %2628 = vmatprep.mubr.bf16.mxu0 0
        %2629 = vmatmul.mubr.bf16.gmra.mxu0 %v2479
        %v2630 = vpop.f32.mrf.mxu0
        %v2631 = vadd.f32 %v2398, %v2630
        %v2632 = vpop.f32.mrf.mxu0
        %v2633 = vpop.f32.mrf.mxu0
        %v2634 = vadd.f32 %v2401, %v2633
        %v2635 = vpop.f32.mrf.mxu0
        %2636 = vmatprep.mubr.bf16.mxu0 0
        %2637 = vmatmul.mubr.bf16.gmra.mxu0 %v2482
        %v2638 = vpop.f32.mrf.mxu0
        %v2639 = vadd.f32 %v2406, %v2638
        %v2640 = vpop.f32.mrf.mxu0
        %v2641 = vpop.f32.mrf.mxu0
        %v2642 = vadd.f32 %v2409, %v2641
        %v2643 = vpop.f32.mrf.mxu0
        %2644 = vdwg.mxu0
        %v2646 = vlaneseq
        %v2647 = vshrl.u32 %v2646, 7
        %v2648 = vsub.s32 0, %v2647
        %v2649 = vrot.slane %v2208, %v2648
        %v2651 = vadd.f32 %v2519, %v2649
        %v2652 = vadd.f32 %v2522, %v2649
        %v2653 = vadd.f32 %v2527, %v2649
        %v2654 = vadd.f32 %v2530, %v2649
        %v2655 = vadd.f32 %v2535, %v2649
        %v2656 = vadd.f32 %v2538, %v2649
        %v2657 = vadd.f32 %v2543, %v2649
        %v2658 = vadd.f32 %v2546, %v2649
        %v2659 = vadd.f32 %v2551, %v2649
        %v2660 = vadd.f32 %v2554, %v2649
        %v2661 = vadd.f32 %v2559, %v2649
        %v2662 = vadd.f32 %v2562, %v2649
        %v2663 = vadd.f32 %v2567, %v2649
        %v2664 = vadd.f32 %v2570, %v2649
        %v2665 = vadd.f32 %v2575, %v2649
        %v2666 = vadd.f32 %v2578, %v2649
        %v2667 = vadd.f32 %v2583, %v2649
        %v2668 = vadd.f32 %v2586, %v2649
        %v2669 = vadd.f32 %v2591, %v2649
        %v2670 = vadd.f32 %v2594, %v2649
        %v2671 = vadd.f32 %v2599, %v2649
        %v2672 = vadd.f32 %v2602, %v2649
        %v2673 = vadd.f32 %v2607, %v2649
        %v2674 = vadd.f32 %v2610, %v2649
        %v2675 = vadd.f32 %v2615, %v2649
        %v2676 = vadd.f32 %v2618, %v2649
        %v2677 = vadd.f32 %v2623, %v2649
        %v2678 = vadd.f32 %v2626, %v2649
        %v2679 = vadd.f32 %v2631, %v2649
        %v2680 = vadd.f32 %v2634, %v2649
        %v2681 = vadd.f32 %v2639, %v2649
        %v2682 = vadd.f32 %v2642, %v2649
        %v2683 = vmax.f32 %v2651, 0.0
        %v2684 = vmax.f32 %v2652, 0.0
        %v2685 = vmax.f32 %v2653, 0.0
        %v2686 = vmax.f32 %v2654, 0.0
        %v2687 = vmax.f32 %v2655, 0.0
        %v2688 = vmax.f32 %v2656, 0.0
        %v2689 = vmax.f32 %v2657, 0.0
        %v2690 = vmax.f32 %v2658, 0.0
        %v2691 = vmax.f32 %v2659, 0.0
        %v2692 = vmax.f32 %v2660, 0.0
        %v2693 = vmax.f32 %v2661, 0.0
        %v2694 = vmax.f32 %v2662, 0.0
        %v2695 = vmax.f32 %v2663, 0.0
        %v2696 = vmax.f32 %v2664, 0.0
        %v2697 = vmax.f32 %v2665, 0.0
        %v2698 = vmax.f32 %v2666, 0.0
        %v2699 = vmax.f32 %v2667, 0.0
        %v2700 = vmax.f32 %v2668, 0.0
        %v2701 = vmax.f32 %v2669, 0.0
        %v2702 = vmax.f32 %v2670, 0.0
        %v2703 = vmax.f32 %v2671, 0.0
        %v2704 = vmax.f32 %v2672, 0.0
        %v2705 = vmax.f32 %v2673, 0.0
        %v2706 = vmax.f32 %v2674, 0.0
        %v2707 = vmax.f32 %v2675, 0.0
        %v2708 = vmax.f32 %v2676, 0.0
        %v2709 = vmax.f32 %v2677, 0.0
        %v2710 = vmax.f32 %v2678, 0.0
        %v2711 = vmax.f32 %v2679, 0.0
        %v2712 = vmax.f32 %v2680, 0.0
        %v2713 = vmax.f32 %v2681, 0.0
        %v2714 = vmax.f32 %v2682, 0.0
        %v2715 = vld [vmem:[%s13] sm:$0xf]
        %v2716 = vld [vmem:[%s13 + $0x4] sm:$0xf]
        %v2717 = vld [vmem:[%s13 + $0x8] sm:$0xf]
        %v2718 = vld [vmem:[%s13 + $0xc] sm:$0xf]
        %v2719 = vld [vmem:[%s13 + $0x10] sm:$0xf]
        %v2720 = vld [vmem:[%s13 + $0x14] sm:$0xf]
        %v2721 = vld [vmem:[%s13 + $0x18] sm:$0xf]
        %v2722 = vld [vmem:[%s13 + $0x1c] sm:$0xf]
        %v2723 = vld [vmem:[%s14] sm:$0x1]
        %v2724 = vpack.c.bf16 %v2684, %v2683
        %v2725 = vpack.c.bf16 %v2686, %v2685
        %v2726 = vpack.c.bf16 %v2688, %v2687
        %v2727 = vpack.c.bf16 %v2690, %v2689
        %v2728 = vpack.c.bf16 %v2692, %v2691
        %v2729 = vpack.c.bf16 %v2694, %v2693
        %v2730 = vpack.c.bf16 %v2696, %v2695
        %v2731 = vpack.c.bf16 %v2698, %v2697
        %v2732 = vpack.c.bf16 %v2700, %v2699
        %v2733 = vpack.c.bf16 %v2702, %v2701
        %v2734 = vpack.c.bf16 %v2704, %v2703
        %v2735 = vpack.c.bf16 %v2706, %v2705
        %v2736 = vpack.c.bf16 %v2708, %v2707
        %v2737 = vpack.c.bf16 %v2710, %v2709
        %v2738 = vpack.c.bf16 %v2712, %v2711
        %v2739 = vpack.c.bf16 %v2714, %v2713
        %v2741 = vlaneseq
        %v2742 = vshrl.u32 %v2741, 7
        %v2743 = vsub.s32 0, %v2742
        %v2744 = vrot.slane %v2723, %v2743
        %v2754 = vunpack.c.l.b16 %v2715
        %v2755 = vunpack.c.l.b16 %v2716
        %v2756 = vunpack.c.l.b16 %v2717
        %v2757 = vunpack.c.l.b16 %v2718
        %v2758 = vunpack.c.l.b16 %v2719
        %v2759 = vunpack.c.l.b16 %v2720
        %v2760 = vunpack.c.l.b16 %v2721
        %v2761 = vunpack.c.l.b16 %v2722
        %v2762 = vpack.c.b16 %v2755, %v2754
        %v2763 = vpack.c.b16 %v2757, %v2756
        %v2764 = vpack.c.b16 %v2759, %v2758
        %v2765 = vpack.c.b16 %v2761, %v2760
        %v2771 = vsel %vm1358, %v2724, 0
        %v2774 = vsel %vm1358, %v2725, 0
        %v2777 = vsel %vm1358, %v2726, 0
        %v2780 = vsel %vm1358, %v2727, 0
        %v2783 = vsel %vm1358, %v2728, 0
        %v2786 = vsel %vm1358, %v2729, 0
        %v2789 = vsel %vm1358, %v2730, 0
        %v2792 = vsel %vm1358, %v2731, 0
        %v2795 = vsel %vm1358, %v2732, 0
        %v2798 = vsel %vm1358, %v2733, 0
        %v2801 = vsel %vm1358, %v2734, 0
        %v2804 = vsel %vm1358, %v2735, 0
        %v2807 = vsel %vm1358, %v2736, 0
        %v2810 = vsel %vm1358, %v2737, 0
        %v2813 = vsel %vm1358, %v2738, 0
        %v2816 = vsel %vm1358, %v2739, 0
        %2818 = vmatprep.subr.bf16.mxu0 0
        %2819 = vmatpush1.bf16.msra.mxu0 0
        %2820 = vmatprep.subr.bf16.mxu0 0
        %2821 = vmatpush1.bf16.msra.mxu0 0
        %2822 = vmatprep.subr.bf16.mxu0 0
        %2823 = vmatpush1.bf16.msra.mxu0 0
        %2824 = vmatprep.subr.bf16.mxu0 0
        %2825 = vmatpush1.bf16.msra.mxu0 0
        %2826 = vmatprep.subr.bf16.mxu0 0
        %2827 = vmatpush1.bf16.msra.mxu0 %v2765
        %2828 = vmatprep.subr.bf16.mxu0 0
        %2829 = vmatpush1.bf16.msra.mxu0 %v2764
        %2830 = vmatprep.subr.bf16.mxu0 0
        %2831 = vmatpush1.bf16.msra.mxu0 %v2763
        %2832 = vmatprep.subr.bf16.mxu0 0
        %2833 = vmatpush1.bf16.msra.mxu0 %v2762
        %2834 = vmatprep.subr.bf16.mxu0 0
        %2835 = vmatpush2.bf16.msra.mxu0 0
        %2836 = vmatprep.subr.bf16.mxu0 0
        %2837 = vmatpush2.bf16.msra.mxu0 0
        %2838 = vmatprep.subr.bf16.mxu0 0
        %2839 = vmatpush2.bf16.msra.mxu0 0
        %2840 = vmatprep.subr.bf16.mxu0 0
        %2841 = vmatpush2.bf16.msra.mxu0 0
        %2842 = vmatprep.subr.bf16.mxu0 0
        %2843 = vmatpush2.bf16.msra.mxu0 0
        %2844 = vmatprep.subr.bf16.mxu0 0
        %2845 = vmatpush2.bf16.msra.mxu0 0
        %2846 = vmatprep.subr.bf16.mxu0 0
        %2847 = vmatpush2.bf16.msra.mxu0 0
        %2848 = vmatprep.subr.bf16.mxu0 0
        %2849 = vmatpush2.bf16.msra.mxu0 0
        %2850 = vmatprep.mubr.bf16.mxu0 0
        %2851 = vmatmul.mubr.bf16.gmra.mxu0 %v2771
        %v2852 = vpop.f32.mrf.mxu0
        %v2853 = vadd.f32 %v2744, %v2852
        %v2854 = vpop.f32.mrf.mxu0
        %v2855 = vpop.f32.mrf.mxu0
        %v2856 = vadd.f32 %v2744, %v2855
        %v2857 = vpop.f32.mrf.mxu0
        %2858 = vmatprep.mubr.bf16.mxu0 0
        %2859 = vmatmul.mubr.bf16.gmra.mxu0 %v2774
        %v2860 = vpop.f32.mrf.mxu0
        %v2861 = vadd.f32 %v2744, %v2860
        %v2862 = vpop.f32.mrf.mxu0
        %v2863 = vpop.f32.mrf.mxu0
        %v2864 = vadd.f32 %v2744, %v2863
        %v2865 = vpop.f32.mrf.mxu0
        %2866 = vmatprep.mubr.bf16.mxu0 0
        %2867 = vmatmul.mubr.bf16.gmra.mxu0 %v2777
        %v2868 = vpop.f32.mrf.mxu0
        %v2869 = vadd.f32 %v2744, %v2868
        %v2870 = vpop.f32.mrf.mxu0
        %v2871 = vpop.f32.mrf.mxu0
        %v2872 = vadd.f32 %v2744, %v2871
        %v2873 = vpop.f32.mrf.mxu0
        %2874 = vmatprep.mubr.bf16.mxu0 0
        %2875 = vmatmul.mubr.bf16.gmra.mxu0 %v2780
        %v2876 = vpop.f32.mrf.mxu0
        %v2877 = vadd.f32 %v2744, %v2876
        %v2878 = vpop.f32.mrf.mxu0
        %v2879 = vpop.f32.mrf.mxu0
        %v2880 = vadd.f32 %v2744, %v2879
        %v2881 = vpop.f32.mrf.mxu0
        %2882 = vmatprep.mubr.bf16.mxu0 0
        %2883 = vmatmul.mubr.bf16.gmra.mxu0 %v2783
        %v2884 = vpop.f32.mrf.mxu0
        %v2885 = vadd.f32 %v2744, %v2884
        %v2886 = vpop.f32.mrf.mxu0
        %v2887 = vpop.f32.mrf.mxu0
        %v2888 = vadd.f32 %v2744, %v2887
        %v2889 = vpop.f32.mrf.mxu0
        %2890 = vmatprep.mubr.bf16.mxu0 0
        %2891 = vmatmul.mubr.bf16.gmra.mxu0 %v2786
        %v2892 = vpop.f32.mrf.mxu0
        %v2893 = vadd.f32 %v2744, %v2892
        %v2894 = vpop.f32.mrf.mxu0
        %v2895 = vpop.f32.mrf.mxu0
        %v2896 = vadd.f32 %v2744, %v2895
        %v2897 = vpop.f32.mrf.mxu0
        %2898 = vmatprep.mubr.bf16.mxu0 0
        %2899 = vmatmul.mubr.bf16.gmra.mxu0 %v2789
        %v2900 = vpop.f32.mrf.mxu0
        %v2901 = vadd.f32 %v2744, %v2900
        %v2902 = vpop.f32.mrf.mxu0
        %v2903 = vpop.f32.mrf.mxu0
        %v2904 = vadd.f32 %v2744, %v2903
        %v2905 = vpop.f32.mrf.mxu0
        %2906 = vmatprep.mubr.bf16.mxu0 0
        %2907 = vmatmul.mubr.bf16.gmra.mxu0 %v2792
        %v2908 = vpop.f32.mrf.mxu0
        %v2909 = vadd.f32 %v2744, %v2908
        %v2910 = vpop.f32.mrf.mxu0
        %v2911 = vpop.f32.mrf.mxu0
        %v2912 = vadd.f32 %v2744, %v2911
        %v2913 = vpop.f32.mrf.mxu0
        %2914 = vmatprep.mubr.bf16.mxu0 0
        %2915 = vmatmul.mubr.bf16.gmra.mxu0 %v2795
        %v2916 = vpop.f32.mrf.mxu0
        %v2917 = vadd.f32 %v2744, %v2916
        %v2918 = vpop.f32.mrf.mxu0
        %v2919 = vpop.f32.mrf.mxu0
        %v2920 = vadd.f32 %v2744, %v2919
        %v2921 = vpop.f32.mrf.mxu0
        %2922 = vmatprep.mubr.bf16.mxu0 0
        %2923 = vmatmul.mubr.bf16.gmra.mxu0 %v2798
        %v2924 = vpop.f32.mrf.mxu0
        %v2925 = vadd.f32 %v2744, %v2924
        %v2926 = vpop.f32.mrf.mxu0
        %v2927 = vpop.f32.mrf.mxu0
        %v2928 = vadd.f32 %v2744, %v2927
        %v2929 = vpop.f32.mrf.mxu0
        %2930 = vmatprep.mubr.bf16.mxu0 0
        %2931 = vmatmul.mubr.bf16.gmra.mxu0 %v2801
        %v2932 = vpop.f32.mrf.mxu0
        %v2933 = vadd.f32 %v2744, %v2932
        %v2934 = vpop.f32.mrf.mxu0
        %v2935 = vpop.f32.mrf.mxu0
        %v2936 = vadd.f32 %v2744, %v2935
        %v2937 = vpop.f32.mrf.mxu0
        %2938 = vmatprep.mubr.bf16.mxu0 0
        %2939 = vmatmul.mubr.bf16.gmra.mxu0 %v2804
        %v2940 = vpop.f32.mrf.mxu0
        %v2941 = vadd.f32 %v2744, %v2940
        %v2942 = vpop.f32.mrf.mxu0
        %v2943 = vpop.f32.mrf.mxu0
        %v2944 = vadd.f32 %v2744, %v2943
        %v2945 = vpop.f32.mrf.mxu0
        %2946 = vmatprep.mubr.bf16.mxu0 0
        %2947 = vmatmul.mubr.bf16.gmra.mxu0 %v2807
        %v2948 = vpop.f32.mrf.mxu0
        %v2949 = vadd.f32 %v2744, %v2948
        %v2950 = vpop.f32.mrf.mxu0
        %v2951 = vpop.f32.mrf.mxu0
        %v2952 = vadd.f32 %v2744, %v2951
        %v2953 = vpop.f32.mrf.mxu0
        %2954 = vmatprep.mubr.bf16.mxu0 0
        %2955 = vmatmul.mubr.bf16.gmra.mxu0 %v2810
        %v2956 = vpop.f32.mrf.mxu0
        %v2957 = vadd.f32 %v2744, %v2956
        %v2958 = vpop.f32.mrf.mxu0
        %v2959 = vpop.f32.mrf.mxu0
        %v2960 = vadd.f32 %v2744, %v2959
        %v2961 = vpop.f32.mrf.mxu0
        %2962 = vmatprep.mubr.bf16.mxu0 0
        %2963 = vmatmul.mubr.bf16.gmra.mxu0 %v2813
        %v2964 = vpop.f32.mrf.mxu0
        %v2965 = vadd.f32 %v2744, %v2964
        %v2966 = vpop.f32.mrf.mxu0
        %v2967 = vpop.f32.mrf.mxu0
        %v2968 = vadd.f32 %v2744, %v2967
        %v2969 = vpop.f32.mrf.mxu0
        %2970 = vmatprep.mubr.bf16.mxu0 0
        %2971 = vmatmul.mubr.bf16.gmra.mxu0 %v2816
        %v2972 = vpop.f32.mrf.mxu0
        %v2973 = vadd.f32 %v2744, %v2972
        %v2974 = vpop.f32.mrf.mxu0
        %v2975 = vpop.f32.mrf.mxu0
        %v2976 = vadd.f32 %v2744, %v2975
        %v2977 = vpop.f32.mrf.mxu0
        %2978 = vdwg.mxu0
        %v2979 = vmax.f32 %v2853, 0.0
        %v2980 = vmax.f32 %v2856, 0.0
        %v2981 = vmax.f32 %v2861, 0.0
        %v2982 = vmax.f32 %v2864, 0.0
        %v2983 = vmax.f32 %v2869, 0.0
        %v2984 = vmax.f32 %v2872, 0.0
        %v2985 = vmax.f32 %v2877, 0.0
        %v2986 = vmax.f32 %v2880, 0.0
        %v2987 = vmax.f32 %v2885, 0.0
        %v2988 = vmax.f32 %v2888, 0.0
        %v2989 = vmax.f32 %v2893, 0.0
        %v2990 = vmax.f32 %v2896, 0.0
        %v2991 = vmax.f32 %v2901, 0.0
        %v2992 = vmax.f32 %v2904, 0.0
        %v2993 = vmax.f32 %v2909, 0.0
        %v2994 = vmax.f32 %v2912, 0.0
        %v2995 = vmax.f32 %v2917, 0.0
        %v2996 = vmax.f32 %v2920, 0.0
        %v2997 = vmax.f32 %v2925, 0.0
        %v2998 = vmax.f32 %v2928, 0.0
        %v2999 = vmax.f32 %v2933, 0.0
        %v3000 = vmax.f32 %v2936, 0.0
        %v3001 = vmax.f32 %v2941, 0.0
        %v3002 = vmax.f32 %v2944, 0.0
        %v3003 = vmax.f32 %v2949, 0.0
        %v3004 = vmax.f32 %v2952, 0.0
        %v3005 = vmax.f32 %v2957, 0.0
        %v3006 = vmax.f32 %v2960, 0.0
        %v3007 = vmax.f32 %v2965, 0.0
        %v3008 = vmax.f32 %v2968, 0.0
        %v3009 = vmax.f32 %v2973, 0.0
        %v3010 = vmax.f32 %v2976, 0.0
        %v3011 = vld [vmem:[%s15] sm:$0xf]
        %v3012 = vld [vmem:[%s15 + $0x4] sm:$0xf]
        %v3013 = vld [vmem:[%s15 + $0x8] sm:$0xf]
        %v3014 = vld [vmem:[%s15 + $0xc] sm:$0xf]
        %v3015 = vld [vmem:[%s15 + $0x10] sm:$0xf]
        %v3016 = vld [vmem:[%s15 + $0x14] sm:$0xf]
        %v3017 = vld [vmem:[%s15 + $0x18] sm:$0xf]
        %v3018 = vld [vmem:[%s15 + $0x1c] sm:$0xf]
        %v3019 = vld [vmem:[%s16] sm:$0x1]
        %v3020 = vpack.c.bf16 %v2980, %v2979
        %v3021 = vpack.c.bf16 %v2982, %v2981
        %v3022 = vpack.c.bf16 %v2984, %v2983
        %v3023 = vpack.c.bf16 %v2986, %v2985
        %v3024 = vpack.c.bf16 %v2988, %v2987
        %v3025 = vpack.c.bf16 %v2990, %v2989
        %v3026 = vpack.c.bf16 %v2992, %v2991
        %v3027 = vpack.c.bf16 %v2994, %v2993
        %v3028 = vpack.c.bf16 %v2996, %v2995
        %v3029 = vpack.c.bf16 %v2998, %v2997
        %v3030 = vpack.c.bf16 %v3000, %v2999
        %v3031 = vpack.c.bf16 %v3002, %v3001
        %v3032 = vpack.c.bf16 %v3004, %v3003
        %v3033 = vpack.c.bf16 %v3006, %v3005
        %v3034 = vpack.c.bf16 %v3008, %v3007
        %v3035 = vpack.c.bf16 %v3010, %v3009
        %v3037 = vlaneseq
        %v3038 = vshrl.u32 %v3037, 7
        %v3039 = vsub.s32 0, %v3038
        %v3040 = vrot.slane %v3019, %v3039
        %v3050 = vunpack.c.l.b16 %v3011
        %v3051 = vunpack.c.l.b16 %v3012
        %v3052 = vunpack.c.l.b16 %v3013
        %v3053 = vunpack.c.l.b16 %v3014
        %v3054 = vunpack.c.l.b16 %v3015
        %v3055 = vunpack.c.l.b16 %v3016
        %v3056 = vunpack.c.l.b16 %v3017
        %v3057 = vunpack.c.l.b16 %v3018
        %v3058 = vpack.c.b16 %v3051, %v3050
        %v3059 = vpack.c.b16 %v3053, %v3052
        %v3060 = vpack.c.b16 %v3055, %v3054
        %v3061 = vpack.c.b16 %v3057, %v3056
        %v3067 = vsel %vm1358, %v3020, 0
        %v3070 = vsel %vm1358, %v3021, 0
        %v3073 = vsel %vm1358, %v3022, 0
        %v3076 = vsel %vm1358, %v3023, 0
        %v3079 = vsel %vm1358, %v3024, 0
        %v3082 = vsel %vm1358, %v3025, 0
        %v3085 = vsel %vm1358, %v3026, 0
        %v3088 = vsel %vm1358, %v3027, 0
        %v3091 = vsel %vm1358, %v3028, 0
        %v3094 = vsel %vm1358, %v3029, 0
        %v3097 = vsel %vm1358, %v3030, 0
        %v3100 = vsel %vm1358, %v3031, 0
        %v3103 = vsel %vm1358, %v3032, 0
        %v3106 = vsel %vm1358, %v3033, 0
        %v3109 = vsel %vm1358, %v3034, 0
        %v3112 = vsel %vm1358, %v3035, 0
        %3114 = vmatprep.subr.bf16.mxu0 0
        %3115 = vmatpush1.bf16.msra.mxu0 0
        %3116 = vmatprep.subr.bf16.mxu0 0
        %3117 = vmatpush1.bf16.msra.mxu0 0
        %3118 = vmatprep.subr.bf16.mxu0 0
        %3119 = vmatpush1.bf16.msra.mxu0 0
        %3120 = vmatprep.subr.bf16.mxu0 0
        %3121 = vmatpush1.bf16.msra.mxu0 0
        %3122 = vmatprep.subr.bf16.mxu0 0
        %3123 = vmatpush1.bf16.msra.mxu0 %v3061
        %3124 = vmatprep.subr.bf16.mxu0 0
        %3125 = vmatpush1.bf16.msra.mxu0 %v3060
        %3126 = vmatprep.subr.bf16.mxu0 0
        %3127 = vmatpush1.bf16.msra.mxu0 %v3059
        %3128 = vmatprep.subr.bf16.mxu0 0
        %3129 = vmatpush1.bf16.msra.mxu0 %v3058
        %3130 = vmatprep.subr.bf16.mxu0 0
        %3131 = vmatpush2.bf16.msra.mxu0 0
        %3132 = vmatprep.subr.bf16.mxu0 0
        %3133 = vmatpush2.bf16.msra.mxu0 0
        %3134 = vmatprep.subr.bf16.mxu0 0
        %3135 = vmatpush2.bf16.msra.mxu0 0
        %3136 = vmatprep.subr.bf16.mxu0 0
        %3137 = vmatpush2.bf16.msra.mxu0 0
        %3138 = vmatprep.subr.bf16.mxu0 0
        %3139 = vmatpush2.bf16.msra.mxu0 0
        %3140 = vmatprep.subr.bf16.mxu0 0
        %3141 = vmatpush2.bf16.msra.mxu0 0
        %3142 = vmatprep.subr.bf16.mxu0 0
        %3143 = vmatpush2.bf16.msra.mxu0 0
        %3144 = vmatprep.subr.bf16.mxu0 0
        %3145 = vmatpush2.bf16.msra.mxu0 0
        %3146 = vmatprep.mubr.bf16.mxu0 0
        %3147 = vmatmul.mubr.bf16.gmra.mxu0 %v3067
        %v3148 = vpop.f32.mrf.mxu0
        %v3149 = vadd.f32 %v3040, %v3148
        %v3150 = vpop.f32.mrf.mxu0
        %v3151 = vpop.f32.mrf.mxu0
        %v3152 = vadd.f32 %v3040, %v3151
        %v3153 = vpop.f32.mrf.mxu0
        %3154 = vmatprep.mubr.bf16.mxu0 0
        %3155 = vmatmul.mubr.bf16.gmra.mxu0 %v3070
        %v3156 = vpop.f32.mrf.mxu0
        %v3157 = vadd.f32 %v3040, %v3156
        %v3158 = vpop.f32.mrf.mxu0
        %v3159 = vpop.f32.mrf.mxu0
        %v3160 = vadd.f32 %v3040, %v3159
        %v3161 = vpop.f32.mrf.mxu0
        %3162 = vmatprep.mubr.bf16.mxu0 0
        %3163 = vmatmul.mubr.bf16.gmra.mxu0 %v3073
        %v3164 = vpop.f32.mrf.mxu0
        %v3165 = vadd.f32 %v3040, %v3164
        %v3166 = vpop.f32.mrf.mxu0
        %v3167 = vpop.f32.mrf.mxu0
        %v3168 = vadd.f32 %v3040, %v3167
        %v3169 = vpop.f32.mrf.mxu0
        %3170 = vmatprep.mubr.bf16.mxu0 0
        %3171 = vmatmul.mubr.bf16.gmra.mxu0 %v3076
        %v3172 = vpop.f32.mrf.mxu0
        %v3173 = vadd.f32 %v3040, %v3172
        %v3174 = vpop.f32.mrf.mxu0
        %v3175 = vpop.f32.mrf.mxu0
        %v3176 = vadd.f32 %v3040, %v3175
        %v3177 = vpop.f32.mrf.mxu0
        %3178 = vmatprep.mubr.bf16.mxu0 0
        %3179 = vmatmul.mubr.bf16.gmra.mxu0 %v3079
        %v3180 = vpop.f32.mrf.mxu0
        %v3181 = vadd.f32 %v3040, %v3180
        %v3182 = vpop.f32.mrf.mxu0
        %v3183 = vpop.f32.mrf.mxu0
        %v3184 = vadd.f32 %v3040, %v3183
        %v3185 = vpop.f32.mrf.mxu0
        %3186 = vmatprep.mubr.bf16.mxu0 0
        %3187 = vmatmul.mubr.bf16.gmra.mxu0 %v3082
        %v3188 = vpop.f32.mrf.mxu0
        %v3189 = vadd.f32 %v3040, %v3188
        %v3190 = vpop.f32.mrf.mxu0
        %v3191 = vpop.f32.mrf.mxu0
        %v3192 = vadd.f32 %v3040, %v3191
        %v3193 = vpop.f32.mrf.mxu0
        %3194 = vmatprep.mubr.bf16.mxu0 0
        %3195 = vmatmul.mubr.bf16.gmra.mxu0 %v3085
        %v3196 = vpop.f32.mrf.mxu0
        %v3197 = vadd.f32 %v3040, %v3196
        %v3198 = vpop.f32.mrf.mxu0
        %v3199 = vpop.f32.mrf.mxu0
        %v3200 = vadd.f32 %v3040, %v3199
        %v3201 = vpop.f32.mrf.mxu0
        %3202 = vmatprep.mubr.bf16.mxu0 0
        %3203 = vmatmul.mubr.bf16.gmra.mxu0 %v3088
        %v3204 = vpop.f32.mrf.mxu0
        %v3205 = vadd.f32 %v3040, %v3204
        %v3206 = vpop.f32.mrf.mxu0
        %v3207 = vpop.f32.mrf.mxu0
        %v3208 = vadd.f32 %v3040, %v3207
        %v3209 = vpop.f32.mrf.mxu0
        %3210 = vmatprep.mubr.bf16.mxu0 0
        %3211 = vmatmul.mubr.bf16.gmra.mxu0 %v3091
        %v3212 = vpop.f32.mrf.mxu0
        %v3213 = vadd.f32 %v3040, %v3212
        %v3214 = vpop.f32.mrf.mxu0
        %v3215 = vpop.f32.mrf.mxu0
        %v3216 = vadd.f32 %v3040, %v3215
        %v3217 = vpop.f32.mrf.mxu0
        %3218 = vmatprep.mubr.bf16.mxu0 0
        %3219 = vmatmul.mubr.bf16.gmra.mxu0 %v3094
        %v3220 = vpop.f32.mrf.mxu0
        %v3221 = vadd.f32 %v3040, %v3220
        %v3222 = vpop.f32.mrf.mxu0
        %v3223 = vpop.f32.mrf.mxu0
        %v3224 = vadd.f32 %v3040, %v3223
        %v3225 = vpop.f32.mrf.mxu0
        %3226 = vmatprep.mubr.bf16.mxu0 0
        %3227 = vmatmul.mubr.bf16.gmra.mxu0 %v3097
        %v3228 = vpop.f32.mrf.mxu0
        %v3229 = vadd.f32 %v3040, %v3228
        %v3230 = vpop.f32.mrf.mxu0
        %v3231 = vpop.f32.mrf.mxu0
        %v3232 = vadd.f32 %v3040, %v3231
        %v3233 = vpop.f32.mrf.mxu0
        %3234 = vmatprep.mubr.bf16.mxu0 0
        %3235 = vmatmul.mubr.bf16.gmra.mxu0 %v3100
        %v3236 = vpop.f32.mrf.mxu0
        %v3237 = vadd.f32 %v3040, %v3236
        %v3238 = vpop.f32.mrf.mxu0
        %v3239 = vpop.f32.mrf.mxu0
        %v3240 = vadd.f32 %v3040, %v3239
        %v3241 = vpop.f32.mrf.mxu0
        %3242 = vmatprep.mubr.bf16.mxu0 0
        %3243 = vmatmul.mubr.bf16.gmra.mxu0 %v3103
        %v3244 = vpop.f32.mrf.mxu0
        %v3245 = vadd.f32 %v3040, %v3244
        %v3246 = vpop.f32.mrf.mxu0
        %v3247 = vpop.f32.mrf.mxu0
        %v3248 = vadd.f32 %v3040, %v3247
        %v3249 = vpop.f32.mrf.mxu0
        %3250 = vmatprep.mubr.bf16.mxu0 0
        %3251 = vmatmul.mubr.bf16.gmra.mxu0 %v3106
        %v3252 = vpop.f32.mrf.mxu0
        %v3253 = vadd.f32 %v3040, %v3252
        %v3254 = vpop.f32.mrf.mxu0
        %v3255 = vpop.f32.mrf.mxu0
        %v3256 = vadd.f32 %v3040, %v3255
        %v3257 = vpop.f32.mrf.mxu0
        %3258 = vmatprep.mubr.bf16.mxu0 0
        %3259 = vmatmul.mubr.bf16.gmra.mxu0 %v3109
        %v3260 = vpop.f32.mrf.mxu0
        %v3261 = vadd.f32 %v3040, %v3260
        %v3262 = vpop.f32.mrf.mxu0
        %v3263 = vpop.f32.mrf.mxu0
        %v3264 = vadd.f32 %v3040, %v3263
        %v3265 = vpop.f32.mrf.mxu0
        %3266 = vmatprep.mubr.bf16.mxu0 0
        %3267 = vmatmul.mubr.bf16.gmra.mxu0 %v3112
        %v3268 = vpop.f32.mrf.mxu0
        %v3269 = vadd.f32 %v3040, %v3268
        %v3270 = vpop.f32.mrf.mxu0
        %v3271 = vpop.f32.mrf.mxu0
        %v3272 = vadd.f32 %v3040, %v3271
        %v3273 = vpop.f32.mrf.mxu0
        %3274 = vdwg.mxu0
        %v3275 = vmax.f32 %v3149, 0.0
        %v3276 = vmax.f32 %v3152, 0.0
        %v3277 = vmax.f32 %v3157, 0.0
        %v3278 = vmax.f32 %v3160, 0.0
        %v3279 = vmax.f32 %v3165, 0.0
        %v3280 = vmax.f32 %v3168, 0.0
        %v3281 = vmax.f32 %v3173, 0.0
        %v3282 = vmax.f32 %v3176, 0.0
        %v3283 = vmax.f32 %v3181, 0.0
        %v3284 = vmax.f32 %v3184, 0.0
        %v3285 = vmax.f32 %v3189, 0.0
        %v3286 = vmax.f32 %v3192, 0.0
        %v3287 = vmax.f32 %v3197, 0.0
        %v3288 = vmax.f32 %v3200, 0.0
        %v3289 = vmax.f32 %v3205, 0.0
        %v3290 = vmax.f32 %v3208, 0.0
        %v3291 = vmax.f32 %v3213, 0.0
        %v3292 = vmax.f32 %v3216, 0.0
        %v3293 = vmax.f32 %v3221, 0.0
        %v3294 = vmax.f32 %v3224, 0.0
        %v3295 = vmax.f32 %v3229, 0.0
        %v3296 = vmax.f32 %v3232, 0.0
        %v3297 = vmax.f32 %v3237, 0.0
        %v3298 = vmax.f32 %v3240, 0.0
        %v3299 = vmax.f32 %v3245, 0.0
        %v3300 = vmax.f32 %v3248, 0.0
        %v3301 = vmax.f32 %v3253, 0.0
        %v3302 = vmax.f32 %v3256, 0.0
        %v3303 = vmax.f32 %v3261, 0.0
        %v3304 = vmax.f32 %v3264, 0.0
        %v3305 = vmax.f32 %v3269, 0.0
        %v3306 = vmax.f32 %v3272, 0.0
        %v3307 = vld [vmem:[%s17] sm:$0xf]
        %v3308 = vld [vmem:[%s17 + $0x4] sm:$0xf]
        %v3309 = vld [vmem:[%s17 + $0x8] sm:$0xf]
        %v3310 = vld [vmem:[%s17 + $0xc] sm:$0xf]
        %v3311 = vld [vmem:[%s17 + $0x10] sm:$0xf]
        %v3312 = vld [vmem:[%s17 + $0x14] sm:$0xf]
        %v3313 = vld [vmem:[%s17 + $0x18] sm:$0xf]
        %v3314 = vld [vmem:[%s17 + $0x1c] sm:$0xf]
        %v3315 = vld [vmem:[%s18] sm:$0x1]
        %v3316 = vpack.c.bf16 %v3276, %v3275
        %v3317 = vpack.c.bf16 %v3278, %v3277
        %v3318 = vpack.c.bf16 %v3280, %v3279
        %v3319 = vpack.c.bf16 %v3282, %v3281
        %v3320 = vpack.c.bf16 %v3284, %v3283
        %v3321 = vpack.c.bf16 %v3286, %v3285
        %v3322 = vpack.c.bf16 %v3288, %v3287
        %v3323 = vpack.c.bf16 %v3290, %v3289
        %v3324 = vpack.c.bf16 %v3292, %v3291
        %v3325 = vpack.c.bf16 %v3294, %v3293
        %v3326 = vpack.c.bf16 %v3296, %v3295
        %v3327 = vpack.c.bf16 %v3298, %v3297
        %v3328 = vpack.c.bf16 %v3300, %v3299
        %v3329 = vpack.c.bf16 %v3302, %v3301
        %v3330 = vpack.c.bf16 %v3304, %v3303
        %v3331 = vpack.c.bf16 %v3306, %v3305
        %v3333 = vlaneseq
        %v3334 = vshrl.u32 %v3333, 7
        %v3335 = vsub.s32 0, %v3334
        %v3336 = vrot.slane %v3315, %v3335
        %v3346 = vunpack.c.l.b16 %v3307
        %v3347 = vunpack.c.l.b16 %v3308
        %v3348 = vunpack.c.l.b16 %v3309
        %v3349 = vunpack.c.l.b16 %v3310
        %v3350 = vunpack.c.l.b16 %v3311
        %v3351 = vunpack.c.l.b16 %v3312
        %v3352 = vunpack.c.l.b16 %v3313
        %v3353 = vunpack.c.l.b16 %v3314
        %v3354 = vpack.c.b16 %v3347, %v3346
        %v3355 = vpack.c.b16 %v3349, %v3348
        %v3356 = vpack.c.b16 %v3351, %v3350
        %v3357 = vpack.c.b16 %v3353, %v3352
        %v3363 = vsel %vm1358, %v3316, 0
        %v3366 = vsel %vm1358, %v3317, 0
        %v3369 = vsel %vm1358, %v3318, 0
        %v3372 = vsel %vm1358, %v3319, 0
        %v3375 = vsel %vm1358, %v3320, 0
        %v3378 = vsel %vm1358, %v3321, 0
        %v3381 = vsel %vm1358, %v3322, 0
        %v3384 = vsel %vm1358, %v3323, 0
        %v3387 = vsel %vm1358, %v3324, 0
        %v3390 = vsel %vm1358, %v3325, 0
        %v3393 = vsel %vm1358, %v3326, 0
        %v3396 = vsel %vm1358, %v3327, 0
        %v3399 = vsel %vm1358, %v3328, 0
        %v3402 = vsel %vm1358, %v3329, 0
        %v3405 = vsel %vm1358, %v3330, 0
        %v3408 = vsel %vm1358, %v3331, 0
        %3410 = vmatprep.subr.bf16.mxu0 0
        %3411 = vmatpush1.bf16.msra.mxu0 0
        %3412 = vmatprep.subr.bf16.mxu0 0
        %3413 = vmatpush1.bf16.msra.mxu0 0
        %3414 = vmatprep.subr.bf16.mxu0 0
        %3415 = vmatpush1.bf16.msra.mxu0 0
        %3416 = vmatprep.subr.bf16.mxu0 0
        %3417 = vmatpush1.bf16.msra.mxu0 0
        %3418 = vmatprep.subr.bf16.mxu0 0
        %3419 = vmatpush1.bf16.msra.mxu0 %v3357
        %3420 = vmatprep.subr.bf16.mxu0 0
        %3421 = vmatpush1.bf16.msra.mxu0 %v3356
        %3422 = vmatprep.subr.bf16.mxu0 0
        %3423 = vmatpush1.bf16.msra.mxu0 %v3355
        %3424 = vmatprep.subr.bf16.mxu0 0
        %3425 = vmatpush1.bf16.msra.mxu0 %v3354
        %3426 = vmatprep.subr.bf16.mxu0 0
        %3427 = vmatpush2.bf16.msra.mxu0 0
        %3428 = vmatprep.subr.bf16.mxu0 0
        %3429 = vmatpush2.bf16.msra.mxu0 0
        %3430 = vmatprep.subr.bf16.mxu0 0
        %3431 = vmatpush2.bf16.msra.mxu0 0
        %3432 = vmatprep.subr.bf16.mxu0 0
        %3433 = vmatpush2.bf16.msra.mxu0 0
        %3434 = vmatprep.subr.bf16.mxu0 0
        %3435 = vmatpush2.bf16.msra.mxu0 0
        %3436 = vmatprep.subr.bf16.mxu0 0
        %3437 = vmatpush2.bf16.msra.mxu0 0
        %3438 = vmatprep.subr.bf16.mxu0 0
        %3439 = vmatpush2.bf16.msra.mxu0 0
        %3440 = vmatprep.subr.bf16.mxu0 0
        %3441 = vmatpush2.bf16.msra.mxu0 0
        %3442 = vmatprep.mubr.bf16.mxu0 0
        %3443 = vmatmul.mubr.bf16.gmra.mxu0 %v3363
        %v3444 = vpop.f32.mrf.mxu0
        %v3445 = vadd.f32 %v3336, %v3444
        %v3446 = vpop.f32.mrf.mxu0
        %v3447 = vpop.f32.mrf.mxu0
        %v3448 = vadd.f32 %v3336, %v3447
        %v3449 = vpop.f32.mrf.mxu0
        %3450 = vmatprep.mubr.bf16.mxu0 0
        %3451 = vmatmul.mubr.bf16.gmra.mxu0 %v3366
        %v3452 = vpop.f32.mrf.mxu0
        %v3453 = vadd.f32 %v3336, %v3452
        %v3454 = vpop.f32.mrf.mxu0
        %v3455 = vpop.f32.mrf.mxu0
        %v3456 = vadd.f32 %v3336, %v3455
        %v3457 = vpop.f32.mrf.mxu0
        %3458 = vmatprep.mubr.bf16.mxu0 0
        %3459 = vmatmul.mubr.bf16.gmra.mxu0 %v3369
        %v3460 = vpop.f32.mrf.mxu0
        %v3461 = vadd.f32 %v3336, %v3460
        %v3462 = vpop.f32.mrf.mxu0
        %v3463 = vpop.f32.mrf.mxu0
        %v3464 = vadd.f32 %v3336, %v3463
        %v3465 = vpop.f32.mrf.mxu0
        %3466 = vmatprep.mubr.bf16.mxu0 0
        %3467 = vmatmul.mubr.bf16.gmra.mxu0 %v3372
        %v3468 = vpop.f32.mrf.mxu0
        %v3469 = vadd.f32 %v3336, %v3468
        %v3470 = vpop.f32.mrf.mxu0
        %v3471 = vpop.f32.mrf.mxu0
        %v3472 = vadd.f32 %v3336, %v3471
        %v3473 = vpop.f32.mrf.mxu0
        %3474 = vmatprep.mubr.bf16.mxu0 0
        %3475 = vmatmul.mubr.bf16.gmra.mxu0 %v3375
        %v3476 = vpop.f32.mrf.mxu0
        %v3477 = vadd.f32 %v3336, %v3476
        %v3478 = vpop.f32.mrf.mxu0
        %v3479 = vpop.f32.mrf.mxu0
        %v3480 = vadd.f32 %v3336, %v3479
        %v3481 = vpop.f32.mrf.mxu0
        %3482 = vmatprep.mubr.bf16.mxu0 0
        %3483 = vmatmul.mubr.bf16.gmra.mxu0 %v3378
        %v3484 = vpop.f32.mrf.mxu0
        %v3485 = vadd.f32 %v3336, %v3484
        %v3486 = vpop.f32.mrf.mxu0
        %v3487 = vpop.f32.mrf.mxu0
        %v3488 = vadd.f32 %v3336, %v3487
        %v3489 = vpop.f32.mrf.mxu0
        %3490 = vmatprep.mubr.bf16.mxu0 0
        %3491 = vmatmul.mubr.bf16.gmra.mxu0 %v3381
        %v3492 = vpop.f32.mrf.mxu0
        %v3493 = vadd.f32 %v3336, %v3492
        %v3494 = vpop.f32.mrf.mxu0
        %v3495 = vpop.f32.mrf.mxu0
        %v3496 = vadd.f32 %v3336, %v3495
        %v3497 = vpop.f32.mrf.mxu0
        %3498 = vmatprep.mubr.bf16.mxu0 0
        %3499 = vmatmul.mubr.bf16.gmra.mxu0 %v3384
        %v3500 = vpop.f32.mrf.mxu0
        %v3501 = vadd.f32 %v3336, %v3500
        %v3502 = vpop.f32.mrf.mxu0
        %v3503 = vpop.f32.mrf.mxu0
        %v3504 = vadd.f32 %v3336, %v3503
        %v3505 = vpop.f32.mrf.mxu0
        %3506 = vmatprep.mubr.bf16.mxu0 0
        %3507 = vmatmul.mubr.bf16.gmra.mxu0 %v3387
        %v3508 = vpop.f32.mrf.mxu0
        %v3509 = vadd.f32 %v3336, %v3508
        %v3510 = vpop.f32.mrf.mxu0
        %v3511 = vpop.f32.mrf.mxu0
        %v3512 = vadd.f32 %v3336, %v3511
        %v3513 = vpop.f32.mrf.mxu0
        %3514 = vmatprep.mubr.bf16.mxu0 0
        %3515 = vmatmul.mubr.bf16.gmra.mxu0 %v3390
        %v3516 = vpop.f32.mrf.mxu0
        %v3517 = vadd.f32 %v3336, %v3516
        %v3518 = vpop.f32.mrf.mxu0
        %v3519 = vpop.f32.mrf.mxu0
        %v3520 = vadd.f32 %v3336, %v3519
        %v3521 = vpop.f32.mrf.mxu0
        %3522 = vmatprep.mubr.bf16.mxu0 0
        %3523 = vmatmul.mubr.bf16.gmra.mxu0 %v3393
        %v3524 = vpop.f32.mrf.mxu0
        %v3525 = vadd.f32 %v3336, %v3524
        %v3526 = vpop.f32.mrf.mxu0
        %v3527 = vpop.f32.mrf.mxu0
        %v3528 = vadd.f32 %v3336, %v3527
        %v3529 = vpop.f32.mrf.mxu0
        %3530 = vmatprep.mubr.bf16.mxu0 0
        %3531 = vmatmul.mubr.bf16.gmra.mxu0 %v3396
        %v3532 = vpop.f32.mrf.mxu0
        %v3533 = vadd.f32 %v3336, %v3532
        %v3534 = vpop.f32.mrf.mxu0
        %v3535 = vpop.f32.mrf.mxu0
        %v3536 = vadd.f32 %v3336, %v3535
        %v3537 = vpop.f32.mrf.mxu0
        %3538 = vmatprep.mubr.bf16.mxu0 0
        %3539 = vmatmul.mubr.bf16.gmra.mxu0 %v3399
        %v3540 = vpop.f32.mrf.mxu0
        %v3541 = vadd.f32 %v3336, %v3540
        %v3542 = vpop.f32.mrf.mxu0
        %v3543 = vpop.f32.mrf.mxu0
        %v3544 = vadd.f32 %v3336, %v3543
        %v3545 = vpop.f32.mrf.mxu0
        %3546 = vmatprep.mubr.bf16.mxu0 0
        %3547 = vmatmul.mubr.bf16.gmra.mxu0 %v3402
        %v3548 = vpop.f32.mrf.mxu0
        %v3549 = vadd.f32 %v3336, %v3548
        %v3550 = vpop.f32.mrf.mxu0
        %v3551 = vpop.f32.mrf.mxu0
        %v3552 = vadd.f32 %v3336, %v3551
        %v3553 = vpop.f32.mrf.mxu0
        %3554 = vmatprep.mubr.bf16.mxu0 0
        %3555 = vmatmul.mubr.bf16.gmra.mxu0 %v3405
        %v3556 = vpop.f32.mrf.mxu0
        %v3557 = vadd.f32 %v3336, %v3556
        %v3558 = vpop.f32.mrf.mxu0
        %v3559 = vpop.f32.mrf.mxu0
        %v3560 = vadd.f32 %v3336, %v3559
        %v3561 = vpop.f32.mrf.mxu0
        %3562 = vmatprep.mubr.bf16.mxu0 0
        %3563 = vmatmul.mubr.bf16.gmra.mxu0 %v3408
        %v3564 = vpop.f32.mrf.mxu0
        %v3565 = vadd.f32 %v3336, %v3564
        %v3566 = vpop.f32.mrf.mxu0
        %v3567 = vpop.f32.mrf.mxu0
        %v3568 = vadd.f32 %v3336, %v3567
        %v3569 = vpop.f32.mrf.mxu0
        %3570 = vdwg.mxu0
        %v3571 = vmax.f32 %v3445, 0.0
        %v3572 = vmax.f32 %v3448, 0.0
        %v3573 = vmax.f32 %v3453, 0.0
        %v3574 = vmax.f32 %v3456, 0.0
        %v3575 = vmax.f32 %v3461, 0.0
        %v3576 = vmax.f32 %v3464, 0.0
        %v3577 = vmax.f32 %v3469, 0.0
        %v3578 = vmax.f32 %v3472, 0.0
        %v3579 = vmax.f32 %v3477, 0.0
        %v3580 = vmax.f32 %v3480, 0.0
        %v3581 = vmax.f32 %v3485, 0.0
        %v3582 = vmax.f32 %v3488, 0.0
        %v3583 = vmax.f32 %v3493, 0.0
        %v3584 = vmax.f32 %v3496, 0.0
        %v3585 = vmax.f32 %v3501, 0.0
        %v3586 = vmax.f32 %v3504, 0.0
        %v3587 = vmax.f32 %v3509, 0.0
        %v3588 = vmax.f32 %v3512, 0.0
        %v3589 = vmax.f32 %v3517, 0.0
        %v3590 = vmax.f32 %v3520, 0.0
        %v3591 = vmax.f32 %v3525, 0.0
        %v3592 = vmax.f32 %v3528, 0.0
        %v3593 = vmax.f32 %v3533, 0.0
        %v3594 = vmax.f32 %v3536, 0.0
        %v3595 = vmax.f32 %v3541, 0.0
        %v3596 = vmax.f32 %v3544, 0.0
        %v3597 = vmax.f32 %v3549, 0.0
        %v3598 = vmax.f32 %v3552, 0.0
        %v3599 = vmax.f32 %v3557, 0.0
        %v3600 = vmax.f32 %v3560, 0.0
        %v3601 = vmax.f32 %v3565, 0.0
        %v3602 = vmax.f32 %v3568, 0.0
        %v3603 = vld [vmem:[%s19] sm:$0xf]
        %v3604 = vld [vmem:[%s19 + $0x4] sm:$0xf]
        %v3605 = vld [vmem:[%s19 + $0x8] sm:$0xf]
        %v3606 = vld [vmem:[%s19 + $0xc] sm:$0xf]
        %v3607 = vld [vmem:[%s19 + $0x10] sm:$0xf]
        %v3608 = vld [vmem:[%s19 + $0x14] sm:$0xf]
        %v3609 = vld [vmem:[%s19 + $0x18] sm:$0xf]
        %v3610 = vld [vmem:[%s19 + $0x1c] sm:$0xf]
        %v3611 = vld [vmem:[%s20] sm:$0x1]
        %v3612 = vld [vmem:[%s21] sm:$0xf]
        %v3613 = vld [vmem:[%s21 + $0x4] sm:$0xf]
        %v3614 = vld [vmem:[%s21 + $0x8] sm:$0xf]
        %v3615 = vld [vmem:[%s21 + $0xc] sm:$0xf]
        %v3616 = vld [vmem:[%s21 + $0x10] sm:$0xf]
        %v3617 = vld [vmem:[%s21 + $0x14] sm:$0xf]
        %v3618 = vld [vmem:[%s21 + $0x18] sm:$0xf]
        %v3619 = vld [vmem:[%s21 + $0x1c] sm:$0xf]
        %v3620 = vld [vmem:[#allocation2] sm:$0x1]
        %v3621 = vpack.c.bf16 %v3572, %v3571
        %v3622 = vpack.c.bf16 %v3574, %v3573
        %v3623 = vpack.c.bf16 %v3576, %v3575
        %v3624 = vpack.c.bf16 %v3578, %v3577
        %v3625 = vpack.c.bf16 %v3580, %v3579
        %v3626 = vpack.c.bf16 %v3582, %v3581
        %v3627 = vpack.c.bf16 %v3584, %v3583
        %v3628 = vpack.c.bf16 %v3586, %v3585
        %v3629 = vpack.c.bf16 %v3588, %v3587
        %v3630 = vpack.c.bf16 %v3590, %v3589
        %v3631 = vpack.c.bf16 %v3592, %v3591
        %v3632 = vpack.c.bf16 %v3594, %v3593
        %v3633 = vpack.c.bf16 %v3596, %v3595
        %v3634 = vpack.c.bf16 %v3598, %v3597
        %v3635 = vpack.c.bf16 %v3600, %v3599
        %v3636 = vpack.c.bf16 %v3602, %v3601
        %v3638 = vlaneseq
        %v3639 = vshrl.u32 %v3638, 7
        %v3640 = vsub.s32 0, %v3639
        %v3641 = vrot.slane %v3611, %v3640
        %v3651 = vunpack.c.l.b16 %v3603
        %v3652 = vunpack.c.l.b16 %v3604
        %v3653 = vunpack.c.l.b16 %v3605
        %v3654 = vunpack.c.l.b16 %v3606
        %v3655 = vunpack.c.l.b16 %v3607
        %v3656 = vunpack.c.l.b16 %v3608
        %v3657 = vunpack.c.l.b16 %v3609
        %v3658 = vunpack.c.l.b16 %v3610
        %v3659 = vpack.c.b16 %v3652, %v3651
        %v3660 = vpack.c.b16 %v3654, %v3653
        %v3661 = vpack.c.b16 %v3656, %v3655
        %v3662 = vpack.c.b16 %v3658, %v3657
        %v3668 = vsel %vm1358, %v3621, 0
        %v3671 = vsel %vm1358, %v3622, 0
        %v3674 = vsel %vm1358, %v3623, 0
        %v3677 = vsel %vm1358, %v3624, 0
        %v3680 = vsel %vm1358, %v3625, 0
        %v3683 = vsel %vm1358, %v3626, 0
        %v3686 = vsel %vm1358, %v3627, 0
        %v3689 = vsel %vm1358, %v3628, 0
        %v3692 = vsel %vm1358, %v3629, 0
        %v3695 = vsel %vm1358, %v3630, 0
        %v3698 = vsel %vm1358, %v3631, 0
        %v3701 = vsel %vm1358, %v3632, 0
        %v3704 = vsel %vm1358, %v3633, 0
        %v3707 = vsel %vm1358, %v3634, 0
        %v3710 = vsel %vm1358, %v3635, 0
        %v3713 = vsel %vm1358, %v3636, 0
        %3715 = vmatprep.subr.bf16.mxu0 0
        %3716 = vmatpush1.bf16.msra.mxu0 0
        %3717 = vmatprep.subr.bf16.mxu0 0
        %3718 = vmatpush1.bf16.msra.mxu0 0
        %3719 = vmatprep.subr.bf16.mxu0 0
        %3720 = vmatpush1.bf16.msra.mxu0 0
        %3721 = vmatprep.subr.bf16.mxu0 0
        %3722 = vmatpush1.bf16.msra.mxu0 0
        %3723 = vmatprep.subr.bf16.mxu0 0
        %3724 = vmatpush1.bf16.msra.mxu0 %v3662
        %3725 = vmatprep.subr.bf16.mxu0 0
        %3726 = vmatpush1.bf16.msra.mxu0 %v3661
        %3727 = vmatprep.subr.bf16.mxu0 0
        %3728 = vmatpush1.bf16.msra.mxu0 %v3660
        %3729 = vmatprep.subr.bf16.mxu0 0
        %3730 = vmatpush1.bf16.msra.mxu0 %v3659
        %3731 = vmatprep.subr.bf16.mxu0 0
        %3732 = vmatpush2.bf16.msra.mxu0 0
        %3733 = vmatprep.subr.bf16.mxu0 0
        %3734 = vmatpush2.bf16.msra.mxu0 0
        %3735 = vmatprep.subr.bf16.mxu0 0
        %3736 = vmatpush2.bf16.msra.mxu0 0
        %3737 = vmatprep.subr.bf16.mxu0 0
        %3738 = vmatpush2.bf16.msra.mxu0 0
        %3739 = vmatprep.subr.bf16.mxu0 0
        %3740 = vmatpush2.bf16.msra.mxu0 0
        %3741 = vmatprep.subr.bf16.mxu0 0
        %3742 = vmatpush2.bf16.msra.mxu0 0
        %3743 = vmatprep.subr.bf16.mxu0 0
        %3744 = vmatpush2.bf16.msra.mxu0 0
        %3745 = vmatprep.subr.bf16.mxu0 0
        %3746 = vmatpush2.bf16.msra.mxu0 0
        %3747 = vmatprep.mubr.bf16.mxu0 0
        %3748 = vmatmul.mubr.bf16.gmra.mxu0 %v3668
        %v3749 = vpop.f32.mrf.mxu0
        %v3750 = vadd.f32 %v3641, %v3749
        %v3751 = vpop.f32.mrf.mxu0
        %v3752 = vpop.f32.mrf.mxu0
        %v3753 = vadd.f32 %v3641, %v3752
        %v3754 = vpop.f32.mrf.mxu0
        %3755 = vmatprep.mubr.bf16.mxu0 0
        %3756 = vmatmul.mubr.bf16.gmra.mxu0 %v3671
        %v3757 = vpop.f32.mrf.mxu0
        %v3758 = vadd.f32 %v3641, %v3757
        %v3759 = vpop.f32.mrf.mxu0
        %v3760 = vpop.f32.mrf.mxu0
        %v3761 = vadd.f32 %v3641, %v3760
        %v3762 = vpop.f32.mrf.mxu0
        %3763 = vmatprep.mubr.bf16.mxu0 0
        %3764 = vmatmul.mubr.bf16.gmra.mxu0 %v3674
        %v3765 = vpop.f32.mrf.mxu0
        %v3766 = vadd.f32 %v3641, %v3765
        %v3767 = vpop.f32.mrf.mxu0
        %v3768 = vpop.f32.mrf.mxu0
        %v3769 = vadd.f32 %v3641, %v3768
        %v3770 = vpop.f32.mrf.mxu0
        %3771 = vmatprep.mubr.bf16.mxu0 0
        %3772 = vmatmul.mubr.bf16.gmra.mxu0 %v3677
        %v3773 = vpop.f32.mrf.mxu0
        %v3774 = vadd.f32 %v3641, %v3773
        %v3775 = vpop.f32.mrf.mxu0
        %v3776 = vpop.f32.mrf.mxu0
        %v3777 = vadd.f32 %v3641, %v3776
        %v3778 = vpop.f32.mrf.mxu0
        %3779 = vmatprep.mubr.bf16.mxu0 0
        %3780 = vmatmul.mubr.bf16.gmra.mxu0 %v3680
        %v3781 = vpop.f32.mrf.mxu0
        %v3782 = vadd.f32 %v3641, %v3781
        %v3783 = vpop.f32.mrf.mxu0
        %v3784 = vpop.f32.mrf.mxu0
        %v3785 = vadd.f32 %v3641, %v3784
        %v3786 = vpop.f32.mrf.mxu0
        %3787 = vmatprep.mubr.bf16.mxu0 0
        %3788 = vmatmul.mubr.bf16.gmra.mxu0 %v3683
        %v3789 = vpop.f32.mrf.mxu0
        %v3790 = vadd.f32 %v3641, %v3789
        %v3791 = vpop.f32.mrf.mxu0
        %v3792 = vpop.f32.mrf.mxu0
        %v3793 = vadd.f32 %v3641, %v3792
        %v3794 = vpop.f32.mrf.mxu0
        %3795 = vmatprep.mubr.bf16.mxu0 0
        %3796 = vmatmul.mubr.bf16.gmra.mxu0 %v3686
        %v3797 = vpop.f32.mrf.mxu0
        %v3798 = vadd.f32 %v3641, %v3797
        %v3799 = vpop.f32.mrf.mxu0
        %v3800 = vpop.f32.mrf.mxu0
        %v3801 = vadd.f32 %v3641, %v3800
        %v3802 = vpop.f32.mrf.mxu0
        %3803 = vmatprep.mubr.bf16.mxu0 0
        %3804 = vmatmul.mubr.bf16.gmra.mxu0 %v3689
        %v3805 = vpop.f32.mrf.mxu0
        %v3806 = vadd.f32 %v3641, %v3805
        %v3807 = vpop.f32.mrf.mxu0
        %v3808 = vpop.f32.mrf.mxu0
        %v3809 = vadd.f32 %v3641, %v3808
        %v3810 = vpop.f32.mrf.mxu0
        %3811 = vmatprep.mubr.bf16.mxu0 0
        %3812 = vmatmul.mubr.bf16.gmra.mxu0 %v3692
        %v3813 = vpop.f32.mrf.mxu0
        %v3814 = vadd.f32 %v3641, %v3813
        %v3815 = vpop.f32.mrf.mxu0
        %v3816 = vpop.f32.mrf.mxu0
        %v3817 = vadd.f32 %v3641, %v3816
        %v3818 = vpop.f32.mrf.mxu0
        %3819 = vmatprep.mubr.bf16.mxu0 0
        %3820 = vmatmul.mubr.bf16.gmra.mxu0 %v3695
        %v3821 = vpop.f32.mrf.mxu0
        %v3822 = vadd.f32 %v3641, %v3821
        %v3823 = vpop.f32.mrf.mxu0
        %v3824 = vpop.f32.mrf.mxu0
        %v3825 = vadd.f32 %v3641, %v3824
        %v3826 = vpop.f32.mrf.mxu0
        %3827 = vmatprep.mubr.bf16.mxu0 0
        %3828 = vmatmul.mubr.bf16.gmra.mxu0 %v3698
        %v3829 = vpop.f32.mrf.mxu0
        %v3830 = vadd.f32 %v3641, %v3829
        %v3831 = vpop.f32.mrf.mxu0
        %v3832 = vpop.f32.mrf.mxu0
        %v3833 = vadd.f32 %v3641, %v3832
        %v3834 = vpop.f32.mrf.mxu0
        %3835 = vmatprep.mubr.bf16.mxu0 0
        %3836 = vmatmul.mubr.bf16.gmra.mxu0 %v3701
        %v3837 = vpop.f32.mrf.mxu0
        %v3838 = vadd.f32 %v3641, %v3837
        %v3839 = vpop.f32.mrf.mxu0
        %v3840 = vpop.f32.mrf.mxu0
        %v3841 = vadd.f32 %v3641, %v3840
        %v3842 = vpop.f32.mrf.mxu0
        %3843 = vmatprep.mubr.bf16.mxu0 0
        %3844 = vmatmul.mubr.bf16.gmra.mxu0 %v3704
        %v3845 = vpop.f32.mrf.mxu0
        %v3846 = vadd.f32 %v3641, %v3845
        %v3847 = vpop.f32.mrf.mxu0
        %v3848 = vpop.f32.mrf.mxu0
        %v3849 = vadd.f32 %v3641, %v3848
        %v3850 = vpop.f32.mrf.mxu0
        %3851 = vmatprep.mubr.bf16.mxu0 0
        %3852 = vmatmul.mubr.bf16.gmra.mxu0 %v3707
        %v3853 = vpop.f32.mrf.mxu0
        %v3854 = vadd.f32 %v3641, %v3853
        %v3855 = vpop.f32.mrf.mxu0
        %v3856 = vpop.f32.mrf.mxu0
        %v3857 = vadd.f32 %v3641, %v3856
        %v3858 = vpop.f32.mrf.mxu0
        %3859 = vmatprep.mubr.bf16.mxu0 0
        %3860 = vmatmul.mubr.bf16.gmra.mxu0 %v3710
        %v3861 = vpop.f32.mrf.mxu0
        %v3862 = vadd.f32 %v3641, %v3861
        %v3863 = vpop.f32.mrf.mxu0
        %v3864 = vpop.f32.mrf.mxu0
        %v3865 = vadd.f32 %v3641, %v3864
        %v3866 = vpop.f32.mrf.mxu0
        %3867 = vmatprep.mubr.bf16.mxu0 0
        %3868 = vmatmul.mubr.bf16.gmra.mxu0 %v3713
        %v3869 = vpop.f32.mrf.mxu0
        %v3870 = vadd.f32 %v3641, %v3869
        %v3871 = vpop.f32.mrf.mxu0
        %v3872 = vpop.f32.mrf.mxu0
        %v3873 = vadd.f32 %v3641, %v3872
        %v3874 = vpop.f32.mrf.mxu0
        %3875 = vdwg.mxu0
        %v3877 = vlaneseq
        %v3878 = vshrl.u32 %v3877, 7
        %v3879 = vsub.s32 0, %v3878
        %v3880 = vrot.slane %v3620, %v3879
        %v3890 = vunpack.c.l.b16 %v3612
        %v3891 = vunpack.c.l.b16 %v3613
        %v3892 = vunpack.c.l.b16 %v3614
        %v3893 = vunpack.c.l.b16 %v3615
        %v3894 = vunpack.c.l.b16 %v3616
        %v3895 = vunpack.c.l.b16 %v3617
        %v3896 = vunpack.c.l.b16 %v3618
        %v3897 = vunpack.c.l.b16 %v3619
        %v3898 = vpack.c.b16 %v3891, %v3890
        %v3899 = vpack.c.b16 %v3893, %v3892
        %v3900 = vpack.c.b16 %v3895, %v3894
        %v3901 = vpack.c.b16 %v3897, %v3896
        %3906 = vmatprep.subr.bf16.mxu0 0
        %3907 = vmatpush1.bf16.msra.mxu0 0
        %3908 = vmatprep.subr.bf16.mxu0 0
        %3909 = vmatpush1.bf16.msra.mxu0 0
        %3910 = vmatprep.subr.bf16.mxu0 0
        %3911 = vmatpush1.bf16.msra.mxu0 0
        %3912 = vmatprep.subr.bf16.mxu0 0
        %3913 = vmatpush1.bf16.msra.mxu0 0
        %3914 = vmatprep.subr.bf16.mxu0 0
        %3915 = vmatpush1.bf16.msra.mxu0 %v3901
        %3916 = vmatprep.subr.bf16.mxu0 0
        %3917 = vmatpush1.bf16.msra.mxu0 %v3900
        %3918 = vmatprep.subr.bf16.mxu0 0
        %3919 = vmatpush1.bf16.msra.mxu0 %v3899
        %3920 = vmatprep.subr.bf16.mxu0 0
        %3921 = vmatpush1.bf16.msra.mxu0 %v3898
        %3922 = vmatprep.subr.bf16.mxu0 0
        %3923 = vmatpush2.bf16.msra.mxu0 0
        %3924 = vmatprep.subr.bf16.mxu0 0
        %3925 = vmatpush2.bf16.msra.mxu0 0
        %3926 = vmatprep.subr.bf16.mxu0 0
        %3927 = vmatpush2.bf16.msra.mxu0 0
        %3928 = vmatprep.subr.bf16.mxu0 0
        %3929 = vmatpush2.bf16.msra.mxu0 0
        %3930 = vmatprep.subr.bf16.mxu0 0
        %3931 = vmatpush2.bf16.msra.mxu0 0
        %3932 = vmatprep.subr.bf16.mxu0 0
        %3933 = vmatpush2.bf16.msra.mxu0 0
        %3934 = vmatprep.subr.bf16.mxu0 0
        %3935 = vmatpush2.bf16.msra.mxu0 0
        %3936 = vmatprep.subr.bf16.mxu0 0
        %3937 = vmatpush2.bf16.msra.mxu0 0
        %3938 = vmatprep.mubr.bf16.mxu0 0
        %3939 = vmatmul.mubr.bf16.gmra.mxu0 %v3668
        %v3940 = vpop.f32.mrf.mxu0
        %v3941 = vadd.f32 %v3880, %v3940
        %v3942 = vpop.f32.mrf.mxu0
        %v3943 = vpop.f32.mrf.mxu0
        %v3944 = vadd.f32 %v3880, %v3943
        %v3945 = vpop.f32.mrf.mxu0
        %3946 = vmatprep.mubr.bf16.mxu0 0
        %3947 = vmatmul.mubr.bf16.gmra.mxu0 %v3671
        %v3948 = vpop.f32.mrf.mxu0
        %v3949 = vadd.f32 %v3880, %v3948
        %v3950 = vpop.f32.mrf.mxu0
        %v3951 = vpop.f32.mrf.mxu0
        %v3952 = vadd.f32 %v3880, %v3951
        %v3953 = vpop.f32.mrf.mxu0
        %3954 = vmatprep.mubr.bf16.mxu0 0
        %3955 = vmatmul.mubr.bf16.gmra.mxu0 %v3674
        %v3956 = vpop.f32.mrf.mxu0
        %v3957 = vadd.f32 %v3880, %v3956
        %v3958 = vpop.f32.mrf.mxu0
        %v3959 = vpop.f32.mrf.mxu0
        %v3960 = vadd.f32 %v3880, %v3959
        %v3961 = vpop.f32.mrf.mxu0
        %3962 = vmatprep.mubr.bf16.mxu0 0
        %3963 = vmatmul.mubr.bf16.gmra.mxu0 %v3677
        %v3964 = vpop.f32.mrf.mxu0
        %v3965 = vadd.f32 %v3880, %v3964
        %v3966 = vpop.f32.mrf.mxu0
        %v3967 = vpop.f32.mrf.mxu0
        %v3968 = vadd.f32 %v3880, %v3967
        %v3969 = vpop.f32.mrf.mxu0
        %3970 = vmatprep.mubr.bf16.mxu0 0
        %3971 = vmatmul.mubr.bf16.gmra.mxu0 %v3680
        %v3972 = vpop.f32.mrf.mxu0
        %v3973 = vadd.f32 %v3880, %v3972
        %v3974 = vpop.f32.mrf.mxu0
        %v3975 = vpop.f32.mrf.mxu0
        %v3976 = vadd.f32 %v3880, %v3975
        %v3977 = vpop.f32.mrf.mxu0
        %3978 = vmatprep.mubr.bf16.mxu0 0
        %3979 = vmatmul.mubr.bf16.gmra.mxu0 %v3683
        %v3980 = vpop.f32.mrf.mxu0
        %v3981 = vadd.f32 %v3880, %v3980
        %v3982 = vpop.f32.mrf.mxu0
        %v3983 = vpop.f32.mrf.mxu0
        %v3984 = vadd.f32 %v3880, %v3983
        %v3985 = vpop.f32.mrf.mxu0
        %3986 = vmatprep.mubr.bf16.mxu0 0
        %3987 = vmatmul.mubr.bf16.gmra.mxu0 %v3686
        %v3988 = vpop.f32.mrf.mxu0
        %v3989 = vadd.f32 %v3880, %v3988
        %v3990 = vpop.f32.mrf.mxu0
        %v3991 = vpop.f32.mrf.mxu0
        %v3992 = vadd.f32 %v3880, %v3991
        %v3993 = vpop.f32.mrf.mxu0
        %3994 = vmatprep.mubr.bf16.mxu0 0
        %3995 = vmatmul.mubr.bf16.gmra.mxu0 %v3689
        %v3996 = vpop.f32.mrf.mxu0
        %v3997 = vadd.f32 %v3880, %v3996
        %v3998 = vpop.f32.mrf.mxu0
        %v3999 = vpop.f32.mrf.mxu0
        %v4000 = vadd.f32 %v3880, %v3999
        %v4001 = vpop.f32.mrf.mxu0
        %4002 = vmatprep.mubr.bf16.mxu0 0
        %4003 = vmatmul.mubr.bf16.gmra.mxu0 %v3692
        %v4004 = vpop.f32.mrf.mxu0
        %v4005 = vadd.f32 %v3880, %v4004
        %v4006 = vpop.f32.mrf.mxu0
        %v4007 = vpop.f32.mrf.mxu0
        %v4008 = vadd.f32 %v3880, %v4007
        %v4009 = vpop.f32.mrf.mxu0
        %4010 = vmatprep.mubr.bf16.mxu0 0
        %4011 = vmatmul.mubr.bf16.gmra.mxu0 %v3695
        %v4012 = vpop.f32.mrf.mxu0
        %v4013 = vadd.f32 %v3880, %v4012
        %v4014 = vpop.f32.mrf.mxu0
        %v4015 = vpop.f32.mrf.mxu0
        %v4016 = vadd.f32 %v3880, %v4015
        %v4017 = vpop.f32.mrf.mxu0
        %4018 = vmatprep.mubr.bf16.mxu0 0
        %4019 = vmatmul.mubr.bf16.gmra.mxu0 %v3698
        %v4020 = vpop.f32.mrf.mxu0
        %v4021 = vadd.f32 %v3880, %v4020
        %v4022 = vpop.f32.mrf.mxu0
        %v4023 = vpop.f32.mrf.mxu0
        %v4024 = vadd.f32 %v3880, %v4023
        %v4025 = vpop.f32.mrf.mxu0
        %4026 = vmatprep.mubr.bf16.mxu0 0
        %4027 = vmatmul.mubr.bf16.gmra.mxu0 %v3701
        %v4028 = vpop.f32.mrf.mxu0
        %v4029 = vadd.f32 %v3880, %v4028
        %v4030 = vpop.f32.mrf.mxu0
        %v4031 = vpop.f32.mrf.mxu0
        %v4032 = vadd.f32 %v3880, %v4031
        %v4033 = vpop.f32.mrf.mxu0
        %4034 = vmatprep.mubr.bf16.mxu0 0
        %4035 = vmatmul.mubr.bf16.gmra.mxu0 %v3704
        %v4036 = vpop.f32.mrf.mxu0
        %v4037 = vadd.f32 %v3880, %v4036
        %v4038 = vpop.f32.mrf.mxu0
        %v4039 = vpop.f32.mrf.mxu0
        %v4040 = vadd.f32 %v3880, %v4039
        %v4041 = vpop.f32.mrf.mxu0
        %4042 = vmatprep.mubr.bf16.mxu0 0
        %4043 = vmatmul.mubr.bf16.gmra.mxu0 %v3707
        %v4044 = vpop.f32.mrf.mxu0
        %v4045 = vadd.f32 %v3880, %v4044
        %v4046 = vpop.f32.mrf.mxu0
        %v4047 = vpop.f32.mrf.mxu0
        %v4048 = vadd.f32 %v3880, %v4047
        %v4049 = vpop.f32.mrf.mxu0
        %4050 = vmatprep.mubr.bf16.mxu0 0
        %4051 = vmatmul.mubr.bf16.gmra.mxu0 %v3710
        %v4052 = vpop.f32.mrf.mxu0
        %v4053 = vadd.f32 %v3880, %v4052
        %v4054 = vpop.f32.mrf.mxu0
        %v4055 = vpop.f32.mrf.mxu0
        %v4056 = vadd.f32 %v3880, %v4055
        %v4057 = vpop.f32.mrf.mxu0
        %4058 = vmatprep.mubr.bf16.mxu0 0
        %4059 = vmatmul.mubr.bf16.gmra.mxu0 %v3713
        %v4060 = vpop.f32.mrf.mxu0
        %v4061 = vadd.f32 %v3880, %v4060
        %v4062 = vpop.f32.mrf.mxu0
        %v4063 = vpop.f32.mrf.mxu0
        %v4064 = vadd.f32 %v3880, %v4063
        %v4065 = vpop.f32.mrf.mxu0
        %4066 = vdwg.mxu0
        %v4067 = vmax.f32 %v3941, 0.0
        %v4068 = vmax.f32 %v3944, 0.0
        %v4069 = vmax.f32 %v3949, 0.0
        %v4070 = vmax.f32 %v3952, 0.0
        %v4071 = vmax.f32 %v3957, 0.0
        %v4072 = vmax.f32 %v3960, 0.0
        %v4073 = vmax.f32 %v3965, 0.0
        %v4074 = vmax.f32 %v3968, 0.0
        %v4075 = vmax.f32 %v3973, 0.0
        %v4076 = vmax.f32 %v3976, 0.0
        %v4077 = vmax.f32 %v3981, 0.0
        %v4078 = vmax.f32 %v3984, 0.0
        %v4079 = vmax.f32 %v3989, 0.0
        %v4080 = vmax.f32 %v3992, 0.0
        %v4081 = vmax.f32 %v3997, 0.0
        %v4082 = vmax.f32 %v4000, 0.0
        %v4083 = vmax.f32 %v4005, 0.0
        %v4084 = vmax.f32 %v4008, 0.0
        %v4085 = vmax.f32 %v4013, 0.0
        %v4086 = vmax.f32 %v4016, 0.0
        %v4087 = vmax.f32 %v4021, 0.0
        %v4088 = vmax.f32 %v4024, 0.0
        %v4089 = vmax.f32 %v4029, 0.0
        %v4090 = vmax.f32 %v4032, 0.0
        %v4091 = vmax.f32 %v4037, 0.0
        %v4092 = vmax.f32 %v4040, 0.0
        %v4093 = vmax.f32 %v4045, 0.0
        %v4094 = vmax.f32 %v4048, 0.0
        %v4095 = vmax.f32 %v4053, 0.0
        %v4096 = vmax.f32 %v4056, 0.0
        %v4097 = vmax.f32 %v4061, 0.0
        %v4098 = vmax.f32 %v4064, 0.0
        %v4099 = vand.u32 2147483647, %v3941
        %v4100 = vand.u32 2147483647, %v3944
        %v4101 = vand.u32 2147483647, %v3949
        %v4102 = vand.u32 2147483647, %v3952
        %v4103 = vand.u32 2147483647, %v3957
        %v4104 = vand.u32 2147483647, %v3960
        %v4105 = vand.u32 2147483647, %v3965
        %v4106 = vand.u32 2147483647, %v3968
        %v4107 = vand.u32 2147483647, %v3973
        %v4108 = vand.u32 2147483647, %v3976
        %v4109 = vand.u32 2147483647, %v3981
        %v4110 = vand.u32 2147483647, %v3984
        %v4111 = vand.u32 2147483647, %v3989
        %v4112 = vand.u32 2147483647, %v3992
        %v4113 = vand.u32 2147483647, %v3997
        %v4114 = vand.u32 2147483647, %v4000
        %v4115 = vand.u32 2147483647, %v4005
        %v4116 = vand.u32 2147483647, %v4008
        %v4117 = vand.u32 2147483647, %v4013
        %v4118 = vand.u32 2147483647, %v4016
        %v4119 = vand.u32 2147483647, %v4021
        %v4120 = vand.u32 2147483647, %v4024
        %v4121 = vand.u32 2147483647, %v4029
        %v4122 = vand.u32 2147483647, %v4032
        %v4123 = vand.u32 2147483647, %v4037
        %v4124 = vand.u32 2147483647, %v4040
        %v4125 = vand.u32 2147483647, %v4045
        %v4126 = vand.u32 2147483647, %v4048
        %v4127 = vand.u32 2147483647, %v4053
        %v4128 = vand.u32 2147483647, %v4056
        %v4129 = vand.u32 2147483647, %v4061
        %v4130 = vand.u32 2147483647, %v4064
        %v4131 = vsub.f32 0.0, %v4099
        %v4132 = vsub.f32 0.0, %v4100
        %v4133 = vsub.f32 0.0, %v4101
        %v4134 = vsub.f32 0.0, %v4102
        %v4135 = vsub.f32 0.0, %v4103
        %v4136 = vsub.f32 0.0, %v4104
        %v4137 = vsub.f32 0.0, %v4105
        %v4138 = vsub.f32 0.0, %v4106
        %v4139 = vsub.f32 0.0, %v4107
        %v4140 = vsub.f32 0.0, %v4108
        %v4141 = vsub.f32 0.0, %v4109
        %v4142 = vsub.f32 0.0, %v4110
        %v4143 = vsub.f32 0.0, %v4111
        %v4144 = vsub.f32 0.0, %v4112
        %v4145 = vsub.f32 0.0, %v4113
        %v4146 = vsub.f32 0.0, %v4114
        %v4147 = vsub.f32 0.0, %v4115
        %v4148 = vsub.f32 0.0, %v4116
        %v4149 = vsub.f32 0.0, %v4117
        %v4150 = vsub.f32 0.0, %v4118
        %v4151 = vsub.f32 0.0, %v4119
        %v4152 = vsub.f32 0.0, %v4120
        %v4153 = vsub.f32 0.0, %v4121
        %v4154 = vsub.f32 0.0, %v4122
        %v4155 = vsub.f32 0.0, %v4123
        %v4156 = vsub.f32 0.0, %v4124
        %v4157 = vsub.f32 0.0, %v4125
        %v4158 = vsub.f32 0.0, %v4126
        %v4159 = vsub.f32 0.0, %v4127
        %v4160 = vsub.f32 0.0, %v4128
        %v4161 = vsub.f32 0.0, %v4129
        %v4162 = vsub.f32 0.0, %v4130
        %v4163 = vmul.f32 %v4131, 1.442695
        %v4164 = vpow.pop %v4163
        %v4165 = vmul.f32 %v4132, 1.442695
        %v4166 = vpow.pop %v4165
        %v4167 = vmul.f32 %v4133, 1.442695
        %v4168 = vpow.pop %v4167
        %v4169 = vmul.f32 %v4134, 1.442695
        %v4170 = vpow.pop %v4169
        %v4171 = vmul.f32 %v4135, 1.442695
        %v4172 = vpow.pop %v4171
        %v4173 = vmul.f32 %v4136, 1.442695
        %v4174 = vpow.pop %v4173
        %v4175 = vmul.f32 %v4137, 1.442695
        %v4176 = vpow.pop %v4175
        %v4177 = vmul.f32 %v4138, 1.442695
        %v4178 = vpow.pop %v4177
        %v4179 = vmul.f32 %v4139, 1.442695
        %v4180 = vpow.pop %v4179
        %v4181 = vmul.f32 %v4140, 1.442695
        %v4182 = vpow.pop %v4181
        %v4183 = vmul.f32 %v4141, 1.442695
        %v4184 = vpow.pop %v4183
        %v4185 = vmul.f32 %v4142, 1.442695
        %v4186 = vpow.pop %v4185
        %v4187 = vmul.f32 %v4143, 1.442695
        %v4188 = vpow.pop %v4187
        %v4189 = vmul.f32 %v4144, 1.442695
        %v4190 = vpow.pop %v4189
        %v4191 = vmul.f32 %v4145, 1.442695
        %v4192 = vpow.pop %v4191
        %v4193 = vmul.f32 %v4146, 1.442695
        %v4194 = vpow.pop %v4193
        %v4195 = vmul.f32 %v4147, 1.442695
        %v4196 = vpow.pop %v4195
        %v4197 = vmul.f32 %v4148, 1.442695
        %v4198 = vpow.pop %v4197
        %v4199 = vmul.f32 %v4149, 1.442695
        %v4200 = vpow.pop %v4199
        %v4201 = vmul.f32 %v4150, 1.442695
        %v4202 = vpow.pop %v4201
        %v4203 = vmul.f32 %v4151, 1.442695
        %v4204 = vpow.pop %v4203
        %v4205 = vmul.f32 %v4152, 1.442695
        %v4206 = vpow.pop %v4205
        %v4207 = vmul.f32 %v4153, 1.442695
        %v4208 = vpow.pop %v4207
        %v4209 = vmul.f32 %v4154, 1.442695
        %v4210 = vpow.pop %v4209
        %v4211 = vmul.f32 %v4155, 1.442695
        %v4212 = vpow.pop %v4211
        %v4213 = vmul.f32 %v4156, 1.442695
        %v4214 = vpow.pop %v4213
        %v4215 = vmul.f32 %v4157, 1.442695
        %v4216 = vpow.pop %v4215
        %v4217 = vmul.f32 %v4158, 1.442695
        %v4218 = vpow.pop %v4217
        %v4219 = vmul.f32 %v4159, 1.442695
        %v4220 = vpow.pop %v4219
        %v4221 = vmul.f32 %v4160, 1.442695
        %v4222 = vpow.pop %v4221
        %v4223 = vmul.f32 %v4161, 1.442695
        %v4224 = vpow.pop %v4223
        %v4225 = vmul.f32 %v4162, 1.442695
        %v4226 = vpow.pop %v4225
        %v4227 = vadd.f32 %v4164, 1.0
        %v4228 = vadd.f32 %v4166, 1.0
        %v4229 = vadd.f32 %v4168, 1.0
        %v4230 = vadd.f32 %v4170, 1.0
        %v4231 = vadd.f32 %v4172, 1.0
        %v4232 = vadd.f32 %v4174, 1.0
        %v4233 = vadd.f32 %v4176, 1.0
        %v4234 = vadd.f32 %v4178, 1.0
        %v4235 = vadd.f32 %v4180, 1.0
        %v4236 = vadd.f32 %v4182, 1.0
        %v4237 = vadd.f32 %v4184, 1.0
        %v4238 = vadd.f32 %v4186, 1.0
        %v4239 = vadd.f32 %v4188, 1.0
        %v4240 = vadd.f32 %v4190, 1.0
        %v4241 = vadd.f32 %v4192, 1.0
        %v4242 = vadd.f32 %v4194, 1.0
        %v4243 = vadd.f32 %v4196, 1.0
        %v4244 = vadd.f32 %v4198, 1.0
        %v4245 = vadd.f32 %v4200, 1.0
        %v4246 = vadd.f32 %v4202, 1.0
        %v4247 = vadd.f32 %v4204, 1.0
        %v4248 = vadd.f32 %v4206, 1.0
        %v4249 = vadd.f32 %v4208, 1.0
        %v4250 = vadd.f32 %v4210, 1.0
        %v4251 = vadd.f32 %v4212, 1.0
        %v4252 = vadd.f32 %v4214, 1.0
        %v4253 = vadd.f32 %v4216, 1.0
        %v4254 = vadd.f32 %v4218, 1.0
        %v4255 = vadd.f32 %v4220, 1.0
        %v4256 = vadd.f32 %v4222, 1.0
        %v4257 = vadd.f32 %v4224, 1.0
        %v4258 = vadd.f32 %v4226, 1.0
        %v4259 = vlog2.pop %v4227
        %v4260 = vmul.f32 %v4259, 0.6931472
        %v4261 = vlog2.pop %v4228
        %v4262 = vmul.f32 %v4261, 0.6931472
        %v4263 = vlog2.pop %v4229
        %v4264 = vmul.f32 %v4263, 0.6931472
        %v4265 = vlog2.pop %v4230
        %v4266 = vmul.f32 %v4265, 0.6931472
        %v4267 = vlog2.pop %v4231
        %v4268 = vmul.f32 %v4267, 0.6931472
        %v4269 = vlog2.pop %v4232
        %v4270 = vmul.f32 %v4269, 0.6931472
        %v4271 = vlog2.pop %v4233
        %v4272 = vmul.f32 %v4271, 0.6931472
        %v4273 = vlog2.pop %v4234
        %v4274 = vmul.f32 %v4273, 0.6931472
        %v4275 = vlog2.pop %v4235
        %v4276 = vmul.f32 %v4275, 0.6931472
        %v4277 = vlog2.pop %v4236
        %v4278 = vmul.f32 %v4277, 0.6931472
        %v4279 = vlog2.pop %v4237
        %v4280 = vmul.f32 %v4279, 0.6931472
        %v4281 = vlog2.pop %v4238
        %v4282 = vmul.f32 %v4281, 0.6931472
        %v4283 = vlog2.pop %v4239
        %v4284 = vmul.f32 %v4283, 0.6931472
        %v4285 = vlog2.pop %v4240
        %v4286 = vmul.f32 %v4285, 0.6931472
        %v4287 = vlog2.pop %v4241
        %v4288 = vmul.f32 %v4287, 0.6931472
        %v4289 = vlog2.pop %v4242
        %v4290 = vmul.f32 %v4289, 0.6931472
        %v4291 = vlog2.pop %v4243
        %v4292 = vmul.f32 %v4291, 0.6931472
        %v4293 = vlog2.pop %v4244
        %v4294 = vmul.f32 %v4293, 0.6931472
        %v4295 = vlog2.pop %v4245
        %v4296 = vmul.f32 %v4295, 0.6931472
        %v4297 = vlog2.pop %v4246
        %v4298 = vmul.f32 %v4297, 0.6931472
        %v4299 = vlog2.pop %v4247
        %v4300 = vmul.f32 %v4299, 0.6931472
        %v4301 = vlog2.pop %v4248
        %v4302 = vmul.f32 %v4301, 0.6931472
        %v4303 = vlog2.pop %v4249
        %v4304 = vmul.f32 %v4303, 0.6931472
        %v4305 = vlog2.pop %v4250
        %v4306 = vmul.f32 %v4305, 0.6931472
        %v4307 = vlog2.pop %v4251
        %v4308 = vmul.f32 %v4307, 0.6931472
        %v4309 = vlog2.pop %v4252
        %v4310 = vmul.f32 %v4309, 0.6931472
        %v4311 = vlog2.pop %v4253
        %v4312 = vmul.f32 %v4311, 0.6931472
        %v4313 = vlog2.pop %v4254
        %v4314 = vmul.f32 %v4313, 0.6931472
        %v4315 = vlog2.pop %v4255
        %v4316 = vmul.f32 %v4315, 0.6931472
        %v4317 = vlog2.pop %v4256
        %v4318 = vmul.f32 %v4317, 0.6931472
        %v4319 = vlog2.pop %v4257
        %v4320 = vmul.f32 %v4319, 0.6931472
        %v4321 = vlog2.pop %v4258
        %v4322 = vmul.f32 %v4321, 0.6931472
        %v4323 = vadd.f32 %v4067, %v4260
        %v4324 = vadd.f32 %v4068, %v4262
        %v4325 = vadd.f32 %v4069, %v4264
        %v4326 = vadd.f32 %v4070, %v4266
        %v4327 = vadd.f32 %v4071, %v4268
        %v4328 = vadd.f32 %v4072, %v4270
        %v4329 = vadd.f32 %v4073, %v4272
        %v4330 = vadd.f32 %v4074, %v4274
        %v4331 = vadd.f32 %v4075, %v4276
        %v4332 = vadd.f32 %v4076, %v4278
        %v4333 = vadd.f32 %v4077, %v4280
        %v4334 = vadd.f32 %v4078, %v4282
        %v4335 = vadd.f32 %v4079, %v4284
        %v4336 = vadd.f32 %v4080, %v4286
        %v4337 = vadd.f32 %v4081, %v4288
        %v4338 = vadd.f32 %v4082, %v4290
        %v4339 = vadd.f32 %v4083, %v4292
        %v4340 = vadd.f32 %v4084, %v4294
        %v4341 = vadd.f32 %v4085, %v4296
        %v4342 = vadd.f32 %v4086, %v4298
        %v4343 = vadd.f32 %v4087, %v4300
        %v4344 = vadd.f32 %v4088, %v4302
        %v4345 = vadd.f32 %v4089, %v4304
        %v4346 = vadd.f32 %v4090, %v4306
        %v4347 = vadd.f32 %v4091, %v4308
        %v4348 = vadd.f32 %v4092, %v4310
        %v4349 = vadd.f32 %v4093, %v4312
        %v4350 = vadd.f32 %v4094, %v4314
        %v4351 = vadd.f32 %v4095, %v4316
        %v4352 = vadd.f32 %v4096, %v4318
        %v4353 = vadd.f32 %v4097, %v4320
        %v4354 = vadd.f32 %v4098, %v4322
        %v4355 = vld [vmem:[%s23] sm:$0xf]
        %v4356 = vld [vmem:[%s23 + $0x4] sm:$0xf]
        %v4357 = vld [vmem:[%s23 + $0x8] sm:$0xf]
        %v4358 = vld [vmem:[%s23 + $0xc] sm:$0xf]
        %v4359 = vld [vmem:[%s23 + $0x10] sm:$0xf]
        %v4360 = vld [vmem:[%s23 + $0x14] sm:$0xf]
        %v4361 = vld [vmem:[%s23 + $0x18] sm:$0xf]
        %v4362 = vld [vmem:[%s23 + $0x1c] sm:$0xf]
        %v4363 = vld [vmem:[%s24] sm:$0xf]
        %v4364 = vld [vmem:[%s24 + $0x4] sm:$0xf]
        %v4365 = vld [vmem:[%s24 + $0x8] sm:$0xf]
        %v4366 = vld [vmem:[%s24 + $0xc] sm:$0xf]
        %v4367 = vld [vmem:[%s24 + $0x10] sm:$0x1]
        %v4368 = vld [vmem:[%s25] sm:$0x1]
        %v4369 = vpack.c.bf16 %v3753, %v3750
        %v4370 = vpack.c.bf16 %v3761, %v3758
        %v4371 = vpack.c.bf16 %v3769, %v3766
        %v4372 = vpack.c.bf16 %v3777, %v3774
        %v4373 = vpack.c.bf16 %v3785, %v3782
        %v4374 = vpack.c.bf16 %v3793, %v3790
        %v4375 = vpack.c.bf16 %v3801, %v3798
        %v4376 = vpack.c.bf16 %v3809, %v3806
        %v4377 = vpack.c.bf16 %v3817, %v3814
        %v4378 = vpack.c.bf16 %v3825, %v3822
        %v4379 = vpack.c.bf16 %v3833, %v3830
        %v4380 = vpack.c.bf16 %v3841, %v3838
        %v4381 = vpack.c.bf16 %v3849, %v3846
        %v4382 = vpack.c.bf16 %v3857, %v3854
        %v4383 = vpack.c.bf16 %v3865, %v3862
        %v4384 = vpack.c.bf16 %v3873, %v3870
        %v4417 = vunpack.c.l.b16 %v904
        %v4418 = vunpack.c.l.b16 %v905
        %v4419 = vunpack.c.l.b16 %v906
        %v4420 = vunpack.c.l.b16 %v907
        %v4421 = vunpack.c.l.b16 %v908
        %v4422 = vunpack.c.l.b16 %v909
        %v4423 = vunpack.c.l.b16 %v910
        %v4424 = vunpack.c.l.b16 %v911
        %v4425 = vunpack.c.l.b16 %v912
        %v4426 = vunpack.c.l.b16 %v913
        %v4427 = vunpack.c.l.b16 %v914
        %v4428 = vunpack.c.l.b16 %v915
        %v4429 = vunpack.c.l.b16 %v916
        %v4430 = vunpack.c.l.b16 %v917
        %v4431 = vunpack.c.l.b16 %v918
        %v4432 = vunpack.c.l.b16 %v919
        %v4433 = vunpack.c.l.b16 %v920
        %v4434 = vunpack.c.l.b16 %v921
        %v4435 = vunpack.c.l.b16 %v922
        %v4436 = vunpack.c.l.b16 %v923
        %v4437 = vunpack.c.l.b16 %v924
        %v4438 = vunpack.c.l.b16 %v925
        %v4439 = vunpack.c.l.b16 %v926
        %v4440 = vunpack.c.l.b16 %v927
        %v4441 = vunpack.c.l.b16 %v928
        %v4442 = vunpack.c.l.b16 %v929
        %v4443 = vunpack.c.l.b16 %v930
        %v4444 = vunpack.c.l.b16 %v931
        %v4445 = vunpack.c.l.b16 %v932
        %v4446 = vunpack.c.l.b16 %v933
        %v4447 = vunpack.c.l.b16 %v934
        %v4448 = vunpack.c.l.b16 %v935
        %v4449 = vpack.c.b16 %v4418, %v4417
        %v4450 = vpack.c.b16 %v4420, %v4419
        %v4451 = vpack.c.b16 %v4422, %v4421
        %v4452 = vpack.c.b16 %v4424, %v4423
        %v4453 = vpack.c.b16 %v4426, %v4425
        %v4454 = vpack.c.b16 %v4428, %v4427
        %v4455 = vpack.c.b16 %v4430, %v4429
        %v4456 = vpack.c.b16 %v4432, %v4431
        %v4457 = vpack.c.b16 %v4434, %v4433
        %v4458 = vpack.c.b16 %v4436, %v4435
        %v4459 = vpack.c.b16 %v4438, %v4437
        %v4460 = vpack.c.b16 %v4440, %v4439
        %v4461 = vpack.c.b16 %v4442, %v4441
        %v4462 = vpack.c.b16 %v4444, %v4443
        %v4463 = vpack.c.b16 %v4446, %v4445
        %v4464 = vpack.c.b16 %v4448, %v4447
        %v4470 = vunpack.c.l.b16 %v4363
        %v4471 = vunpack.c.l.b16 %v4364
        %v4472 = vunpack.c.l.b16 %v4365
        %v4473 = vunpack.c.l.b16 %v4366
        %v4474 = vunpack.c.l.b16 %v4367
        %v4475 = vpack.c.b16 %v4471, %v4470
        %v4476 = vpack.c.b16 %v4473, %v4472
        %v4477 = vpack.c.b16 %v4474, %v4474
        %vm4480 = vcmask 277504
        %v4482 = vsel %vm4480, %v4449, 0
        %v4485 = vsel %vm4480, %v4450, 0
        %v4488 = vsel %vm4480, %v4451, 0
        %v4491 = vsel %vm4480, %v4452, 0
        %v4494 = vsel %vm4480, %v4453, 0
        %v4497 = vsel %vm4480, %v4454, 0
        %v4500 = vsel %vm4480, %v4455, 0
        %v4503 = vsel %vm4480, %v4456, 0
        %v4506 = vsel %vm4480, %v4457, 0
        %v4509 = vsel %vm4480, %v4458, 0
        %v4512 = vsel %vm4480, %v4459, 0
        %v4515 = vsel %vm4480, %v4460, 0
        %v4518 = vsel %vm4480, %v4461, 0
        %v4521 = vsel %vm4480, %v4462, 0
        %v4524 = vsel %vm4480, %v4463, 0
        %v4527 = vsel %vm4480, %v4464, 0
        %vm4529 = vcmask 1040384
        %v4531 = vsel %vm4529, %v4477, 0
        %4533 = vmatprep.subr.bf16.mxu0 0
        %4534 = vmatpush1.bf16.msra.mxu0 0
        %4535 = vmatprep.subr.bf16.mxu0 0
        %4536 = vmatpush1.bf16.msra.mxu0 0
        %4537 = vmatprep.subr.bf16.mxu0 0
        %4538 = vmatpush1.bf16.msra.mxu0 0
        %4539 = vmatprep.subr.bf16.mxu0 0
        %4540 = vmatpush1.bf16.msra.mxu0 0
        %4541 = vmatprep.subr.bf16.mxu0 0
        %4542 = vmatpush1.bf16.msra.mxu0 0
        %4543 = vmatprep.subr.bf16.mxu0 0
        %4544 = vmatpush1.bf16.msra.mxu0 %v4531
        %4545 = vmatprep.subr.bf16.mxu0 0
        %4546 = vmatpush1.bf16.msra.mxu0 %v4476
        %4547 = vmatprep.subr.bf16.mxu0 0
        %4548 = vmatpush1.bf16.msra.mxu0 %v4475
        %4549 = vmatprep.subr.bf16.mxu0 0
        %4550 = vmatpush2.bf16.msra.mxu0 0
        %4551 = vmatprep.subr.bf16.mxu0 0
        %4552 = vmatpush2.bf16.msra.mxu0 0
        %4553 = vmatprep.subr.bf16.mxu0 0
        %4554 = vmatpush2.bf16.msra.mxu0 0
        %4555 = vmatprep.subr.bf16.mxu0 0
        %4556 = vmatpush2.bf16.msra.mxu0 0
        %4557 = vmatprep.subr.bf16.mxu0 0
        %4558 = vmatpush2.bf16.msra.mxu0 0
        %4559 = vmatprep.subr.bf16.mxu0 0
        %4560 = vmatpush2.bf16.msra.mxu0 0
        %4561 = vmatprep.subr.bf16.mxu0 0
        %4562 = vmatpush2.bf16.msra.mxu0 0
        %4563 = vmatprep.subr.bf16.mxu0 0
        %4564 = vmatpush2.bf16.msra.mxu0 0
        %4565 = vmatprep.mubr.bf16.mxu0 0
        %4566 = vmatmul.mubr.bf16.gmra.mxu0 %v4482
        %v4567 = vpop.f32.mrf.mxu0
        %v4568 = vadd.f32 0.0, %v4567
        %v4569 = vpop.f32.mrf.mxu0
        %v4570 = vpop.f32.mrf.mxu0
        %v4571 = vadd.f32 0.0, %v4570
        %v4572 = vpop.f32.mrf.mxu0
        %4573 = vmatprep.mubr.bf16.mxu0 0
        %4574 = vmatmul.mubr.bf16.gmra.mxu0 %v4485
        %v4575 = vpop.f32.mrf.mxu0
        %v4576 = vadd.f32 0.0, %v4575
        %v4577 = vpop.f32.mrf.mxu0
        %v4578 = vpop.f32.mrf.mxu0
        %v4579 = vadd.f32 0.0, %v4578
        %v4580 = vpop.f32.mrf.mxu0
        %4581 = vmatprep.mubr.bf16.mxu0 0
        %4582 = vmatmul.mubr.bf16.gmra.mxu0 %v4488
        %v4583 = vpop.f32.mrf.mxu0
        %v4584 = vadd.f32 0.0, %v4583
        %v4585 = vpop.f32.mrf.mxu0
        %v4586 = vpop.f32.mrf.mxu0
        %v4587 = vadd.f32 0.0, %v4586
        %v4588 = vpop.f32.mrf.mxu0
        %4589 = vmatprep.mubr.bf16.mxu0 0
        %4590 = vmatmul.mubr.bf16.gmra.mxu0 %v4491
        %v4591 = vpop.f32.mrf.mxu0
        %v4592 = vadd.f32 0.0, %v4591
        %v4593 = vpop.f32.mrf.mxu0
        %v4594 = vpop.f32.mrf.mxu0
        %v4595 = vadd.f32 0.0, %v4594
        %v4596 = vpop.f32.mrf.mxu0
        %4597 = vmatprep.mubr.bf16.mxu0 0
        %4598 = vmatmul.mubr.bf16.gmra.mxu0 %v4494
        %v4599 = vpop.f32.mrf.mxu0
        %v4600 = vadd.f32 0.0, %v4599
        %v4601 = vpop.f32.mrf.mxu0
        %v4602 = vpop.f32.mrf.mxu0
        %v4603 = vadd.f32 0.0, %v4602
        %v4604 = vpop.f32.mrf.mxu0
        %4605 = vmatprep.mubr.bf16.mxu0 0
        %4606 = vmatmul.mubr.bf16.gmra.mxu0 %v4497
        %v4607 = vpop.f32.mrf.mxu0
        %v4608 = vadd.f32 0.0, %v4607
        %v4609 = vpop.f32.mrf.mxu0
        %v4610 = vpop.f32.mrf.mxu0
        %v4611 = vadd.f32 0.0, %v4610
        %v4612 = vpop.f32.mrf.mxu0
        %4613 = vmatprep.mubr.bf16.mxu0 0
        %4614 = vmatmul.mubr.bf16.gmra.mxu0 %v4500
        %v4615 = vpop.f32.mrf.mxu0
        %v4616 = vadd.f32 0.0, %v4615
        %v4617 = vpop.f32.mrf.mxu0
        %v4618 = vpop.f32.mrf.mxu0
        %v4619 = vadd.f32 0.0, %v4618
        %v4620 = vpop.f32.mrf.mxu0
        %4621 = vmatprep.mubr.bf16.mxu0 0
        %4622 = vmatmul.mubr.bf16.gmra.mxu0 %v4503
        %v4623 = vpop.f32.mrf.mxu0
        %v4624 = vadd.f32 0.0, %v4623
        %v4625 = vpop.f32.mrf.mxu0
        %v4626 = vpop.f32.mrf.mxu0
        %v4627 = vadd.f32 0.0, %v4626
        %v4628 = vpop.f32.mrf.mxu0
        %4629 = vmatprep.mubr.bf16.mxu0 0
        %4630 = vmatmul.mubr.bf16.gmra.mxu0 %v4506
        %v4631 = vpop.f32.mrf.mxu0
        %v4632 = vadd.f32 0.0, %v4631
        %v4633 = vpop.f32.mrf.mxu0
        %v4634 = vpop.f32.mrf.mxu0
        %v4635 = vadd.f32 0.0, %v4634
        %v4636 = vpop.f32.mrf.mxu0
        %4637 = vmatprep.mubr.bf16.mxu0 0
        %4638 = vmatmul.mubr.bf16.gmra.mxu0 %v4509
        %v4639 = vpop.f32.mrf.mxu0
        %v4640 = vadd.f32 0.0, %v4639
        %v4641 = vpop.f32.mrf.mxu0
        %v4642 = vpop.f32.mrf.mxu0
        %v4643 = vadd.f32 0.0, %v4642
        %v4644 = vpop.f32.mrf.mxu0
        %4645 = vmatprep.mubr.bf16.mxu0 0
        %4646 = vmatmul.mubr.bf16.gmra.mxu0 %v4512
        %v4647 = vpop.f32.mrf.mxu0
        %v4648 = vadd.f32 0.0, %v4647
        %v4649 = vpop.f32.mrf.mxu0
        %v4650 = vpop.f32.mrf.mxu0
        %v4651 = vadd.f32 0.0, %v4650
        %v4652 = vpop.f32.mrf.mxu0
        %4653 = vmatprep.mubr.bf16.mxu0 0
        %4654 = vmatmul.mubr.bf16.gmra.mxu0 %v4515
        %v4655 = vpop.f32.mrf.mxu0
        %v4656 = vadd.f32 0.0, %v4655
        %v4657 = vpop.f32.mrf.mxu0
        %v4658 = vpop.f32.mrf.mxu0
        %v4659 = vadd.f32 0.0, %v4658
        %v4660 = vpop.f32.mrf.mxu0
        %4661 = vmatprep.mubr.bf16.mxu0 0
        %4662 = vmatmul.mubr.bf16.gmra.mxu0 %v4518
        %v4663 = vpop.f32.mrf.mxu0
        %v4664 = vadd.f32 0.0, %v4663
        %v4665 = vpop.f32.mrf.mxu0
        %v4666 = vpop.f32.mrf.mxu0
        %v4667 = vadd.f32 0.0, %v4666
        %v4668 = vpop.f32.mrf.mxu0
        %4669 = vmatprep.mubr.bf16.mxu0 0
        %4670 = vmatmul.mubr.bf16.gmra.mxu0 %v4521
        %v4671 = vpop.f32.mrf.mxu0
        %v4672 = vadd.f32 0.0, %v4671
        %v4673 = vpop.f32.mrf.mxu0
        %v4674 = vpop.f32.mrf.mxu0
        %v4675 = vadd.f32 0.0, %v4674
        %v4676 = vpop.f32.mrf.mxu0
        %4677 = vmatprep.mubr.bf16.mxu0 0
        %4678 = vmatmul.mubr.bf16.gmra.mxu0 %v4524
        %v4679 = vpop.f32.mrf.mxu0
        %v4680 = vadd.f32 0.0, %v4679
        %v4681 = vpop.f32.mrf.mxu0
        %v4682 = vpop.f32.mrf.mxu0
        %v4683 = vadd.f32 0.0, %v4682
        %v4684 = vpop.f32.mrf.mxu0
        %4685 = vmatprep.mubr.bf16.mxu0 0
        %4686 = vmatmul.mubr.bf16.gmra.mxu0 %v4527
        %v4687 = vpop.f32.mrf.mxu0
        %v4688 = vadd.f32 0.0, %v4687
        %v4689 = vpop.f32.mrf.mxu0
        %v4690 = vpop.f32.mrf.mxu0
        %v4691 = vadd.f32 0.0, %v4690
        %v4692 = vpop.f32.mrf.mxu0
        %4693 = vdwg.mxu0
        %v4702 = vunpack.c.l.b16 %v4355
        %v4703 = vunpack.c.l.b16 %v4356
        %v4704 = vunpack.c.l.b16 %v4357
        %v4705 = vunpack.c.l.b16 %v4358
        %v4706 = vunpack.c.l.b16 %v4359
        %v4707 = vunpack.c.l.b16 %v4360
        %v4708 = vunpack.c.l.b16 %v4361
        %v4709 = vunpack.c.l.b16 %v4362
        %v4710 = vpack.c.b16 %v4703, %v4702
        %v4711 = vpack.c.b16 %v4705, %v4704
        %v4712 = vpack.c.b16 %v4707, %v4706
        %v4713 = vpack.c.b16 %v4709, %v4708
        %v4719 = vsel %vm1358, %v4369, 0
        %v4722 = vsel %vm1358, %v4370, 0
        %v4725 = vsel %vm1358, %v4371, 0
        %v4728 = vsel %vm1358, %v4372, 0
        %v4731 = vsel %vm1358, %v4373, 0
        %v4734 = vsel %vm1358, %v4374, 0
        %v4737 = vsel %vm1358, %v4375, 0
        %v4740 = vsel %vm1358, %v4376, 0
        %v4743 = vsel %vm1358, %v4377, 0
        %v4746 = vsel %vm1358, %v4378, 0
        %v4749 = vsel %vm1358, %v4379, 0
        %v4752 = vsel %vm1358, %v4380, 0
        %v4755 = vsel %vm1358, %v4381, 0
        %v4758 = vsel %vm1358, %v4382, 0
        %v4761 = vsel %vm1358, %v4383, 0
        %v4764 = vsel %vm1358, %v4384, 0
        %4766 = vmatprep.subr.bf16.mxu0 0
        %4767 = vmatpush1.bf16.msra.mxu0 0
        %4768 = vmatprep.subr.bf16.mxu0 0
        %4769 = vmatpush1.bf16.msra.mxu0 0
        %4770 = vmatprep.subr.bf16.mxu0 0
        %4771 = vmatpush1.bf16.msra.mxu0 0
        %4772 = vmatprep.subr.bf16.mxu0 0
        %4773 = vmatpush1.bf16.msra.mxu0 0
        %4774 = vmatprep.subr.bf16.mxu0 0
        %4775 = vmatpush1.bf16.msra.mxu0 %v4713
        %4776 = vmatprep.subr.bf16.mxu0 0
        %4777 = vmatpush1.bf16.msra.mxu0 %v4712
        %4778 = vmatprep.subr.bf16.mxu0 0
        %4779 = vmatpush1.bf16.msra.mxu0 %v4711
        %4780 = vmatprep.subr.bf16.mxu0 0
        %4781 = vmatpush1.bf16.msra.mxu0 %v4710
        %4782 = vmatprep.subr.bf16.mxu0 0
        %4783 = vmatpush2.bf16.msra.mxu0 0
        %4784 = vmatprep.subr.bf16.mxu0 0
        %4785 = vmatpush2.bf16.msra.mxu0 0
        %4786 = vmatprep.subr.bf16.mxu0 0
        %4787 = vmatpush2.bf16.msra.mxu0 0
        %4788 = vmatprep.subr.bf16.mxu0 0
        %4789 = vmatpush2.bf16.msra.mxu0 0
        %4790 = vmatprep.subr.bf16.mxu0 0
        %4791 = vmatpush2.bf16.msra.mxu0 0
        %4792 = vmatprep.subr.bf16.mxu0 0
        %4793 = vmatpush2.bf16.msra.mxu0 0
        %4794 = vmatprep.subr.bf16.mxu0 0
        %4795 = vmatpush2.bf16.msra.mxu0 0
        %4796 = vmatprep.subr.bf16.mxu0 0
        %4797 = vmatpush2.bf16.msra.mxu0 0
        %4798 = vmatprep.mubr.bf16.mxu0 0
        %4799 = vmatmul.mubr.bf16.gmra.mxu0 %v4719
        %v4800 = vpop.f32.mrf.mxu0
        %v4801 = vadd.f32 %v4568, %v4800
        %v4802 = vpop.f32.mrf.mxu0
        %v4803 = vpop.f32.mrf.mxu0
        %v4804 = vadd.f32 %v4571, %v4803
        %v4805 = vpop.f32.mrf.mxu0
        %4806 = vmatprep.mubr.bf16.mxu0 0
        %4807 = vmatmul.mubr.bf16.gmra.mxu0 %v4722
        %v4808 = vpop.f32.mrf.mxu0
        %v4809 = vadd.f32 %v4576, %v4808
        %v4810 = vpop.f32.mrf.mxu0
        %v4811 = vpop.f32.mrf.mxu0
        %v4812 = vadd.f32 %v4579, %v4811
        %v4813 = vpop.f32.mrf.mxu0
        %4814 = vmatprep.mubr.bf16.mxu0 0
        %4815 = vmatmul.mubr.bf16.gmra.mxu0 %v4725
        %v4816 = vpop.f32.mrf.mxu0
        %v4817 = vadd.f32 %v4584, %v4816
        %v4818 = vpop.f32.mrf.mxu0
        %v4819 = vpop.f32.mrf.mxu0
        %v4820 = vadd.f32 %v4587, %v4819
        %v4821 = vpop.f32.mrf.mxu0
        %4822 = vmatprep.mubr.bf16.mxu0 0
        %4823 = vmatmul.mubr.bf16.gmra.mxu0 %v4728
        %v4824 = vpop.f32.mrf.mxu0
        %v4825 = vadd.f32 %v4592, %v4824
        %v4826 = vpop.f32.mrf.mxu0
        %v4827 = vpop.f32.mrf.mxu0
        %v4828 = vadd.f32 %v4595, %v4827
        %v4829 = vpop.f32.mrf.mxu0
        %4830 = vmatprep.mubr.bf16.mxu0 0
        %4831 = vmatmul.mubr.bf16.gmra.mxu0 %v4731
        %v4832 = vpop.f32.mrf.mxu0
        %v4833 = vadd.f32 %v4600, %v4832
        %v4834 = vpop.f32.mrf.mxu0
        %v4835 = vpop.f32.mrf.mxu0
        %v4836 = vadd.f32 %v4603, %v4835
        %v4837 = vpop.f32.mrf.mxu0
        %4838 = vmatprep.mubr.bf16.mxu0 0
        %4839 = vmatmul.mubr.bf16.gmra.mxu0 %v4734
        %v4840 = vpop.f32.mrf.mxu0
        %v4841 = vadd.f32 %v4608, %v4840
        %v4842 = vpop.f32.mrf.mxu0
        %v4843 = vpop.f32.mrf.mxu0
        %v4844 = vadd.f32 %v4611, %v4843
        %v4845 = vpop.f32.mrf.mxu0
        %4846 = vmatprep.mubr.bf16.mxu0 0
        %4847 = vmatmul.mubr.bf16.gmra.mxu0 %v4737
        %v4848 = vpop.f32.mrf.mxu0
        %v4849 = vadd.f32 %v4616, %v4848
        %v4850 = vpop.f32.mrf.mxu0
        %v4851 = vpop.f32.mrf.mxu0
        %v4852 = vadd.f32 %v4619, %v4851
        %v4853 = vpop.f32.mrf.mxu0
        %4854 = vmatprep.mubr.bf16.mxu0 0
        %4855 = vmatmul.mubr.bf16.gmra.mxu0 %v4740
        %v4856 = vpop.f32.mrf.mxu0
        %v4857 = vadd.f32 %v4624, %v4856
        %v4858 = vpop.f32.mrf.mxu0
        %v4859 = vpop.f32.mrf.mxu0
        %v4860 = vadd.f32 %v4627, %v4859
        %v4861 = vpop.f32.mrf.mxu0
        %4862 = vmatprep.mubr.bf16.mxu0 0
        %4863 = vmatmul.mubr.bf16.gmra.mxu0 %v4743
        %v4864 = vpop.f32.mrf.mxu0
        %v4865 = vadd.f32 %v4632, %v4864
        %v4866 = vpop.f32.mrf.mxu0
        %v4867 = vpop.f32.mrf.mxu0
        %v4868 = vadd.f32 %v4635, %v4867
        %v4869 = vpop.f32.mrf.mxu0
        %4870 = vmatprep.mubr.bf16.mxu0 0
        %4871 = vmatmul.mubr.bf16.gmra.mxu0 %v4746
        %v4872 = vpop.f32.mrf.mxu0
        %v4873 = vadd.f32 %v4640, %v4872
        %v4874 = vpop.f32.mrf.mxu0
        %v4875 = vpop.f32.mrf.mxu0
        %v4876 = vadd.f32 %v4643, %v4875
        %v4877 = vpop.f32.mrf.mxu0
        %4878 = vmatprep.mubr.bf16.mxu0 0
        %4879 = vmatmul.mubr.bf16.gmra.mxu0 %v4749
        %v4880 = vpop.f32.mrf.mxu0
        %v4881 = vadd.f32 %v4648, %v4880
        %v4882 = vpop.f32.mrf.mxu0
        %v4883 = vpop.f32.mrf.mxu0
        %v4884 = vadd.f32 %v4651, %v4883
        %v4885 = vpop.f32.mrf.mxu0
        %4886 = vmatprep.mubr.bf16.mxu0 0
        %4887 = vmatmul.mubr.bf16.gmra.mxu0 %v4752
        %v4888 = vpop.f32.mrf.mxu0
        %v4889 = vadd.f32 %v4656, %v4888
        %v4890 = vpop.f32.mrf.mxu0
        %v4891 = vpop.f32.mrf.mxu0
        %v4892 = vadd.f32 %v4659, %v4891
        %v4893 = vpop.f32.mrf.mxu0
        %4894 = vmatprep.mubr.bf16.mxu0 0
        %4895 = vmatmul.mubr.bf16.gmra.mxu0 %v4755
        %v4896 = vpop.f32.mrf.mxu0
        %v4897 = vadd.f32 %v4664, %v4896
        %v4898 = vpop.f32.mrf.mxu0
        %v4899 = vpop.f32.mrf.mxu0
        %v4900 = vadd.f32 %v4667, %v4899
        %v4901 = vpop.f32.mrf.mxu0
        %4902 = vmatprep.mubr.bf16.mxu0 0
        %4903 = vmatmul.mubr.bf16.gmra.mxu0 %v4758
        %v4904 = vpop.f32.mrf.mxu0
        %v4905 = vadd.f32 %v4672, %v4904
        %v4906 = vpop.f32.mrf.mxu0
        %v4907 = vpop.f32.mrf.mxu0
        %v4908 = vadd.f32 %v4675, %v4907
        %v4909 = vpop.f32.mrf.mxu0
        %4910 = vmatprep.mubr.bf16.mxu0 0
        %4911 = vmatmul.mubr.bf16.gmra.mxu0 %v4761
        %v4912 = vpop.f32.mrf.mxu0
        %v4913 = vadd.f32 %v4680, %v4912
        %v4914 = vpop.f32.mrf.mxu0
        %v4915 = vpop.f32.mrf.mxu0
        %v4916 = vadd.f32 %v4683, %v4915
        %v4917 = vpop.f32.mrf.mxu0
        %4918 = vmatprep.mubr.bf16.mxu0 0
        %4919 = vmatmul.mubr.bf16.gmra.mxu0 %v4764
        %v4920 = vpop.f32.mrf.mxu0
        %v4921 = vadd.f32 %v4688, %v4920
        %v4922 = vpop.f32.mrf.mxu0
        %v4923 = vpop.f32.mrf.mxu0
        %v4924 = vadd.f32 %v4691, %v4923
        %v4925 = vpop.f32.mrf.mxu0
        %4926 = vdwg.mxu0
        %v4928 = vlaneseq
        %v4929 = vshrl.u32 %v4928, 7
        %v4930 = vsub.s32 0, %v4929
        %v4931 = vrot.slane %v4368, %v4930
        %v4933 = vadd.f32 %v4801, %v4931
        %v4934 = vadd.f32 %v4804, %v4931
        %v4935 = vadd.f32 %v4809, %v4931
        %v4936 = vadd.f32 %v4812, %v4931
        %v4937 = vadd.f32 %v4817, %v4931
        %v4938 = vadd.f32 %v4820, %v4931
        %v4939 = vadd.f32 %v4825, %v4931
        %v4940 = vadd.f32 %v4828, %v4931
        %v4941 = vadd.f32 %v4833, %v4931
        %v4942 = vadd.f32 %v4836, %v4931
        %v4943 = vadd.f32 %v4841, %v4931
        %v4944 = vadd.f32 %v4844, %v4931
        %v4945 = vadd.f32 %v4849, %v4931
        %v4946 = vadd.f32 %v4852, %v4931
        %v4947 = vadd.f32 %v4857, %v4931
        %v4948 = vadd.f32 %v4860, %v4931
        %v4949 = vadd.f32 %v4865, %v4931
        %v4950 = vadd.f32 %v4868, %v4931
        %v4951 = vadd.f32 %v4873, %v4931
        %v4952 = vadd.f32 %v4876, %v4931
        %v4953 = vadd.f32 %v4881, %v4931
        %v4954 = vadd.f32 %v4884, %v4931
        %v4955 = vadd.f32 %v4889, %v4931
        %v4956 = vadd.f32 %v4892, %v4931
        %v4957 = vadd.f32 %v4897, %v4931
        %v4958 = vadd.f32 %v4900, %v4931
        %v4959 = vadd.f32 %v4905, %v4931
        %v4960 = vadd.f32 %v4908, %v4931
        %v4961 = vadd.f32 %v4913, %v4931
        %v4962 = vadd.f32 %v4916, %v4931
        %v4963 = vadd.f32 %v4921, %v4931
        %v4964 = vadd.f32 %v4924, %v4931
        %v4965 = vmax.f32 %v4933, 0.0
        %v4966 = vmax.f32 %v4934, 0.0
        %v4967 = vmax.f32 %v4935, 0.0
        %v4968 = vmax.f32 %v4936, 0.0
        %v4969 = vmax.f32 %v4937, 0.0
        %v4970 = vmax.f32 %v4938, 0.0
        %v4971 = vmax.f32 %v4939, 0.0
        %v4972 = vmax.f32 %v4940, 0.0
        %v4973 = vmax.f32 %v4941, 0.0
        %v4974 = vmax.f32 %v4942, 0.0
        %v4975 = vmax.f32 %v4943, 0.0
        %v4976 = vmax.f32 %v4944, 0.0
        %v4977 = vmax.f32 %v4945, 0.0
        %v4978 = vmax.f32 %v4946, 0.0
        %v4979 = vmax.f32 %v4947, 0.0
        %v4980 = vmax.f32 %v4948, 0.0
        %v4981 = vmax.f32 %v4949, 0.0
        %v4982 = vmax.f32 %v4950, 0.0
        %v4983 = vmax.f32 %v4951, 0.0
        %v4984 = vmax.f32 %v4952, 0.0
        %v4985 = vmax.f32 %v4953, 0.0
        %v4986 = vmax.f32 %v4954, 0.0
        %v4987 = vmax.f32 %v4955, 0.0
        %v4988 = vmax.f32 %v4956, 0.0
        %v4989 = vmax.f32 %v4957, 0.0
        %v4990 = vmax.f32 %v4958, 0.0
        %v4991 = vmax.f32 %v4959, 0.0
        %v4992 = vmax.f32 %v4960, 0.0
        %v4993 = vmax.f32 %v4961, 0.0
        %v4994 = vmax.f32 %v4962, 0.0
        %v4995 = vmax.f32 %v4963, 0.0
        %v4996 = vmax.f32 %v4964, 0.0
        %v4997 = vld [vmem:[%s26] sm:$0xf]
        %v4998 = vld [vmem:[%s26 + $0x4] sm:$0xf]
        %v4999 = vld [vmem:[%s26 + $0x8] sm:$0xf]
        %v5000 = vld [vmem:[%s26 + $0xc] sm:$0xf]
        %v5001 = vld [vmem:[%s27] sm:$0x1]
        %v5002 = vpack.c.bf16 %v4966, %v4965
        %v5003 = vpack.c.bf16 %v4968, %v4967
        %v5004 = vpack.c.bf16 %v4970, %v4969
        %v5005 = vpack.c.bf16 %v4972, %v4971
        %v5006 = vpack.c.bf16 %v4974, %v4973
        %v5007 = vpack.c.bf16 %v4976, %v4975
        %v5008 = vpack.c.bf16 %v4978, %v4977
        %v5009 = vpack.c.bf16 %v4980, %v4979
        %v5010 = vpack.c.bf16 %v4982, %v4981
        %v5011 = vpack.c.bf16 %v4984, %v4983
        %v5012 = vpack.c.bf16 %v4986, %v4985
        %v5013 = vpack.c.bf16 %v4988, %v4987
        %v5014 = vpack.c.bf16 %v4990, %v4989
        %v5015 = vpack.c.bf16 %v4992, %v4991
        %v5016 = vpack.c.bf16 %v4994, %v4993
        %v5017 = vpack.c.bf16 %v4996, %v4995
        %v5019 = vlaneseq
        %v5020 = vshrl.u32 %v5019, 7
        %v5021 = vsub.s32 0, %v5020
        %v5022 = vrot.slane %v5001, %v5021
        %v5028 = vunpack.c.l.b16 %v4997
        %v5029 = vunpack.c.l.b16 %v4998
        %v5030 = vunpack.c.l.b16 %v4999
        %v5031 = vunpack.c.l.b16 %v5000
        %v5032 = vpack.c.b16 %v5029, %v5028
        %v5033 = vpack.c.b16 %v5031, %v5030
        %vm5036 = vcmask 261120
        %v5038 = vsel %vm5036, %v5002, 0
        %v5041 = vsel %vm5036, %v5003, 0
        %v5044 = vsel %vm5036, %v5004, 0
        %v5047 = vsel %vm5036, %v5005, 0
        %v5050 = vsel %vm5036, %v5006, 0
        %v5053 = vsel %vm5036, %v5007, 0
        %v5056 = vsel %vm5036, %v5008, 0
        %v5059 = vsel %vm5036, %v5009, 0
        %v5062 = vsel %vm5036, %v5010, 0
        %v5065 = vsel %vm5036, %v5011, 0
        %v5068 = vsel %vm5036, %v5012, 0
        %v5071 = vsel %vm5036, %v5013, 0
        %v5074 = vsel %vm5036, %v5014, 0
        %v5077 = vsel %vm5036, %v5015, 0
        %v5080 = vsel %vm5036, %v5016, 0
        %v5083 = vsel %vm5036, %v5017, 0
        %5085 = vmatprep.subr.bf16.mxu0 0
        %5086 = vmatpush1.bf16.msra.mxu0 0
        %5087 = vmatprep.subr.bf16.mxu0 0
        %5088 = vmatpush1.bf16.msra.mxu0 0
        %5089 = vmatprep.subr.bf16.mxu0 0
        %5090 = vmatpush1.bf16.msra.mxu0 0
        %5091 = vmatprep.subr.bf16.mxu0 0
        %5092 = vmatpush1.bf16.msra.mxu0 0
        %5093 = vmatprep.subr.bf16.mxu0 0
        %5094 = vmatpush1.bf16.msra.mxu0 0
        %5095 = vmatprep.subr.bf16.mxu0 0
        %5096 = vmatpush1.bf16.msra.mxu0 0
        %5097 = vmatprep.subr.bf16.mxu0 0
        %5098 = vmatpush1.bf16.msra.mxu0 %v5033
        %5099 = vmatprep.subr.bf16.mxu0 0
        %5100 = vmatpush1.bf16.msra.mxu0 %v5032
        %5101 = vmatprep.subr.bf16.mxu0 0
        %5102 = vmatpush2.bf16.msra.mxu0 0
        %5103 = vmatprep.subr.bf16.mxu0 0
        %5104 = vmatpush2.bf16.msra.mxu0 0
        %5105 = vmatprep.subr.bf16.mxu0 0
        %5106 = vmatpush2.bf16.msra.mxu0 0
        %5107 = vmatprep.subr.bf16.mxu0 0
        %5108 = vmatpush2.bf16.msra.mxu0 0
        %5109 = vmatprep.subr.bf16.mxu0 0
        %5110 = vmatpush2.bf16.msra.mxu0 0
        %5111 = vmatprep.subr.bf16.mxu0 0
        %5112 = vmatpush2.bf16.msra.mxu0 0
        %5113 = vmatprep.subr.bf16.mxu0 0
        %5114 = vmatpush2.bf16.msra.mxu0 0
        %5115 = vmatprep.subr.bf16.mxu0 0
        %5116 = vmatpush2.bf16.msra.mxu0 0
        %5117 = vmatprep.mubr.bf16.mxu0 0
        %5118 = vmatmul.mubr.bf16.gmra.mxu0 %v5038
        %v5119 = vpop.f32.mrf.mxu0
        %v5120 = vadd.f32 %v5022, %v5119
        %v5121 = vpop.f32.mrf.mxu0
        %v5122 = vpop.f32.mrf.mxu0
        %v5123 = vadd.f32 %v5022, %v5122
        %v5124 = vpop.f32.mrf.mxu0
        %5125 = vmatprep.mubr.bf16.mxu0 0
        %5126 = vmatmul.mubr.bf16.gmra.mxu0 %v5041
        %v5127 = vpop.f32.mrf.mxu0
        %v5128 = vadd.f32 %v5022, %v5127
        %v5129 = vpop.f32.mrf.mxu0
        %v5130 = vpop.f32.mrf.mxu0
        %v5131 = vadd.f32 %v5022, %v5130
        %v5132 = vpop.f32.mrf.mxu0
        %5133 = vmatprep.mubr.bf16.mxu0 0
        %5134 = vmatmul.mubr.bf16.gmra.mxu0 %v5044
        %v5135 = vpop.f32.mrf.mxu0
        %v5136 = vadd.f32 %v5022, %v5135
        %v5137 = vpop.f32.mrf.mxu0
        %v5138 = vpop.f32.mrf.mxu0
        %v5139 = vadd.f32 %v5022, %v5138
        %v5140 = vpop.f32.mrf.mxu0
        %5141 = vmatprep.mubr.bf16.mxu0 0
        %5142 = vmatmul.mubr.bf16.gmra.mxu0 %v5047
        %v5143 = vpop.f32.mrf.mxu0
        %v5144 = vadd.f32 %v5022, %v5143
        %v5145 = vpop.f32.mrf.mxu0
        %v5146 = vpop.f32.mrf.mxu0
        %v5147 = vadd.f32 %v5022, %v5146
        %v5148 = vpop.f32.mrf.mxu0
        %5149 = vmatprep.mubr.bf16.mxu0 0
        %5150 = vmatmul.mubr.bf16.gmra.mxu0 %v5050
        %v5151 = vpop.f32.mrf.mxu0
        %v5152 = vadd.f32 %v5022, %v5151
        %v5153 = vpop.f32.mrf.mxu0
        %v5154 = vpop.f32.mrf.mxu0
        %v5155 = vadd.f32 %v5022, %v5154
        %v5156 = vpop.f32.mrf.mxu0
        %5157 = vmatprep.mubr.bf16.mxu0 0
        %5158 = vmatmul.mubr.bf16.gmra.mxu0 %v5053
        %v5159 = vpop.f32.mrf.mxu0
        %v5160 = vadd.f32 %v5022, %v5159
        %v5161 = vpop.f32.mrf.mxu0
        %v5162 = vpop.f32.mrf.mxu0
        %v5163 = vadd.f32 %v5022, %v5162
        %v5164 = vpop.f32.mrf.mxu0
        %5165 = vmatprep.mubr.bf16.mxu0 0
        %5166 = vmatmul.mubr.bf16.gmra.mxu0 %v5056
        %v5167 = vpop.f32.mrf.mxu0
        %v5168 = vadd.f32 %v5022, %v5167
        %v5169 = vpop.f32.mrf.mxu0
        %v5170 = vpop.f32.mrf.mxu0
        %v5171 = vadd.f32 %v5022, %v5170
        %v5172 = vpop.f32.mrf.mxu0
        %5173 = vmatprep.mubr.bf16.mxu0 0
        %5174 = vmatmul.mubr.bf16.gmra.mxu0 %v5059
        %v5175 = vpop.f32.mrf.mxu0
        %v5176 = vadd.f32 %v5022, %v5175
        %v5177 = vpop.f32.mrf.mxu0
        %v5178 = vpop.f32.mrf.mxu0
        %v5179 = vadd.f32 %v5022, %v5178
        %v5180 = vpop.f32.mrf.mxu0
        %5181 = vmatprep.mubr.bf16.mxu0 0
        %5182 = vmatmul.mubr.bf16.gmra.mxu0 %v5062
        %v5183 = vpop.f32.mrf.mxu0
        %v5184 = vadd.f32 %v5022, %v5183
        %v5185 = vpop.f32.mrf.mxu0
        %v5186 = vpop.f32.mrf.mxu0
        %v5187 = vadd.f32 %v5022, %v5186
        %v5188 = vpop.f32.mrf.mxu0
        %5189 = vmatprep.mubr.bf16.mxu0 0
        %5190 = vmatmul.mubr.bf16.gmra.mxu0 %v5065
        %v5191 = vpop.f32.mrf.mxu0
        %v5192 = vadd.f32 %v5022, %v5191
        %v5193 = vpop.f32.mrf.mxu0
        %v5194 = vpop.f32.mrf.mxu0
        %v5195 = vadd.f32 %v5022, %v5194
        %v5196 = vpop.f32.mrf.mxu0
        %5197 = vmatprep.mubr.bf16.mxu0 0
        %5198 = vmatmul.mubr.bf16.gmra.mxu0 %v5068
        %v5199 = vpop.f32.mrf.mxu0
        %v5200 = vadd.f32 %v5022, %v5199
        %v5201 = vpop.f32.mrf.mxu0
        %v5202 = vpop.f32.mrf.mxu0
        %v5203 = vadd.f32 %v5022, %v5202
        %v5204 = vpop.f32.mrf.mxu0
        %5205 = vmatprep.mubr.bf16.mxu0 0
        %5206 = vmatmul.mubr.bf16.gmra.mxu0 %v5071
        %v5207 = vpop.f32.mrf.mxu0
        %v5208 = vadd.f32 %v5022, %v5207
        %v5209 = vpop.f32.mrf.mxu0
        %v5210 = vpop.f32.mrf.mxu0
        %v5211 = vadd.f32 %v5022, %v5210
        %v5212 = vpop.f32.mrf.mxu0
        %5213 = vmatprep.mubr.bf16.mxu0 0
        %5214 = vmatmul.mubr.bf16.gmra.mxu0 %v5074
        %v5215 = vpop.f32.mrf.mxu0
        %v5216 = vadd.f32 %v5022, %v5215
        %v5217 = vpop.f32.mrf.mxu0
        %v5218 = vpop.f32.mrf.mxu0
        %v5219 = vadd.f32 %v5022, %v5218
        %v5220 = vpop.f32.mrf.mxu0
        %5221 = vmatprep.mubr.bf16.mxu0 0
        %5222 = vmatmul.mubr.bf16.gmra.mxu0 %v5077
        %v5223 = vpop.f32.mrf.mxu0
        %v5224 = vadd.f32 %v5022, %v5223
        %v5225 = vpop.f32.mrf.mxu0
        %v5226 = vpop.f32.mrf.mxu0
        %v5227 = vadd.f32 %v5022, %v5226
        %v5228 = vpop.f32.mrf.mxu0
        %5229 = vmatprep.mubr.bf16.mxu0 0
        %5230 = vmatmul.mubr.bf16.gmra.mxu0 %v5080
        %v5231 = vpop.f32.mrf.mxu0
        %v5232 = vadd.f32 %v5022, %v5231
        %v5233 = vpop.f32.mrf.mxu0
        %v5234 = vpop.f32.mrf.mxu0
        %v5235 = vadd.f32 %v5022, %v5234
        %v5236 = vpop.f32.mrf.mxu0
        %5237 = vmatprep.mubr.bf16.mxu0 0
        %5238 = vmatmul.mubr.bf16.gmra.mxu0 %v5083
        %v5239 = vpop.f32.mrf.mxu0
        %v5240 = vadd.f32 %v5022, %v5239
        %v5241 = vpop.f32.mrf.mxu0
        %v5242 = vpop.f32.mrf.mxu0
        %v5243 = vadd.f32 %v5022, %v5242
        %v5244 = vpop.f32.mrf.mxu0
        %5245 = vdwg.mxu0
        %v5246 = vmul.f32 %v5120, 0.5
        %v5247 = vmul.f32 %v5123, 0.5
        %v5248 = vmul.f32 %v5128, 0.5
        %v5249 = vmul.f32 %v5131, 0.5
        %v5250 = vmul.f32 %v5136, 0.5
        %v5251 = vmul.f32 %v5139, 0.5
        %v5252 = vmul.f32 %v5144, 0.5
        %v5253 = vmul.f32 %v5147, 0.5
        %v5254 = vmul.f32 %v5152, 0.5
        %v5255 = vmul.f32 %v5155, 0.5
        %v5256 = vmul.f32 %v5160, 0.5
        %v5257 = vmul.f32 %v5163, 0.5
        %v5258 = vmul.f32 %v5168, 0.5
        %v5259 = vmul.f32 %v5171, 0.5
        %v5260 = vmul.f32 %v5176, 0.5
        %v5261 = vmul.f32 %v5179, 0.5
        %v5262 = vmul.f32 %v5184, 0.5
        %v5263 = vmul.f32 %v5187, 0.5
        %v5264 = vmul.f32 %v5192, 0.5
        %v5265 = vmul.f32 %v5195, 0.5
        %v5266 = vmul.f32 %v5200, 0.5
        %v5267 = vmul.f32 %v5203, 0.5
        %v5268 = vmul.f32 %v5208, 0.5
        %v5269 = vmul.f32 %v5211, 0.5
        %v5270 = vmul.f32 %v5216, 0.5
        %v5271 = vmul.f32 %v5219, 0.5
        %v5272 = vmul.f32 %v5224, 0.5
        %v5273 = vmul.f32 %v5227, 0.5
        %v5274 = vmul.f32 %v5232, 0.5
        %v5275 = vmul.f32 %v5235, 0.5
        %v5276 = vmul.f32 %v5240, 0.5
        %v5277 = vmul.f32 %v5243, 0.5
        %v5278 = vtanh.pop %v5246
        %v5279 = vtanh.pop %v5247
        %v5280 = vtanh.pop %v5248
        %v5281 = vtanh.pop %v5249
        %v5282 = vtanh.pop %v5250
        %v5283 = vtanh.pop %v5251
        %v5284 = vtanh.pop %v5252
        %v5285 = vtanh.pop %v5253
        %v5286 = vtanh.pop %v5254
        %v5287 = vtanh.pop %v5255
        %v5288 = vtanh.pop %v5256
        %v5289 = vtanh.pop %v5257
        %v5290 = vtanh.pop %v5258
        %v5291 = vtanh.pop %v5259
        %v5292 = vtanh.pop %v5260
        %v5293 = vtanh.pop %v5261
        %v5294 = vtanh.pop %v5262
        %v5295 = vtanh.pop %v5263
        %v5296 = vtanh.pop %v5264
        %v5297 = vtanh.pop %v5265
        %v5298 = vtanh.pop %v5266
        %v5299 = vtanh.pop %v5267
        %v5300 = vtanh.pop %v5268
        %v5301 = vtanh.pop %v5269
        %v5302 = vtanh.pop %v5270
        %v5303 = vtanh.pop %v5271
        %v5304 = vtanh.pop %v5272
        %v5305 = vtanh.pop %v5273
        %v5306 = vtanh.pop %v5274
        %v5307 = vtanh.pop %v5275
        %v5308 = vtanh.pop %v5276
        %v5309 = vtanh.pop %v5277
        %v5310 = vadd.f32 %v5278, 1.0
        %v5311 = vadd.f32 %v5279, 1.0
        %v5312 = vadd.f32 %v5280, 1.0
        %v5313 = vadd.f32 %v5281, 1.0
        %v5314 = vadd.f32 %v5282, 1.0
        %v5315 = vadd.f32 %v5283, 1.0
        %v5316 = vadd.f32 %v5284, 1.0
        %v5317 = vadd.f32 %v5285, 1.0
        %v5318 = vadd.f32 %v5286, 1.0
        %v5319 = vadd.f32 %v5287, 1.0
        %v5320 = vadd.f32 %v5288, 1.0
        %v5321 = vadd.f32 %v5289, 1.0
        %v5322 = vadd.f32 %v5290, 1.0
        %v5323 = vadd.f32 %v5291, 1.0
        %v5324 = vadd.f32 %v5292, 1.0
        %v5325 = vadd.f32 %v5293, 1.0
        %v5326 = vadd.f32 %v5294, 1.0
        %v5327 = vadd.f32 %v5295, 1.0
        %v5328 = vadd.f32 %v5296, 1.0
        %v5329 = vadd.f32 %v5297, 1.0
        %v5330 = vadd.f32 %v5298, 1.0
        %v5331 = vadd.f32 %v5299, 1.0
        %v5332 = vadd.f32 %v5300, 1.0
        %v5333 = vadd.f32 %v5301, 1.0
        %v5334 = vadd.f32 %v5302, 1.0
        %v5335 = vadd.f32 %v5303, 1.0
        %v5336 = vadd.f32 %v5304, 1.0
        %v5337 = vadd.f32 %v5305, 1.0
        %v5338 = vadd.f32 %v5306, 1.0
        %v5339 = vadd.f32 %v5307, 1.0
        %v5340 = vadd.f32 %v5308, 1.0
        %v5341 = vadd.f32 %v5309, 1.0
        %v5342 = vmul.f32 %v5310, 0.5
        %v5343 = vmul.f32 %v5311, 0.5
        %v5344 = vmul.f32 %v5312, 0.5
        %v5345 = vmul.f32 %v5313, 0.5
        %v5346 = vmul.f32 %v5314, 0.5
        %v5347 = vmul.f32 %v5315, 0.5
        %v5348 = vmul.f32 %v5316, 0.5
        %v5349 = vmul.f32 %v5317, 0.5
        %v5350 = vmul.f32 %v5318, 0.5
        %v5351 = vmul.f32 %v5319, 0.5
        %v5352 = vmul.f32 %v5320, 0.5
        %v5353 = vmul.f32 %v5321, 0.5
        %v5354 = vmul.f32 %v5322, 0.5
        %v5355 = vmul.f32 %v5323, 0.5
        %v5356 = vmul.f32 %v5324, 0.5
        %v5357 = vmul.f32 %v5325, 0.5
        %v5358 = vmul.f32 %v5326, 0.5
        %v5359 = vmul.f32 %v5327, 0.5
        %v5360 = vmul.f32 %v5328, 0.5
        %v5361 = vmul.f32 %v5329, 0.5
        %v5362 = vmul.f32 %v5330, 0.5
        %v5363 = vmul.f32 %v5331, 0.5
        %v5364 = vmul.f32 %v5332, 0.5
        %v5365 = vmul.f32 %v5333, 0.5
        %v5366 = vmul.f32 %v5334, 0.5
        %v5367 = vmul.f32 %v5335, 0.5
        %v5368 = vmul.f32 %v5336, 0.5
        %v5369 = vmul.f32 %v5337, 0.5
        %v5370 = vmul.f32 %v5338, 0.5
        %v5371 = vmul.f32 %v5339, 0.5
        %v5372 = vmul.f32 %v5340, 0.5
        %v5373 = vmul.f32 %v5341, 0.5
        %5406 = vrot.lane.b32.xlu0 %v5342, 1
        %v5407 = vpop.permute.xlu0 %5406
        %5408 = vrot.lane.b32.xlu0 %v5343, 1
        %v5409 = vpop.permute.xlu0 %5408
        %5410 = vrot.lane.b32.xlu0 %v5344, 1
        %v5411 = vpop.permute.xlu0 %5410
        %5412 = vrot.lane.b32.xlu0 %v5345, 1
        %v5413 = vpop.permute.xlu0 %5412
        %5414 = vrot.lane.b32.xlu0 %v5346, 1
        %v5415 = vpop.permute.xlu0 %5414
        %5416 = vrot.lane.b32.xlu0 %v5347, 1
        %v5417 = vpop.permute.xlu0 %5416
        %5418 = vrot.lane.b32.xlu0 %v5348, 1
        %v5419 = vpop.permute.xlu0 %5418
        %5420 = vrot.lane.b32.xlu0 %v5349, 1
        %v5421 = vpop.permute.xlu0 %5420
        %5422 = vrot.lane.b32.xlu0 %v5350, 1
        %v5423 = vpop.permute.xlu0 %5422
        %5424 = vrot.lane.b32.xlu0 %v5351, 1
        %v5425 = vpop.permute.xlu0 %5424
        %5426 = vrot.lane.b32.xlu0 %v5352, 1
        %v5427 = vpop.permute.xlu0 %5426
        %5428 = vrot.lane.b32.xlu0 %v5353, 1
        %v5429 = vpop.permute.xlu0 %5428
        %5430 = vrot.lane.b32.xlu0 %v5354, 1
        %v5431 = vpop.permute.xlu0 %5430
        %5432 = vrot.lane.b32.xlu0 %v5355, 1
        %v5433 = vpop.permute.xlu0 %5432
        %5434 = vrot.lane.b32.xlu0 %v5356, 1
        %v5435 = vpop.permute.xlu0 %5434
        %5436 = vrot.lane.b32.xlu0 %v5357, 1
        %v5437 = vpop.permute.xlu0 %5436
        %5438 = vrot.lane.b32.xlu0 %v5358, 1
        %v5439 = vpop.permute.xlu0 %5438
        %5440 = vrot.lane.b32.xlu0 %v5359, 1
        %v5441 = vpop.permute.xlu0 %5440
        %5442 = vrot.lane.b32.xlu0 %v5360, 1
        %v5443 = vpop.permute.xlu0 %5442
        %5444 = vrot.lane.b32.xlu0 %v5361, 1
        %v5445 = vpop.permute.xlu0 %5444
        %5446 = vrot.lane.b32.xlu0 %v5362, 1
        %v5447 = vpop.permute.xlu0 %5446
        %5448 = vrot.lane.b32.xlu0 %v5363, 1
        %v5449 = vpop.permute.xlu0 %5448
        %5450 = vrot.lane.b32.xlu0 %v5364, 1
        %v5451 = vpop.permute.xlu0 %5450
        %5452 = vrot.lane.b32.xlu0 %v5365, 1
        %v5453 = vpop.permute.xlu0 %5452
        %5454 = vrot.lane.b32.xlu0 %v5366, 1
        %v5455 = vpop.permute.xlu0 %5454
        %5456 = vrot.lane.b32.xlu0 %v5367, 1
        %v5457 = vpop.permute.xlu0 %5456
        %5458 = vrot.lane.b32.xlu0 %v5368, 1
        %v5459 = vpop.permute.xlu0 %5458
        %5460 = vrot.lane.b32.xlu0 %v5369, 1
        %v5461 = vpop.permute.xlu0 %5460
        %5462 = vrot.lane.b32.xlu0 %v5370, 1
        %v5463 = vpop.permute.xlu0 %5462
        %5464 = vrot.lane.b32.xlu0 %v5371, 1
        %v5465 = vpop.permute.xlu0 %5464
        %5466 = vrot.lane.b32.xlu0 %v5372, 1
        %v5467 = vpop.permute.xlu0 %5466
        %5468 = vrot.lane.b32.xlu0 %v5373, 1
        %v5469 = vpop.permute.xlu0 %5468
        %vm5502 = vcmask 7168
        %v5503 = vsel %vm5502, %v4323, %v5407
        %v5504 = vsel %vm5502, %v4324, %v5409
        %v5505 = vsel %vm5502, %v4325, %v5411
        %v5506 = vsel %vm5502, %v4326, %v5413
        %v5507 = vsel %vm5502, %v4327, %v5415
        %v5508 = vsel %vm5502, %v4328, %v5417
        %v5509 = vsel %vm5502, %v4329, %v5419
        %v5510 = vsel %vm5502, %v4330, %v5421
        %v5511 = vsel %vm5502, %v4331, %v5423
        %v5512 = vsel %vm5502, %v4332, %v5425
        %v5513 = vsel %vm5502, %v4333, %v5427
        %v5514 = vsel %vm5502, %v4334, %v5429
        %v5515 = vsel %vm5502, %v4335, %v5431
        %v5516 = vsel %vm5502, %v4336, %v5433
        %v5517 = vsel %vm5502, %v4337, %v5435
        %v5518 = vsel %vm5502, %v4338, %v5437
        %v5519 = vsel %vm5502, %v4339, %v5439
        %v5520 = vsel %vm5502, %v4340, %v5441
        %v5521 = vsel %vm5502, %v4341, %v5443
        %v5522 = vsel %vm5502, %v4342, %v5445
        %v5523 = vsel %vm5502, %v4343, %v5447
        %v5524 = vsel %vm5502, %v4344, %v5449
        %v5525 = vsel %vm5502, %v4345, %v5451
        %v5526 = vsel %vm5502, %v4346, %v5453
        %v5527 = vsel %vm5502, %v4347, %v5455
        %v5528 = vsel %vm5502, %v4348, %v5457
        %v5529 = vsel %vm5502, %v4349, %v5459
        %v5530 = vsel %vm5502, %v4350, %v5461
        %v5531 = vsel %vm5502, %v4351, %v5463
        %v5532 = vsel %vm5502, %v4352, %v5465
        %v5533 = vsel %vm5502, %v4353, %v5467
        %v5534 = vsel %vm5502, %v4354, %v5469
        %vm5535 = vcmask 31744
        %v5536 = vsel %vm5535, %v5503, 0.0
        %v5537 = vsel %vm5535, %v5504, 0.0
        %v5538 = vsel %vm5535, %v5505, 0.0
        %v5539 = vsel %vm5535, %v5506, 0.0
        %v5540 = vsel %vm5535, %v5507, 0.0
        %v5541 = vsel %vm5535, %v5508, 0.0
        %v5542 = vsel %vm5535, %v5509, 0.0
        %v5543 = vsel %vm5535, %v5510, 0.0
        %v5544 = vsel %vm5535, %v5511, 0.0
        %v5545 = vsel %vm5535, %v5512, 0.0
        %v5546 = vsel %vm5535, %v5513, 0.0
        %v5547 = vsel %vm5535, %v5514, 0.0
        %v5548 = vsel %vm5535, %v5515, 0.0
        %v5549 = vsel %vm5535, %v5516, 0.0
        %v5550 = vsel %vm5535, %v5517, 0.0
        %v5551 = vsel %vm5535, %v5518, 0.0
        %v5552 = vsel %vm5535, %v5519, 0.0
        %v5553 = vsel %vm5535, %v5520, 0.0
        %v5554 = vsel %vm5535, %v5521, 0.0
        %v5555 = vsel %vm5535, %v5522, 0.0
        %v5556 = vsel %vm5535, %v5523, 0.0
        %v5557 = vsel %vm5535, %v5524, 0.0
        %v5558 = vsel %vm5535, %v5525, 0.0
        %v5559 = vsel %vm5535, %v5526, 0.0
        %v5560 = vsel %vm5535, %v5527, 0.0
        %v5561 = vsel %vm5535, %v5528, 0.0
        %v5562 = vsel %vm5535, %v5529, 0.0
        %v5563 = vsel %vm5535, %v5530, 0.0
        %v5564 = vsel %vm5535, %v5531, 0.0
        %v5565 = vsel %vm5535, %v5532, 0.0
        %v5566 = vsel %vm5535, %v5533, 0.0
        %v5567 = vsel %vm5535, %v5534, 0.0
        %5568 = vxpose.xlu0.b32.start [1/16] %v5536, 128
        %5569 = vxpose.xlu0.b32.cont [2/16] %v5537, 128
        %5570 = vxpose.xlu0.b32.cont [3/16] %v5538, 128
        %5571 = vxpose.xlu0.b32.cont [4/16] %v5539, 128
        %5572 = vxpose.xlu0.b32.cont [5/16] %v5540, 128
        %5573 = vxpose.xlu0.b32.cont [6/16] %v5541, 128
        %5574 = vxpose.xlu0.b32.cont [7/16] %v5542, 128
        %5575 = vxpose.xlu0.b32.cont [8/16] %v5543, 128
        %5576 = vxpose.xlu0.b32.cont [9/16] %v5544, 128
        %5577 = vxpose.xlu0.b32.cont [10/16] %v5545, 128
        %5578 = vxpose.xlu0.b32.cont [11/16] %v5546, 128
        %5579 = vxpose.xlu0.b32.cont [12/16] %v5547, 128
        %5580 = vxpose.xlu0.b32.cont [13/16] %v5548, 128
        %5581 = vxpose.xlu0.b32.cont [14/16] %v5549, 128
        %5582 = vxpose.xlu0.b32.cont [15/16] %v5550, 128
        %5583 = vxpose.xlu0.b32.end [16/16] %v5551, 128
        %v5584 = vpop.trf.xlu0
        %v5585 = vpop.trf.xlu0
        %v5586 = vpop.trf.xlu0
        %v5587 = vpop.trf.xlu0
        %v5588 = vpop.trf.xlu0
        %v5589 = vpop.trf.xlu0
        %v5590 = vpop.trf.xlu0
        %v5591 = vpop.trf.xlu0
        %v5592 = vpop.trf.xlu0
        %v5593 = vpop.trf.xlu0
        %v5594 = vpop.trf.xlu0
        %v5595 = vpop.trf.xlu0
        %v5596 = vpop.trf.xlu0
        %v5597 = vpop.trf.xlu0
        %v5598 = vpop.trf.xlu0
        %v5599 = vpop.trf.xlu0
        %5600 = vxpose.xlu0.b32.start [1/16] %v5552, 128
        %5601 = vxpose.xlu0.b32.cont [2/16] %v5553, 128
        %5602 = vxpose.xlu0.b32.cont [3/16] %v5554, 128
        %5603 = vxpose.xlu0.b32.cont [4/16] %v5555, 128
        %5604 = vxpose.xlu0.b32.cont [5/16] %v5556, 128
        %5605 = vxpose.xlu0.b32.cont [6/16] %v5557, 128
        %5606 = vxpose.xlu0.b32.cont [7/16] %v5558, 128
        %5607 = vxpose.xlu0.b32.cont [8/16] %v5559, 128
        %5608 = vxpose.xlu0.b32.cont [9/16] %v5560, 128
        %5609 = vxpose.xlu0.b32.cont [10/16] %v5561, 128
        %5610 = vxpose.xlu0.b32.cont [11/16] %v5562, 128
        %5611 = vxpose.xlu0.b32.cont [12/16] %v5563, 128
        %5612 = vxpose.xlu0.b32.cont [13/16] %v5564, 128
        %5613 = vxpose.xlu0.b32.cont [14/16] %v5565, 128
        %5614 = vxpose.xlu0.b32.cont [15/16] %v5566, 128
        %5615 = vxpose.xlu0.b32.end [16/16] %v5567, 128
        %v5616 = vpop.trf.xlu0
        %v5617 = vpop.trf.xlu0
        %v5618 = vpop.trf.xlu0
        %v5619 = vpop.trf.xlu0
        %v5620 = vpop.trf.xlu0
        %v5621 = vpop.trf.xlu0
        %v5622 = vpop.trf.xlu0
        %v5623 = vpop.trf.xlu0
        %v5624 = vpop.trf.xlu0
        %v5625 = vpop.trf.xlu0
        %v5626 = vpop.trf.xlu0
        %v5627 = vpop.trf.xlu0
        %v5628 = vpop.trf.xlu0
        %v5629 = vpop.trf.xlu0
        %v5630 = vpop.trf.xlu0
        %v5631 = vpop.trf.xlu0
        %5632 = vst [vmem:[%s857] sm:$0xff] %v5584
        %5633 = vst [vmem:[%s857 + $0x8] sm:$0xff] %v5616
        %s5634 = sand.u32 %s650, 1
        %s5635 = scalar_lea.sflag [#allocation4], %s5634
        %s5636 = sand.u32 %s650, 1
        %s5637 = smul.addr %s5636, 16
        %s5638 = scalar_lea.vmem [#allocation3], %s5637
        // Predicated region
        $region133: #{tpu_custom_call.1} parent=131 // pred_check
          %p5639 = pneg %p660
        $region134: #{tpu_custom_call.1} parent=131 // pred_check_branch
          %5641 = sbr.rel (%p5639) target = $region136
        $region135: #{tpu_custom_call.1} parent=131 // pred_region
          %s5642 = smul.u32 2, %s44
          %s5644 = ssub.s32 256, 256
          %5645 = vsyncadd %s5635, %s5644
          %s5646 = smul.addr %s5642, 128
          %s5647 = scalar_lea.hbm %s28, %s5646
          %s5649 = sshll.u32 %s5638, 4
          %s5650 = int_to_ptr.vmem [resolvable:$true] %s5649
          %5652 = dma.vmem_to_hbm [thread:$0]  %s5650, 256, %s5647, %s5635
        $region136: #{tpu_custom_call.1} parent=131 // pred_fallthru
          _
      $region132: #{tpu_custom_call.1} parent=5 // pred_fallthru
        _
      %p5653 = scmp.le.s32.totalorder 2, %s39
      // Predicated region
      $region137: #{tpu_custom_call.1} parent=5 // pred_check
        %p5654 = pneg %p5653
      $region138: #{tpu_custom_call.1} parent=5 // pred_check_branch
        %5656 = sbr.rel (%p5654) target = $region140
      $region139: #{tpu_custom_call.1} parent=5 // pred_region
        %s5657 = ssub.s32 %s39, 2
        // Predicated region
        $region141: #{tpu_custom_call.1} parent=139 // pred_check
          %p5658 = pneg %p666
        $region142: #{tpu_custom_call.1} parent=139 // pred_check_branch
          %5660 = sbr.rel (%p5658) target = $region144
        $region143: #{tpu_custom_call.1} parent=139 // pred_region
          %s5661 = sand.u32 %s651, 1
          %s5662 = scalar_lea.sflag [#allocation4], %s5661
          %s5663 = sand.u32 %s651, 1
          %s5664 = smul.addr %s5663, 16
          %s5665 = scalar_lea.vmem [#allocation3], %s5664
          %5666 = dma.done %s5662, 256
        $region144: #{tpu_custom_call.1} parent=139 // pred_fallthru
          _
      $region140: #{tpu_custom_call.1} parent=5 // pred_fallthru
        _
    $region6: #{tpu_custom_call.1} parent=1 // loop_footer
      %s43 = sadd.s32 1, %s39
    $region7: #{tpu_custom_call.1} parent=1 // loop_footer_branch
      %38 = sbr.rel target = $region3
    $region8: #{tpu_custom_call.1} parent=1 // loop_exit
      _
    %5667 = vsyncpa [#allocation4], 1
    %s5668 = scalar_lea.sflag [#allocation4], 1
    %5669 = vsyncpa %s5668, 1

</llo_original>
